<compile_context>
chip_gen: v7x
topology: tpu7x:2x2x1
jax: 0.10.0
libtpu: 0.0.40
codegen_flags: <defaults>
</compile_context>

<pallas_src>
import functools

import jax
import jax.numpy as jnp
from jax.experimental import pallas as pl
from jax.experimental.pallas import tpu as pltpu

RANDOM_LAYER = 4  # deterministic stand-in for the "random_layer" split point


# --------------------------- Pallas kernels --------------------------------

def _conv1_relu_pool_kernel(p_ref, w_ref, b_ref, o_ref, *, n_win, group):
    """Fused conv1 matmul + bias + ReLU + 3x3/stride-2 max-pool.

    p_ref: (1, n_win*group, Kp) bf16  pool-window-major im2col rows
    w_ref: (Kp, Coutp)          bf16
    b_ref: (1, Coutp)           f32
    o_ref: (1, group, Coutp)    f32   pooled output rows (padded)
    """
    acc = jnp.dot(p_ref[0], w_ref[...], preferred_element_type=jnp.float32)
    acc = jnp.maximum(acc + b_ref[...], 0.0)          # fused bias + ReLU
    pooled = acc[0:group]
    for g in range(1, n_win):                         # fused max-pool: 9-way max
        pooled = jnp.maximum(pooled, acc[g * group:(g + 1) * group])
    o_ref[0, :, :] = pooled


def _conv_bias_relu_kernel(p_ref, w_ref, b_ref, o_ref):
    """conv matmul + bias + ReLU for one batch element (lane-dense Cout)."""
    acc = jnp.dot(p_ref[0], w_ref[...], preferred_element_type=jnp.float32)
    o_ref[0, :, :] = jnp.maximum(acc + b_ref[...], 0.0)


# --------------------------- layer wrappers ---------------------------------

def _round_up(x, m):
    return ((x + m - 1) // m) * m


def conv1_relu_pool_pallas(x_nhwc, w_oihw, bias):
    """Conv2d(3,64,11,s=4,p=2) + ReLU + MaxPool2d(3,2), one pallas_call."""
    N, H, W, Cin = x_nhwc.shape
    Cout, Cin_w, kh, kw = w_oihw.shape
    assert Cin == Cin_w
    stride, pad = 4, 2
    xp = jnp.pad(x_nhwc, ((0, 0), (pad, pad), (pad, pad), (0, 0)))
    Ho = (H + 2 * pad - kh) // stride + 1
    Wo = (W + 2 * pad - kw) // stride + 1
    Po = (Ho - 3) // 2 + 1          # pooled height
    Qo = (Wo - 3) // 2 + 1          # pooled width

    # im2col for every conv output position: (N, Ho, Wo, kh*kw*Cin)
    cols = []
    for dy in range(kh):
        for dx in range(kw):
            cols.append(xp[:, dy:dy + stride * (Ho - 1) + 1:stride,
                              dx:dx + stride * (Wo - 1) + 1:stride, :])
    K = kh * kw * Cin
    pat = jnp.stack(cols, axis=3).reshape(N, Ho, Wo, K)

    # reorder rows pool-window-major so the kernel can max over aligned slabs
    Kp = _round_up(K, 128)
    Mg = Po * Qo                    # pooled positions per image
    Mgp = _round_up(Mg, 8)          # sublane-aligned group size
    groups = []
    for ky in range(3):
        for kx in range(3):
            g = pat[:, ky:ky + 2 * (Po - 1) + 1:2,
                       kx:kx + 2 * (Qo - 1) + 1:2, :].reshape(N, Mg, K)
            groups.append(jnp.pad(g, ((0, 0), (0, Mgp - Mg), (0, Kp - K))))
    patches = jnp.concatenate(groups, axis=1).astype(jnp.bfloat16)  # (N, 9*Mgp, Kp)

    Coutp = _round_up(Cout, 128)
    wmat = jnp.transpose(w_oihw, (2, 3, 1, 0)).reshape(K, Cout)
    wmat = jnp.pad(wmat, ((0, Kp - K), (0, Coutp - Cout))).astype(jnp.bfloat16)
    bias2d = jnp.pad(bias, (0, Coutp - Cout)).reshape(1, Coutp).astype(jnp.float32)

    out = pl.pallas_call(
        functools.partial(_conv1_relu_pool_kernel, n_win=9, group=Mgp),
        out_shape=jax.ShapeDtypeStruct((N, Mgp, Coutp), jnp.float32),
        grid=(N,),
        in_specs=[
            pl.BlockSpec((1, 9 * Mgp, Kp), lambda n: (n, 0, 0)),
            pl.BlockSpec((Kp, Coutp), lambda n: (0, 0)),
            pl.BlockSpec((1, Coutp), lambda n: (0, 0)),
        ],
        out_specs=pl.BlockSpec((1, Mgp, Coutp), lambda n: (n, 0, 0)),
        compiler_params=pltpu.CompilerParams(dimension_semantics=("parallel",)),
    )(patches, wmat, bias2d)

    return out[:, :Mg, :Cout].reshape(N, Po, Qo, Cout)


def conv2d_relu_pallas(x_nhwc, w_oihw, bias, *, stride, pad):
    """Conv2d + fused bias + ReLU (lane-dense padded Cout), grid over batch."""
    N, H, W, Cin = x_nhwc.shape
    Cout, Cin_w, kh, kw = w_oihw.shape
    assert Cin == Cin_w
    xp = jnp.pad(x_nhwc, ((0, 0), (pad, pad), (pad, pad), (0, 0)))
    Ho = (H + 2 * pad - kh) // stride + 1
    Wo = (W + 2 * pad - kw) // stride + 1

    cols = []
    for dy in range(kh):
        for dx in range(kw):
            cols.append(xp[:, dy:dy + stride * (Ho - 1) + 1:stride,
                              dx:dx + stride * (Wo - 1) + 1:stride, :])
    K = kh * kw * Cin
    pat = jnp.stack(cols, axis=3).reshape(N, Ho * Wo, K)

    M = Ho * Wo
    Mp = _round_up(M, 8)
    Kp = _round_up(K, 128)
    Coutp = _round_up(Cout, 128)
    patches = jnp.pad(pat, ((0, 0), (0, Mp - M), (0, Kp - K))).astype(jnp.bfloat16)
    wmat = jnp.transpose(w_oihw, (2, 3, 1, 0)).reshape(K, Cout)
    wmat = jnp.pad(wmat, ((0, Kp - K), (0, Coutp - Cout))).astype(jnp.bfloat16)
    bias2d = jnp.pad(bias, (0, Coutp - Cout)).reshape(1, Coutp).astype(jnp.float32)

    out = pl.pallas_call(
        _conv_bias_relu_kernel,
        out_shape=jax.ShapeDtypeStruct((N, Mp, Coutp), jnp.float32),
        grid=(N,),
        in_specs=[
            pl.BlockSpec((1, Mp, Kp), lambda n: (n, 0, 0)),
            pl.BlockSpec((Kp, Coutp), lambda n: (0, 0)),
            pl.BlockSpec((1, Coutp), lambda n: (0, 0)),
        ],
        out_specs=pl.BlockSpec((1, Mp, Coutp), lambda n: (n, 0, 0)),
        compiler_params=pltpu.CompilerParams(dimension_semantics=("parallel",)),
    )(patches, wmat, bias2d)

    return out[:, :M, :Cout].reshape(N, Ho, Wo, Cout)


# --------------------------- HeadNet forward --------------------------------

def init_head_params(key):
    k1, k2, k3, k4 = jax.random.split(key, 4)
    return dict(
        w1=jax.random.normal(k1, (64, 3, 11, 11), jnp.float32) * 0.05,
        b1=jax.random.normal(k2, (64,), jnp.float32) * 0.05,
        w2=jax.random.normal(k3, (192, 64, 5, 5), jnp.float32) * 0.05,
        b2=jax.random.normal(k4, (192,), jnp.float32) * 0.05,
    )


def headnet_forward(x_nchw, params):
    # NCHW (PyTorch convention) -> NHWC for the kernels
    x = jnp.transpose(x_nchw, (0, 2, 3, 1))
    # layers 0..2: Conv2d(3,64,11,s=4,p=2) + ReLU + MaxPool2d(3,2), fully fused
    x = conv1_relu_pool_pallas(x, params["w1"], params["b1"])
    # layers 3..4: Conv2d(64,192,5,s=1,p=2) + ReLU, fused
    x = conv2d_relu_pallas(x, params["w2"], params["b2"], stride=1, pad=2)
    # back to NCHW to match the PyTorch output layout
    return jnp.transpose(x, (0, 3, 1, 2))


def headnet_reference(x_nchw, params):
    dn = ("NCHW", "OIHW", "NCHW")
    y = jax.lax.conv_general_dilated(x_nchw, params["w1"], (4, 4),
                                     ((2, 2), (2, 2)), dimension_numbers=dn,
                                     precision=jax.lax.Precision.HIGHEST)
    y = jnp.maximum(y + params["b1"][None, :, None, None], 0.0)
    y = jax.lax.reduce_window(y, -jnp.inf, jax.lax.max,
                              (1, 1, 3, 3), (1, 1, 2, 2), "VALID")
    y = jax.lax.conv_general_dilated(y, params["w2"], (1, 1),
                                     ((2, 2), (2, 2)), dimension_numbers=dn,
                                     precision=jax.lax.Precision.HIGHEST)
    y = jnp.maximum(y + params["b2"][None, :, None, None], 0.0)
    return y


if __name__ == "__main__":
    key = jax.random.PRNGKey(0)
    kx, kp = jax.random.split(key)
    x = jax.random.normal(kx, (2, 3, 64, 64), jnp.float32)  # NCHW input
    params = init_head_params(kp)

    out = jax.jit(headnet_forward)(x, params)
    out = jax.block_until_ready(out)

    ref = headnet_reference(x, params)
    assert out.shape == (2, 192, 7, 7), out.shape
    # Kernel feeds the MXU with bf16 operands (f32 accumulation) per the perf
    # review; reference runs at Precision.HIGHEST, so atol is sized for bf16
    # input rounding over the K=1600 second-conv contraction.
    assert bool(jnp.allclose(out, ref, rtol=2e-2, atol=3e-2)), \
        float(jnp.max(jnp.abs(out - ref)))
    print("KERNEL_OK")
</pallas_src>

<mosaic_0001>
module attributes {stable_mosaic.version = 11 : i64} {
  func.func @_conv1_relu_pool_kernel(%arg0: i32, %arg1: memref<1x504x384xbf16, #tpu.memory_space<vmem>>, %arg2: memref<384x128xbf16, #tpu.memory_space<vmem>>, %arg3: memref<1x128xf32, #tpu.memory_space<vmem>>, %arg4: memref<1x56x128xf32, #tpu.memory_space<vmem>>) attributes {dimension_semantics = [#tpu.dimension_semantics<parallel>], iteration_bounds = array<i64: 2>, scalar_prefetch = 0 : i64, scratch_operands = 0 : i64, tpu.core_type = #tpu.core_type<tc>, window_params = [{transform_indices = @transform_0, window_bounds = array<i64: 1, 504, 384>}, {pipeline_mode = #tpu.pipeline_mode<synchronous>, transform_indices = @transform_1, window_bounds = array<i64: 384, 128>}, {pipeline_mode = #tpu.pipeline_mode<synchronous>, transform_indices = @transform_2, window_bounds = array<i64: 1, 128>}, {transform_indices = @transform_3, window_bounds = array<i64: 1, 56, 128>}]} {
    %c0 = arith.constant 0 : index
    %c0_0 = arith.constant 0 : index
    %c0_1 = arith.constant 0 : index
    %0 = vector.load %arg1[%c0, %c0_0, %c0_1] : memref<1x504x384xbf16, #tpu.memory_space<vmem>>, vector<1x504x384xbf16>
    %1 = vector.shape_cast %0 : vector<1x504x384xbf16> to vector<504x384xbf16>
    %c0_2 = arith.constant 0 : index
    %c0_3 = arith.constant 0 : index
    %2 = vector.load %arg2[%c0_2, %c0_3] : memref<384x128xbf16, #tpu.memory_space<vmem>>, vector<384x128xbf16>
    %cst = arith.constant dense<0.000000e+00> : vector<504x128xf32>
    %3 = tpu.matmul %1, %2, %cst {dimension_numbers = #tpu.dot_dimension_numbers<[1], [0], [0], [1], [0, 0, 1, 1], [], []>} : vector<504x384xbf16>, vector<384x128xbf16>, vector<504x128xf32> -> vector<504x128xf32>
    %c0_4 = arith.constant 0 : index
    %c0_5 = arith.constant 0 : index
    %4 = vector.load %arg3[%c0_4, %c0_5] : memref<1x128xf32, #tpu.memory_space<vmem>>, vector<1x128xf32>
    %5 = vector.broadcast %4 : vector<1x128xf32> to vector<504x128xf32>
    %6 = arith.addf %3, %5 : vector<504x128xf32>
    %cst_6 = arith.constant 0.000000e+00 : f32
    %7 = vector.broadcast %cst_6 : f32 to vector<504x128xf32>
    %8 = arith.maximumf %6, %7 : vector<504x128xf32>
    %9 = vector.extract_strided_slice %8 {offsets = [0, 0], sizes = [56, 128], strides = [1, 1]} : vector<504x128xf32> to vector<56x128xf32>
    %10 = vector.extract_strided_slice %8 {offsets = [56, 0], sizes = [56, 128], strides = [1, 1]} : vector<504x128xf32> to vector<56x128xf32>
    %11 = arith.maximumf %9, %10 : vector<56x128xf32>
    %12 = vector.extract_strided_slice %8 {offsets = [112, 0], sizes = [56, 128], strides = [1, 1]} : vector<504x128xf32> to vector<56x128xf32>
    %13 = arith.maximumf %11, %12 : vector<56x128xf32>
    %14 = vector.extract_strided_slice %8 {offsets = [168, 0], sizes = [56, 128], strides = [1, 1]} : vector<504x128xf32> to vector<56x128xf32>
    %15 = arith.maximumf %13, %14 : vector<56x128xf32>
    %16 = vector.extract_strided_slice %8 {offsets = [224, 0], sizes = [56, 128], strides = [1, 1]} : vector<504x128xf32> to vector<56x128xf32>
    %17 = arith.maximumf %15, %16 : vector<56x128xf32>
    %18 = vector.extract_strided_slice %8 {offsets = [280, 0], sizes = [56, 128], strides = [1, 1]} : vector<504x128xf32> to vector<56x128xf32>
    %19 = arith.maximumf %17, %18 : vector<56x128xf32>
    %20 = vector.extract_strided_slice %8 {offsets = [336, 0], sizes = [56, 128], strides = [1, 1]} : vector<504x128xf32> to vector<56x128xf32>
    %21 = arith.maximumf %19, %20 : vector<56x128xf32>
    %22 = vector.extract_strided_slice %8 {offsets = [392, 0], sizes = [56, 128], strides = [1, 1]} : vector<504x128xf32> to vector<56x128xf32>
    %23 = arith.maximumf %21, %22 : vector<56x128xf32>
    %24 = vector.extract_strided_slice %8 {offsets = [448, 0], sizes = [56, 128], strides = [1, 1]} : vector<504x128xf32> to vector<56x128xf32>
    %25 = arith.maximumf %23, %24 : vector<56x128xf32>
    %c0_7 = arith.constant 0 : index
    %c0_8 = arith.constant 0 : index
    %c0_9 = arith.constant 0 : index
    %26 = vector.load %arg4[%c0_7, %c0_8, %c0_9] : memref<1x56x128xf32, #tpu.memory_space<vmem>>, vector<1x56x128xf32>
    %27 = vector.shape_cast %26 : vector<1x56x128xf32> to vector<56x128xf32>
    %28 = vector.shape_cast %25 : vector<56x128xf32> to vector<1x56x128xf32>
    tpu.vector_store %arg4[%c0_7, %c0_8, %c0_9], %28 {strides = array<i32>} : memref<1x56x128xf32, #tpu.memory_space<vmem>>, vector<1x56x128xf32>,
    return
  }
  func.func @transform_0(%arg0: i32) -> (i32, i32, i32) {
    %c0_i32 = arith.constant 0 : i32
    %c0_i32_0 = arith.constant 0 : i32
    %c0_i32_1 = arith.constant 0 : i32
    return %arg0, %c0_i32, %c0_i32_0 : i32, i32, i32
  }
  func.func @transform_1(%arg0: i32) -> (i32, i32) {
    %c0_i32 = arith.constant 0 : i32
    %c0_i32_0 = arith.constant 0 : i32
    %c0_i32_1 = arith.constant 0 : i32
    return %c0_i32, %c0_i32_0 : i32, i32
  }
  func.func @transform_2(%arg0: i32) -> (i32, i32) {
    %c0_i32 = arith.constant 0 : i32
    %c0_i32_0 = arith.constant 0 : i32
    %c0_i32_1 = arith.constant 0 : i32
    return %c0_i32, %c0_i32_0 : i32, i32
  }
  func.func @transform_3(%arg0: i32) -> (i32, i32, i32) {
    %c0_i32 = arith.constant 0 : i32
    %c0_i32_0 = arith.constant 0 : i32
    %c0_i32_1 = arith.constant 0 : i32
    return %arg0, %c0_i32, %c0_i32_0 : i32, i32, i32
  }
}

module attributes {stable_mosaic.version = 11 : i64} {
  func.func @_conv_bias_relu_kernel(%arg0: i32, %arg1: memref<1x56x1664xbf16, #tpu.memory_space<vmem>>, %arg2: memref<1664x256xbf16, #tpu.memory_space<vmem>>, %arg3: memref<1x256xf32, #tpu.memory_space<vmem>>, %arg4: memref<1x56x256xf32, #tpu.memory_space<vmem>>) attributes {dimension_semantics = [#tpu.dimension_semantics<parallel>], iteration_bounds = array<i64: 2>, scalar_prefetch = 0 : i64, scratch_operands = 0 : i64, tpu.core_type = #tpu.core_type<tc>, window_params = [{transform_indices = @transform_0, window_bounds = array<i64: 1, 56, 1664>}, {pipeline_mode = #tpu.pipeline_mode<synchronous>, transform_indices = @transform_1, window_bounds = array<i64: 1664, 256>}, {pipeline_mode = #tpu.pipeline_mode<synchronous>, transform_indices = @transform_2, window_bounds = array<i64: 1, 256>}, {transform_indices = @transform_3, window_bounds = array<i64: 1, 56, 256>}]} {
    %c0 = arith.constant 0 : index
    %c0_0 = arith.constant 0 : index
    %c0_1 = arith.constant 0 : index
    %0 = vector.load %arg1[%c0, %c0_0, %c0_1] : memref<1x56x1664xbf16, #tpu.memory_space<vmem>>, vector<1x56x1664xbf16>
    %1 = vector.shape_cast %0 : vector<1x56x1664xbf16> to vector<56x1664xbf16>
    %c0_2 = arith.constant 0 : index
    %c0_3 = arith.constant 0 : index
    %2 = vector.load %arg2[%c0_2, %c0_3] : memref<1664x256xbf16, #tpu.memory_space<vmem>>, vector<1664x256xbf16>
    %cst = arith.constant dense<0.000000e+00> : vector<56x256xf32>
    %3 = tpu.matmul %1, %2, %cst {dimension_numbers = #tpu.dot_dimension_numbers<[1], [0], [0], [1], [0, 0, 1, 1], [], []>} : vector<56x1664xbf16>, vector<1664x256xbf16>, vector<56x256xf32> -> vector<56x256xf32>
    %c0_4 = arith.constant 0 : index
    %c0_5 = arith.constant 0 : index
    %4 = vector.load %arg3[%c0_4, %c0_5] : memref<1x256xf32, #tpu.memory_space<vmem>>, vector<1x256xf32>
    %5 = vector.broadcast %4 : vector<1x256xf32> to vector<56x256xf32>
    %6 = arith.addf %3, %5 : vector<56x256xf32>
    %cst_6 = arith.constant 0.000000e+00 : f32
    %7 = vector.broadcast %cst_6 : f32 to vector<56x256xf32>
    %8 = arith.maximumf %6, %7 : vector<56x256xf32>
    %c0_7 = arith.constant 0 : index
    %c0_8 = arith.constant 0 : index
    %c0_9 = arith.constant 0 : index
    %9 = vector.load %arg4[%c0_7, %c0_8, %c0_9] : memref<1x56x256xf32, #tpu.memory_space<vmem>>, vector<1x56x256xf32>
    %10 = vector.shape_cast %9 : vector<1x56x256xf32> to vector<56x256xf32>
    %11 = vector.shape_cast %8 : vector<56x256xf32> to vector<1x56x256xf32>
    tpu.vector_store %arg4[%c0_7, %c0_8, %c0_9], %11 {strides = array<i32>} : memref<1x56x256xf32, #tpu.memory_space<vmem>>, vector<1x56x256xf32>,
    return
  }
  func.func @transform_0(%arg0: i32) -> (i32, i32, i32) {
    %c0_i32 = arith.constant 0 : i32
    %c0_i32_0 = arith.constant 0 : i32
    %c0_i32_1 = arith.constant 0 : i32
    return %arg0, %c0_i32, %c0_i32_0 : i32, i32, i32
  }
  func.func @transform_1(%arg0: i32) -> (i32, i32) {
    %c0_i32 = arith.constant 0 : i32
    %c0_i32_0 = arith.constant 0 : i32
    %c0_i32_1 = arith.constant 0 : i32
    return %c0_i32, %c0_i32_0 : i32, i32
  }
  func.func @transform_2(%arg0: i32) -> (i32, i32) {
    %c0_i32 = arith.constant 0 : i32
    %c0_i32_0 = arith.constant 0 : i32
    %c0_i32_1 = arith.constant 0 : i32
    return %c0_i32, %c0_i32_0 : i32, i32
  }
  func.func @transform_3(%arg0: i32) -> (i32, i32, i32) {
    %c0_i32 = arith.constant 0 : i32
    %c0_i32_0 = arith.constant 0 : i32
    %c0_i32_1 = arith.constant 0 : i32
    return %arg0, %c0_i32, %c0_i32_0 : i32, i32, i32
  }
}

</mosaic_0001>

<llo_original>
// kernel: headnet_forward.2
$region0: #{headnet_forward.2}
  #allocation0 [shape = 'u32[]', space=smem, size = 0x4, offset = 0x4, fixed_abs, tag = 'smem constant byte address 0x4 - core index']
  #allocation1 [shape = 'u32[144,128]{1,0:T(1,128)}', space=vmem, size = 0x12000, scoped, tag = 'internal scratch']
  %s0 = inlined_call_operand.vmem [shape: bf16[2,504,384], index: 0, kind: input, shape index: {}]
  %s1 = inlined_call_operand.vmem [shape: bf16[384,128], index: 1, kind: input, shape index: {}]
  %s2 = inlined_call_operand.vmem [shape: f32[1,128], index: 2, kind: input, shape index: {}]
  %s3 = inlined_call_operand.vmem [shape: f32[2,56,128], index: 3, kind: output, shape index: {}]
  %s4 = sld [smem:[#allocation0]]
  $region45: #{headnet_forward.2} parent=0
    _
  %s6 = ssub.s32 1, %s4
  %s7 = scalar_select 0, %s6, %s4
  loop: start=0, step=1, limit=4
  $region2: #{headnet_forward.2} parent=0 // loop_pre_header
    _
  $region3: #{headnet_forward.2} parent=0 // loop_header
    %s9 = sphi 0, %s13
    %p10 = scmp.ge.s32.totalorder %s9, 4
    %s19 = sphi 0, %s21
    %s22 = sphi 0, %s19
    %s23 = sphi 0, %s22
    %s39 = sphi 0, %s23
    %s43 = sphi 0, %s43
    %s45 = sphi 0, %s43
    %s46 = sphi 0, %s45
    %s60 = sphi 0, %s46
    %s64 = sphi 0, %s64
    %s66 = sphi 0, %s64
    %s67 = sphi 0, %s66
    %s81 = sphi 0, %s67
    %s87 = sphi 0, %s89
    %s90 = sphi 0, %s87
    %s91 = sphi 0, %s90
    %s107 = sphi 0, %s91
  $region4: #{headnet_forward.2} parent=0 // loop_header_branch
    %12 = sbr.rel (%p10) target = $region8
  $region5: #{headnet_forward.2} parent=0 // loop_body
    %s14 = ssub.s32 %s9, 1
    %s15 = ssub.s32 %s9, 2
    %s16 = sadd.s32 %s9, 1
    %s17 = ssub.s32 %s9, %s16
    %p18 = scmp.eq.s32.totalorder %s17, 0
    %s20 = sadd.s32 %s19, 1
    %s21 = scalar_select %p18, %s19, %s20
    %p24 = pneg %p18
    %p25 = scmp.eq.s32.totalorder %s9, 1
    %p26 = por %p24, %p25
    %p27 = scmp.ne.s32.totalorder %s19, %s22
    %p28 = scmp.eq.s32.totalorder %s9, 0
    %p29 = por %p27, %p28
    %p30 = scmp.ne.s32.totalorder %s19, %s22
    %p31 = scmp.eq.s32.totalorder %s14, 1
    %p32 = por %p30, %p31
    %p33 = scmp.ne.s32.totalorder %s22, %s23
    %p34 = scmp.eq.s32.totalorder %s14, 0
    %p35 = por %p33, %p34
    %p36 = scmp.ne.s32.totalorder %s22, %s23
    %p37 = scmp.eq.s32.totalorder %s15, 1
    %p38 = por %p36, %p37
    %p40 = scmp.ne.s32.totalorder %s23, %s39
    %p41 = scmp.eq.s32.totalorder %s15, 0
    %p42 = por %p40, %p41
    %s44 = sadd.s32 %s43, 1
    %p47 = scmp.eq.s32.totalorder %s9, 1
    %p48 = scmp.ne.s32.totalorder %s43, %s45
    %p49 = scmp.eq.s32.totalorder %s9, 0
    %p50 = por %p48, %p49
    %p51 = scmp.ne.s32.totalorder %s43, %s45
    %p52 = scmp.eq.s32.totalorder %s14, 1
    %p53 = por %p51, %p52
    %p54 = scmp.ne.s32.totalorder %s45, %s46
    %p55 = scmp.eq.s32.totalorder %s14, 0
    %p56 = por %p54, %p55
    %p57 = scmp.ne.s32.totalorder %s45, %s46
    %p58 = scmp.eq.s32.totalorder %s15, 1
    %p59 = por %p57, %p58
    %p61 = scmp.ne.s32.totalorder %s46, %s60
    %p62 = scmp.eq.s32.totalorder %s15, 0
    %p63 = por %p61, %p62
    %s65 = sadd.s32 %s64, 1
    %p68 = scmp.eq.s32.totalorder %s9, 1
    %p69 = scmp.ne.s32.totalorder %s64, %s66
    %p70 = scmp.eq.s32.totalorder %s9, 0
    %p71 = por %p69, %p70
    %p72 = scmp.ne.s32.totalorder %s64, %s66
    %p73 = scmp.eq.s32.totalorder %s14, 1
    %p74 = por %p72, %p73
    %p75 = scmp.ne.s32.totalorder %s66, %s67
    %p76 = scmp.eq.s32.totalorder %s14, 0
    %p77 = por %p75, %p76
    %p78 = scmp.ne.s32.totalorder %s66, %s67
    %p79 = scmp.eq.s32.totalorder %s15, 1
    %p80 = por %p78, %p79
    %p82 = scmp.ne.s32.totalorder %s67, %s81
    %p83 = scmp.eq.s32.totalorder %s15, 0
    %p84 = por %p82, %p83
    %s85 = ssub.s32 %s9, %s16
    %p86 = scmp.eq.s32.totalorder %s85, 0
    %s88 = sadd.s32 %s87, 1
    %s89 = scalar_select %p86, %s87, %s88
    %p92 = pneg %p86
    %p93 = scmp.eq.s32.totalorder %s9, 1
    %p94 = por %p92, %p93
    %p95 = scmp.ne.s32.totalorder %s87, %s90
    %p96 = scmp.eq.s32.totalorder %s9, 0
    %p97 = por %p95, %p96
    %p98 = scmp.ne.s32.totalorder %s87, %s90
    %p99 = scmp.eq.s32.totalorder %s14, 1
    %p100 = por %p98, %p99
    %p101 = scmp.ne.s32.totalorder %s90, %s91
    %p102 = scmp.eq.s32.totalorder %s14, 0
    %p103 = por %p101, %p102
    %p104 = scmp.ne.s32.totalorder %s90, %s91
    %p105 = scmp.eq.s32.totalorder %s15, 1
    %p106 = por %p104, %p105
    %p108 = scmp.ne.s32.totalorder %s91, %s107
    %p109 = scmp.eq.s32.totalorder %s15, 0
    %p110 = por %p108, %p109
    %p111 = scmp.le.s32.totalorder 1, %s9
    %p112 = scmp.lt.s32.totalorder %s9, 3
    %p113 = pnand %p111, %p112
    %p114 = pneg %p113
    // Predicated region
    $region9: #{headnet_forward.2} parent=5 // pred_check
      _
    $region10: #{headnet_forward.2} parent=5 // pred_check_branch
      %116 = sbr.rel (%p113) target = $region12
    $region11: #{headnet_forward.2} parent=5 // pred_region
      %s117 = ssub.s32 %s9, 1
      // Predicated region
      $region13: #{headnet_forward.2} parent=11 // pred_check
        %p118 = pneg %p56
      $region14: #{headnet_forward.2} parent=11 // pred_check_branch
        %120 = sbr.rel (%p118) target = $region16
      $region15: #{headnet_forward.2} parent=11 // pred_region
        _
      $region16: #{headnet_forward.2} parent=11 // pred_fallthru
        _
      // Predicated region
      $region17: #{headnet_forward.2} parent=11 // pred_check
        %p121 = pneg %p77
      $region18: #{headnet_forward.2} parent=11 // pred_check_branch
        %123 = sbr.rel (%p121) target = $region20
      $region19: #{headnet_forward.2} parent=11 // pred_region
        _
      $region20: #{headnet_forward.2} parent=11 // pred_fallthru
        _
    $region12: #{headnet_forward.2} parent=5 // pred_fallthru
      _
    %p124 = scmp.lt.s32.totalorder %s9, 2
    // Predicated region
    $region21: #{headnet_forward.2} parent=5 // pred_check
      %p125 = pneg %p124
    $region22: #{headnet_forward.2} parent=5 // pred_check_branch
      %127 = sbr.rel (%p125) target = $region24
    $region23: #{headnet_forward.2} parent=5 // pred_region
      // Predicated region
      $region25: #{headnet_forward.2} parent=23 // pred_check
        %p128 = pneg %p29
      $region26: #{headnet_forward.2} parent=23 // pred_check_branch
        %130 = sbr.rel (%p128) target = $region28
      $region27: #{headnet_forward.2} parent=23 // pred_region
        %p131 = scmp.lt.s32.totalorder %s9, 1
        %s132 = scalar_select %p131, %s9, 1
        %s133 = smul.addr %s132, 189
        %s134 = smul.addr %s133, 4
        %s135 = scalar_lea.vmem %s0, %s134
      $region28: #{headnet_forward.2} parent=23 // pred_fallthru
        _
    $region24: #{headnet_forward.2} parent=5 // pred_fallthru
      _
    %p136 = scmp.le.s32.totalorder 1, %s9
    %p137 = scmp.lt.s32.totalorder %s9, 3
    %p138 = pnand %p136, %p137
    %p139 = pneg %p138
    // Predicated region
    $region29: #{headnet_forward.2} parent=5 // pred_check
      _
    $region30: #{headnet_forward.2} parent=5 // pred_check_branch
      %141 = sbr.rel (%p138) target = $region32
    $region31: #{headnet_forward.2} parent=5 // pred_region
      %s142 = ssub.s32 %s9, 1
      %p143 = scmp.lt.s32.totalorder %s14, 1
      %s144 = scalar_select %p143, %s14, 1
      %s145 = smul.addr %s144, 189
      %s146 = smul.addr %s145, 4
      %s147 = scalar_lea.vmem %s0, %s146
      %p148 = pneg %p35
      %p149 = pneg %p32
      %p150 = pneg %p56
      %p151 = pneg %p53
      %p152 = pneg %p77
      %p153 = pneg %p74
      %p154 = pneg %p103
      %p155 = pneg %p100
      %p156 = scmp.lt.s32.totalorder %s14, 1
      %s157 = scalar_select %p156, %s14, 1
      %s158 = smul.addr %s157, 7
      %s159 = smul.addr %s158, 8
      %s160 = scalar_lea.vmem %s3, %s159
      %p161 = scmp.lt.s32.totalorder %s14, 1
      %s162 = scalar_select %p161, %s14, 1
      %s163 = smul.addr %s162, 189
      %s164 = smul.addr %s163, 4
      %s165 = scalar_lea.vmem %s0, %s164
      %p166 = scmp.lt.s32.totalorder %s14, 1
      %s167 = scalar_select %p166, %s14, 1
      %s168 = smul.addr %s167, 7
      %s169 = smul.addr %s168, 8
      %s170 = scalar_lea.vmem %s3, %s169
      %v172 = vld [vmem:[%s165] sm:$0xff]
      %v173 = vld [vmem:[%s165 + $0x8] sm:$0xf]
      %v174 = vld [vmem:[%s165 + $0xc] sm:$0xff]
      %v175 = vld [vmem:[%s165 + $0x14] sm:$0xf]
      %v176 = vld [vmem:[%s165 + $0x18] sm:$0xff]
      %v177 = vld [vmem:[%s165 + $0x20] sm:$0xf]
      %v178 = vld [vmem:[%s165 + $0x24] sm:$0xff]
      %v179 = vld [vmem:[%s165 + $0x2c] sm:$0xf]
      %v180 = vld [vmem:[%s165 + $0x30] sm:$0xff]
      %v181 = vld [vmem:[%s165 + $0x38] sm:$0xf]
      %v182 = vld [vmem:[%s165 + $0x3c] sm:$0xff]
      %v183 = vld [vmem:[%s165 + $0x44] sm:$0xf]
      %v184 = vld [vmem:[%s165 + $0x48] sm:$0xff]
      %v185 = vld [vmem:[%s165 + $0x50] sm:$0xf]
      %v186 = vld [vmem:[%s165 + $0x54] sm:$0xff]
      %v187 = vld [vmem:[%s165 + $0x5c] sm:$0xf]
      %v188 = vld [vmem:[%s165 + $0x60] sm:$0xff]
      %v189 = vld [vmem:[%s165 + $0x68] sm:$0xf]
      %v190 = vld [vmem:[%s165 + $0x6c] sm:$0xff]
      %v191 = vld [vmem:[%s165 + $0x74] sm:$0xf]
      %v192 = vld [vmem:[%s165 + $0x78] sm:$0xff]
      %v193 = vld [vmem:[%s165 + $0x80] sm:$0xf]
      %v194 = vld [vmem:[%s165 + $0x84] sm:$0xff]
      %v195 = vld [vmem:[%s165 + $0x8c] sm:$0xf]
      %v196 = vld [vmem:[%s165 + $0x90] sm:$0xff]
      %v197 = vld [vmem:[%s165 + $0x98] sm:$0xf]
      %v198 = vld [vmem:[%s165 + $0x9c] sm:$0xff]
      %v199 = vld [vmem:[%s165 + $0xa4] sm:$0xf]
      %v200 = vld [vmem:[%s165 + $0xa8] sm:$0xff]
      %v201 = vld [vmem:[%s165 + $0xb0] sm:$0xf]
      %v202 = vld [vmem:[%s165 + $0xb4] sm:$0xff]
      %v203 = vld [vmem:[%s165 + $0xbc] sm:$0xf]
      %v204 = vld [vmem:[%s165 + $0xc0] sm:$0xff]
      %v205 = vld [vmem:[%s165 + $0xc8] sm:$0xf]
      %v206 = vld [vmem:[%s165 + $0xcc] sm:$0xff]
      %v207 = vld [vmem:[%s165 + $0xd4] sm:$0xf]
      %v208 = vld [vmem:[%s165 + $0xd8] sm:$0xff]
      %v209 = vld [vmem:[%s165 + $0xe0] sm:$0xf]
      %v210 = vld [vmem:[%s165 + $0xe4] sm:$0xff]
      %v211 = vld [vmem:[%s165 + $0xec] sm:$0xf]
      %v212 = vld [vmem:[%s165 + $0xf0] sm:$0xff]
      %v213 = vld [vmem:[%s165 + $0xf8] sm:$0xf]
      %v214 = vld [vmem:[%s165 + $0xfc] sm:$0xff]
      %v215 = vld [vmem:[%s165 + $0x104] sm:$0xf]
      %v216 = vld [vmem:[%s165 + $0x108] sm:$0xff]
      %v217 = vld [vmem:[%s165 + $0x110] sm:$0xf]
      %v218 = vld [vmem:[%s165 + $0x114] sm:$0xff]
      %v219 = vld [vmem:[%s165 + $0x11c] sm:$0xf]
      %v220 = vld [vmem:[%s165 + $0x120] sm:$0xff]
      %v221 = vld [vmem:[%s165 + $0x128] sm:$0xf]
      %v222 = vld [vmem:[%s165 + $0x12c] sm:$0xff]
      %v223 = vld [vmem:[%s165 + $0x134] sm:$0xf]
      %v224 = vld [vmem:[%s165 + $0x138] sm:$0xff]
      %v225 = vld [vmem:[%s165 + $0x140] sm:$0xf]
      %v226 = vld [vmem:[%s165 + $0x144] sm:$0xff]
      %v227 = vld [vmem:[%s165 + $0x14c] sm:$0xf]
      %v228 = vld [vmem:[%s165 + $0x150] sm:$0xff]
      %v229 = vld [vmem:[%s165 + $0x158] sm:$0xf]
      %v230 = vld [vmem:[%s165 + $0x15c] sm:$0xff]
      %v231 = vld [vmem:[%s165 + $0x164] sm:$0xf]
      %v232 = vld [vmem:[%s165 + $0x168] sm:$0xff]
      %v233 = vld [vmem:[%s165 + $0x170] sm:$0xf]
      %v234 = vld [vmem:[%s165 + $0x174] sm:$0xff]
      %v235 = vld [vmem:[%s165 + $0x17c] sm:$0xf]
      %v236 = vld [vmem:[%s165 + $0x180] sm:$0xff]
      %v237 = vld [vmem:[%s165 + $0x188] sm:$0xf]
      %v238 = vld [vmem:[%s165 + $0x18c] sm:$0xff]
      %v239 = vld [vmem:[%s165 + $0x194] sm:$0xf]
      %v240 = vld [vmem:[%s165 + $0x198] sm:$0xff]
      %v241 = vld [vmem:[%s165 + $0x1a0] sm:$0xf]
      %v242 = vld [vmem:[%s165 + $0x1a4] sm:$0xff]
      %v243 = vld [vmem:[%s165 + $0x1ac] sm:$0xf]
      %v244 = vld [vmem:[%s165 + $0x1b0] sm:$0xff]
      %v245 = vld [vmem:[%s165 + $0x1b8] sm:$0xf]
      %v246 = vld [vmem:[%s165 + $0x1bc] sm:$0xff]
      %v247 = vld [vmem:[%s165 + $0x1c4] sm:$0xf]
      %v248 = vld [vmem:[%s165 + $0x1c8] sm:$0xff]
      %v249 = vld [vmem:[%s165 + $0x1d0] sm:$0xf]
      %v250 = vld [vmem:[%s165 + $0x1d4] sm:$0xff]
      %v251 = vld [vmem:[%s165 + $0x1dc] sm:$0xf]
      %v252 = vld [vmem:[%s165 + $0x1e0] sm:$0xff]
      %v253 = vld [vmem:[%s165 + $0x1e8] sm:$0xf]
      %v254 = vld [vmem:[%s165 + $0x1ec] sm:$0xff]
      %v255 = vld [vmem:[%s165 + $0x1f4] sm:$0xf]
      %v256 = vld [vmem:[%s165 + $0x1f8] sm:$0xff]
      %v257 = vld [vmem:[%s165 + $0x200] sm:$0xf]
      %v258 = vld [vmem:[%s165 + $0x204] sm:$0xff]
      %v259 = vld [vmem:[%s165 + $0x20c] sm:$0xf]
      %v260 = vld [vmem:[%s165 + $0x210] sm:$0xff]
      %v261 = vld [vmem:[%s165 + $0x218] sm:$0xf]
      %v262 = vld [vmem:[%s165 + $0x21c] sm:$0xff]
      %v263 = vld [vmem:[%s165 + $0x224] sm:$0xf]
      %v264 = vld [vmem:[%s165 + $0x228] sm:$0xff]
      %v265 = vld [vmem:[%s165 + $0x230] sm:$0xf]
      %v266 = vld [vmem:[%s165 + $0x234] sm:$0xff]
      %v267 = vld [vmem:[%s165 + $0x23c] sm:$0xf]
      %v268 = vld [vmem:[%s165 + $0x240] sm:$0xff]
      %v269 = vld [vmem:[%s165 + $0x248] sm:$0xf]
      %v270 = vld [vmem:[%s165 + $0x24c] sm:$0xff]
      %v271 = vld [vmem:[%s165 + $0x254] sm:$0xf]
      %v272 = vld [vmem:[%s165 + $0x258] sm:$0xff]
      %v273 = vld [vmem:[%s165 + $0x260] sm:$0xf]
      %v274 = vld [vmem:[%s165 + $0x264] sm:$0xff]
      %v275 = vld [vmem:[%s165 + $0x26c] sm:$0xf]
      %v276 = vld [vmem:[%s165 + $0x270] sm:$0xff]
      %v277 = vld [vmem:[%s165 + $0x278] sm:$0xf]
      %v278 = vld [vmem:[%s165 + $0x27c] sm:$0xff]
      %v279 = vld [vmem:[%s165 + $0x284] sm:$0xf]
      %v280 = vld [vmem:[%s165 + $0x288] sm:$0xff]
      %v281 = vld [vmem:[%s165 + $0x290] sm:$0xf]
      %v282 = vld [vmem:[%s165 + $0x294] sm:$0xff]
      %v283 = vld [vmem:[%s165 + $0x29c] sm:$0xf]
      %v284 = vld [vmem:[%s165 + $0x2a0] sm:$0xff]
      %v285 = vld [vmem:[%s165 + $0x2a8] sm:$0xf]
      %v286 = vld [vmem:[%s165 + $0x2ac] sm:$0xff]
      %v287 = vld [vmem:[%s165 + $0x2b4] sm:$0xf]
      %v288 = vld [vmem:[%s165 + $0x2b8] sm:$0xff]
      %v289 = vld [vmem:[%s165 + $0x2c0] sm:$0xf]
      %v290 = vld [vmem:[%s165 + $0x2c4] sm:$0xff]
      %v291 = vld [vmem:[%s165 + $0x2cc] sm:$0xf]
      %v292 = vld [vmem:[%s165 + $0x2d0] sm:$0xff]
      %v293 = vld [vmem:[%s165 + $0x2d8] sm:$0xf]
      %v294 = vld [vmem:[%s165 + $0x2dc] sm:$0xff]
      %v295 = vld [vmem:[%s165 + $0x2e4] sm:$0xf]
      %v296 = vld [vmem:[%s165 + $0x2e8] sm:$0xff]
      %v297 = vld [vmem:[%s165 + $0x2f0] sm:$0xf]
      %v298 = vld [vmem:[%s1] sm:$0xf]
      %v299 = vld [vmem:[%s1 + $0x4] sm:$0xf]
      %v300 = vld [vmem:[%s1 + $0x8] sm:$0xf]
      %v301 = vld [vmem:[%s1 + $0xc] sm:$0xf]
      %v302 = vld [vmem:[%s1 + $0x10] sm:$0xf]
      %v303 = vld [vmem:[%s1 + $0x14] sm:$0xf]
      %v304 = vld [vmem:[%s1 + $0x18] sm:$0xf]
      %v305 = vld [vmem:[%s1 + $0x1c] sm:$0xf]
      %v306 = vld [vmem:[%s1 + $0x20] sm:$0xf]
      %v307 = vld [vmem:[%s1 + $0x24] sm:$0xf]
      %v308 = vld [vmem:[%s1 + $0x28] sm:$0xf]
      %v309 = vld [vmem:[%s1 + $0x2c] sm:$0xf]
      %v310 = vld [vmem:[%s1 + $0x30] sm:$0xf]
      %v311 = vld [vmem:[%s1 + $0x34] sm:$0xf]
      %v312 = vld [vmem:[%s1 + $0x38] sm:$0xf]
      %v313 = vld [vmem:[%s1 + $0x3c] sm:$0xf]
      %v314 = vld [vmem:[%s1 + $0x40] sm:$0xf]
      %v315 = vld [vmem:[%s1 + $0x44] sm:$0xf]
      %v316 = vld [vmem:[%s1 + $0x48] sm:$0xf]
      %v317 = vld [vmem:[%s1 + $0x4c] sm:$0xf]
      %v318 = vld [vmem:[%s1 + $0x50] sm:$0xf]
      %v319 = vld [vmem:[%s1 + $0x54] sm:$0xf]
      %v320 = vld [vmem:[%s1 + $0x58] sm:$0xf]
      %v321 = vld [vmem:[%s1 + $0x5c] sm:$0xf]
      %v322 = vld [vmem:[%s1 + $0x60] sm:$0xf]
      %v323 = vld [vmem:[%s1 + $0x64] sm:$0xf]
      %v324 = vld [vmem:[%s1 + $0x68] sm:$0xf]
      %v325 = vld [vmem:[%s1 + $0x6c] sm:$0xf]
      %v326 = vld [vmem:[%s1 + $0x70] sm:$0xf]
      %v327 = vld [vmem:[%s1 + $0x74] sm:$0xf]
      %v328 = vld [vmem:[%s1 + $0x78] sm:$0xf]
      %v329 = vld [vmem:[%s1 + $0x7c] sm:$0xf]
      %v330 = vld [vmem:[%s1 + $0x80] sm:$0xf]
      %v331 = vld [vmem:[%s1 + $0x84] sm:$0xf]
      %v332 = vld [vmem:[%s1 + $0x88] sm:$0xf]
      %v333 = vld [vmem:[%s1 + $0x8c] sm:$0xf]
      %v334 = vld [vmem:[%s1 + $0x90] sm:$0xf]
      %v335 = vld [vmem:[%s1 + $0x94] sm:$0xf]
      %v336 = vld [vmem:[%s1 + $0x98] sm:$0xf]
      %v337 = vld [vmem:[%s1 + $0x9c] sm:$0xf]
      %v338 = vld [vmem:[%s1 + $0xa0] sm:$0xf]
      %v339 = vld [vmem:[%s1 + $0xa4] sm:$0xf]
      %v340 = vld [vmem:[%s1 + $0xa8] sm:$0xf]
      %v341 = vld [vmem:[%s1 + $0xac] sm:$0xf]
      %v342 = vld [vmem:[%s1 + $0xb0] sm:$0xf]
      %v343 = vld [vmem:[%s1 + $0xb4] sm:$0xf]
      %v344 = vld [vmem:[%s1 + $0xb8] sm:$0xf]
      %v345 = vld [vmem:[%s1 + $0xbc] sm:$0xf]
      %v346 = vld [vmem:[%s2] sm:$0x1]
      %v348 = vlaneseq
      %v349 = vshrl.u32 %v348, 7
      %v350 = vsub.s32 0, %v349
      %v351 = vrot.slane %v346, %v350
      %v479 = vunpack.c.l.b16 %v172
      %v480 = vunpack.c.h.b16 %v172
      %v481 = vunpack.c.l.b16 %v173
      %v482 = vunpack.c.l.b16 %v174
      %v483 = vunpack.c.h.b16 %v174
      %v484 = vunpack.c.l.b16 %v175
      %v485 = vunpack.c.l.b16 %v176
      %v486 = vunpack.c.h.b16 %v176
      %v487 = vunpack.c.l.b16 %v177
      %v488 = vunpack.c.l.b16 %v178
      %v489 = vunpack.c.h.b16 %v178
      %v490 = vunpack.c.l.b16 %v179
      %v491 = vunpack.c.l.b16 %v180
      %v492 = vunpack.c.h.b16 %v180
      %v493 = vunpack.c.l.b16 %v181
      %v494 = vunpack.c.l.b16 %v182
      %v495 = vunpack.c.h.b16 %v182
      %v496 = vunpack.c.l.b16 %v183
      %v497 = vunpack.c.l.b16 %v184
      %v498 = vunpack.c.h.b16 %v184
      %v499 = vunpack.c.l.b16 %v185
      %v500 = vunpack.c.l.b16 %v186
      %v501 = vunpack.c.h.b16 %v186
      %v502 = vunpack.c.l.b16 %v187
      %v503 = vunpack.c.l.b16 %v188
      %v504 = vunpack.c.h.b16 %v188
      %v505 = vunpack.c.l.b16 %v189
      %v506 = vunpack.c.l.b16 %v190
      %v507 = vunpack.c.h.b16 %v190
      %v508 = vunpack.c.l.b16 %v191
      %v509 = vunpack.c.l.b16 %v192
      %v510 = vunpack.c.h.b16 %v192
      %v511 = vunpack.c.l.b16 %v193
      %v512 = vunpack.c.l.b16 %v194
      %v513 = vunpack.c.h.b16 %v194
      %v514 = vunpack.c.l.b16 %v195
      %v515 = vunpack.c.l.b16 %v196
      %v516 = vunpack.c.h.b16 %v196
      %v517 = vunpack.c.l.b16 %v197
      %v518 = vunpack.c.l.b16 %v198
      %v519 = vunpack.c.h.b16 %v198
      %v520 = vunpack.c.l.b16 %v199
      %v521 = vunpack.c.l.b16 %v200
      %v522 = vunpack.c.h.b16 %v200
      %v523 = vunpack.c.l.b16 %v201
      %v524 = vunpack.c.l.b16 %v202
      %v525 = vunpack.c.h.b16 %v202
      %v526 = vunpack.c.l.b16 %v203
      %v527 = vunpack.c.l.b16 %v204
      %v528 = vunpack.c.h.b16 %v204
      %v529 = vunpack.c.l.b16 %v205
      %v530 = vunpack.c.l.b16 %v206
      %v531 = vunpack.c.h.b16 %v206
      %v532 = vunpack.c.l.b16 %v207
      %v533 = vunpack.c.l.b16 %v208
      %v534 = vunpack.c.h.b16 %v208
      %v535 = vunpack.c.l.b16 %v209
      %v536 = vunpack.c.l.b16 %v210
      %v537 = vunpack.c.h.b16 %v210
      %v538 = vunpack.c.l.b16 %v211
      %v539 = vunpack.c.l.b16 %v212
      %v540 = vunpack.c.h.b16 %v212
      %v541 = vunpack.c.l.b16 %v213
      %v542 = vunpack.c.l.b16 %v214
      %v543 = vunpack.c.h.b16 %v214
      %v544 = vunpack.c.l.b16 %v215
      %v545 = vunpack.c.l.b16 %v216
      %v546 = vunpack.c.h.b16 %v216
      %v547 = vunpack.c.l.b16 %v217
      %v548 = vunpack.c.l.b16 %v218
      %v549 = vunpack.c.h.b16 %v218
      %v550 = vunpack.c.l.b16 %v219
      %v551 = vunpack.c.l.b16 %v220
      %v552 = vunpack.c.h.b16 %v220
      %v553 = vunpack.c.l.b16 %v221
      %v554 = vunpack.c.l.b16 %v222
      %v555 = vunpack.c.h.b16 %v222
      %v556 = vunpack.c.l.b16 %v223
      %v557 = vunpack.c.l.b16 %v224
      %v558 = vunpack.c.h.b16 %v224
      %v559 = vunpack.c.l.b16 %v225
      %v560 = vunpack.c.l.b16 %v226
      %v561 = vunpack.c.h.b16 %v226
      %v562 = vunpack.c.l.b16 %v227
      %v563 = vunpack.c.l.b16 %v228
      %v564 = vunpack.c.h.b16 %v228
      %v565 = vunpack.c.l.b16 %v229
      %v566 = vunpack.c.l.b16 %v230
      %v567 = vunpack.c.h.b16 %v230
      %v568 = vunpack.c.l.b16 %v231
      %v569 = vunpack.c.l.b16 %v232
      %v570 = vunpack.c.h.b16 %v232
      %v571 = vunpack.c.l.b16 %v233
      %v572 = vunpack.c.l.b16 %v234
      %v573 = vunpack.c.h.b16 %v234
      %v574 = vunpack.c.l.b16 %v235
      %v575 = vunpack.c.l.b16 %v236
      %v576 = vunpack.c.h.b16 %v236
      %v577 = vunpack.c.l.b16 %v237
      %v578 = vunpack.c.l.b16 %v238
      %v579 = vunpack.c.h.b16 %v238
      %v580 = vunpack.c.l.b16 %v239
      %v581 = vunpack.c.l.b16 %v240
      %v582 = vunpack.c.h.b16 %v240
      %v583 = vunpack.c.l.b16 %v241
      %v584 = vunpack.c.l.b16 %v242
      %v585 = vunpack.c.h.b16 %v242
      %v586 = vunpack.c.l.b16 %v243
      %v587 = vunpack.c.l.b16 %v244
      %v588 = vunpack.c.h.b16 %v244
      %v589 = vunpack.c.l.b16 %v245
      %v590 = vunpack.c.l.b16 %v246
      %v591 = vunpack.c.h.b16 %v246
      %v592 = vunpack.c.l.b16 %v247
      %v593 = vunpack.c.l.b16 %v248
      %v594 = vunpack.c.h.b16 %v248
      %v595 = vunpack.c.l.b16 %v249
      %v596 = vunpack.c.l.b16 %v250
      %v597 = vunpack.c.h.b16 %v250
      %v598 = vunpack.c.l.b16 %v251
      %v599 = vunpack.c.l.b16 %v252
      %v600 = vunpack.c.h.b16 %v252
      %v601 = vunpack.c.l.b16 %v253
      %v602 = vunpack.c.l.b16 %v254
      %v603 = vunpack.c.h.b16 %v254
      %v604 = vunpack.c.l.b16 %v255
      %v605 = vunpack.c.l.b16 %v256
      %v606 = vunpack.c.h.b16 %v256
      %v607 = vunpack.c.l.b16 %v257
      %v608 = vunpack.c.l.b16 %v258
      %v609 = vunpack.c.h.b16 %v258
      %v610 = vunpack.c.l.b16 %v259
      %v611 = vunpack.c.l.b16 %v260
      %v612 = vunpack.c.h.b16 %v260
      %v613 = vunpack.c.l.b16 %v261
      %v614 = vunpack.c.l.b16 %v262
      %v615 = vunpack.c.h.b16 %v262
      %v616 = vunpack.c.l.b16 %v263
      %v617 = vunpack.c.l.b16 %v264
      %v618 = vunpack.c.h.b16 %v264
      %v619 = vunpack.c.l.b16 %v265
      %v620 = vunpack.c.l.b16 %v266
      %v621 = vunpack.c.h.b16 %v266
      %v622 = vunpack.c.l.b16 %v267
      %v623 = vunpack.c.l.b16 %v268
      %v624 = vunpack.c.h.b16 %v268
      %v625 = vunpack.c.l.b16 %v269
      %v626 = vunpack.c.l.b16 %v270
      %v627 = vunpack.c.h.b16 %v270
      %v628 = vunpack.c.l.b16 %v271
      %v629 = vunpack.c.l.b16 %v272
      %v630 = vunpack.c.h.b16 %v272
      %v631 = vunpack.c.l.b16 %v273
      %v632 = vunpack.c.l.b16 %v274
      %v633 = vunpack.c.h.b16 %v274
      %v634 = vunpack.c.l.b16 %v275
      %v635 = vunpack.c.l.b16 %v276
      %v636 = vunpack.c.h.b16 %v276
      %v637 = vunpack.c.l.b16 %v277
      %v638 = vunpack.c.l.b16 %v278
      %v639 = vunpack.c.h.b16 %v278
      %v640 = vunpack.c.l.b16 %v279
      %v641 = vunpack.c.l.b16 %v280
      %v642 = vunpack.c.h.b16 %v280
      %v643 = vunpack.c.l.b16 %v281
      %v644 = vunpack.c.l.b16 %v282
      %v645 = vunpack.c.h.b16 %v282
      %v646 = vunpack.c.l.b16 %v283
      %v647 = vunpack.c.l.b16 %v284
      %v648 = vunpack.c.h.b16 %v284
      %v649 = vunpack.c.l.b16 %v285
      %v650 = vunpack.c.l.b16 %v286
      %v651 = vunpack.c.h.b16 %v286
      %v652 = vunpack.c.l.b16 %v287
      %v653 = vunpack.c.l.b16 %v288
      %v654 = vunpack.c.h.b16 %v288
      %v655 = vunpack.c.l.b16 %v289
      %v656 = vunpack.c.l.b16 %v290
      %v657 = vunpack.c.h.b16 %v290
      %v658 = vunpack.c.l.b16 %v291
      %v659 = vunpack.c.l.b16 %v292
      %v660 = vunpack.c.h.b16 %v292
      %v661 = vunpack.c.l.b16 %v293
      %v662 = vunpack.c.l.b16 %v294
      %v663 = vunpack.c.h.b16 %v294
      %v664 = vunpack.c.l.b16 %v295
      %v665 = vunpack.c.l.b16 %v296
      %v666 = vunpack.c.h.b16 %v296
      %v667 = vunpack.c.l.b16 %v297
      %v668 = vpack.c.b16 %v482, %v479
      %v669 = vpack.c.b16 %v483, %v480
      %v670 = vpack.c.b16 %v484, %v481
      %v671 = vpack.c.b16 %v488, %v485
      %v672 = vpack.c.b16 %v489, %v486
      %v673 = vpack.c.b16 %v490, %v487
      %v674 = vpack.c.b16 %v494, %v491
      %v675 = vpack.c.b16 %v495, %v492
      %v676 = vpack.c.b16 %v496, %v493
      %v677 = vpack.c.b16 %v500, %v497
      %v678 = vpack.c.b16 %v501, %v498
      %v679 = vpack.c.b16 %v502, %v499
      %v680 = vpack.c.b16 %v506, %v503
      %v681 = vpack.c.b16 %v507, %v504
      %v682 = vpack.c.b16 %v508, %v505
      %v683 = vpack.c.b16 %v512, %v509
      %v684 = vpack.c.b16 %v513, %v510
      %v685 = vpack.c.b16 %v514, %v511
      %v686 = vpack.c.b16 %v518, %v515
      %v687 = vpack.c.b16 %v519, %v516
      %v688 = vpack.c.b16 %v520, %v517
      %v689 = vpack.c.b16 %v524, %v521
      %v690 = vpack.c.b16 %v525, %v522
      %v691 = vpack.c.b16 %v526, %v523
      %v692 = vpack.c.b16 %v530, %v527
      %v693 = vpack.c.b16 %v531, %v528
      %v694 = vpack.c.b16 %v532, %v529
      %v695 = vpack.c.b16 %v536, %v533
      %v696 = vpack.c.b16 %v537, %v534
      %v697 = vpack.c.b16 %v538, %v535
      %v698 = vpack.c.b16 %v542, %v539
      %v699 = vpack.c.b16 %v543, %v540
      %v700 = vpack.c.b16 %v544, %v541
      %v701 = vpack.c.b16 %v548, %v545
      %v702 = vpack.c.b16 %v549, %v546
      %v703 = vpack.c.b16 %v550, %v547
      %v704 = vpack.c.b16 %v554, %v551
      %v705 = vpack.c.b16 %v555, %v552
      %v706 = vpack.c.b16 %v556, %v553
      %v707 = vpack.c.b16 %v560, %v557
      %v708 = vpack.c.b16 %v561, %v558
      %v709 = vpack.c.b16 %v562, %v559
      %v710 = vpack.c.b16 %v566, %v563
      %v711 = vpack.c.b16 %v567, %v564
      %v712 = vpack.c.b16 %v568, %v565
      %v713 = vpack.c.b16 %v572, %v569
      %v714 = vpack.c.b16 %v573, %v570
      %v715 = vpack.c.b16 %v574, %v571
      %v716 = vpack.c.b16 %v578, %v575
      %v717 = vpack.c.b16 %v579, %v576
      %v718 = vpack.c.b16 %v580, %v577
      %v719 = vpack.c.b16 %v584, %v581
      %v720 = vpack.c.b16 %v585, %v582
      %v721 = vpack.c.b16 %v586, %v583
      %v722 = vpack.c.b16 %v590, %v587
      %v723 = vpack.c.b16 %v591, %v588
      %v724 = vpack.c.b16 %v592, %v589
      %v725 = vpack.c.b16 %v596, %v593
      %v726 = vpack.c.b16 %v597, %v594
      %v727 = vpack.c.b16 %v598, %v595
      %v728 = vpack.c.b16 %v602, %v599
      %v729 = vpack.c.b16 %v603, %v600
      %v730 = vpack.c.b16 %v604, %v601
      %v731 = vpack.c.b16 %v608, %v605
      %v732 = vpack.c.b16 %v609, %v606
      %v733 = vpack.c.b16 %v610, %v607
      %v734 = vpack.c.b16 %v614, %v611
      %v735 = vpack.c.b16 %v615, %v612
      %v736 = vpack.c.b16 %v616, %v613
      %v737 = vpack.c.b16 %v620, %v617
      %v738 = vpack.c.b16 %v621, %v618
      %v739 = vpack.c.b16 %v622, %v619
      %v740 = vpack.c.b16 %v626, %v623
      %v741 = vpack.c.b16 %v627, %v624
      %v742 = vpack.c.b16 %v628, %v625
      %v743 = vpack.c.b16 %v632, %v629
      %v744 = vpack.c.b16 %v633, %v630
      %v745 = vpack.c.b16 %v634, %v631
      %v746 = vpack.c.b16 %v638, %v635
      %v747 = vpack.c.b16 %v639, %v636
      %v748 = vpack.c.b16 %v640, %v637
      %v749 = vpack.c.b16 %v644, %v641
      %v750 = vpack.c.b16 %v645, %v642
      %v751 = vpack.c.b16 %v646, %v643
      %v752 = vpack.c.b16 %v650, %v647
      %v753 = vpack.c.b16 %v651, %v648
      %v754 = vpack.c.b16 %v652, %v649
      %v755 = vpack.c.b16 %v656, %v653
      %v756 = vpack.c.b16 %v657, %v654
      %v757 = vpack.c.b16 %v658, %v655
      %v758 = vpack.c.b16 %v662, %v659
      %v759 = vpack.c.b16 %v663, %v660
      %v760 = vpack.c.b16 %v664, %v661
      %v761 = vpack.c.b16 %v665, %v665
      %v762 = vpack.c.b16 %v666, %v666
      %v763 = vpack.c.b16 %v667, %v667
      %v908 = vunpack.c.l.b16 %v298
      %v909 = vunpack.c.l.b16 %v299
      %v910 = vunpack.c.l.b16 %v300
      %v911 = vunpack.c.l.b16 %v301
      %v912 = vunpack.c.l.b16 %v302
      %v913 = vunpack.c.l.b16 %v303
      %v914 = vunpack.c.l.b16 %v304
      %v915 = vunpack.c.l.b16 %v305
      %v916 = vunpack.c.l.b16 %v306
      %v917 = vunpack.c.l.b16 %v307
      %v918 = vunpack.c.l.b16 %v308
      %v919 = vunpack.c.l.b16 %v309
      %v920 = vunpack.c.l.b16 %v310
      %v921 = vunpack.c.l.b16 %v311
      %v922 = vunpack.c.l.b16 %v312
      %v923 = vunpack.c.l.b16 %v313
      %v924 = vunpack.c.l.b16 %v314
      %v925 = vunpack.c.l.b16 %v315
      %v926 = vunpack.c.l.b16 %v316
      %v927 = vunpack.c.l.b16 %v317
      %v928 = vunpack.c.l.b16 %v318
      %v929 = vunpack.c.l.b16 %v319
      %v930 = vunpack.c.l.b16 %v320
      %v931 = vunpack.c.l.b16 %v321
      %v932 = vunpack.c.l.b16 %v322
      %v933 = vunpack.c.l.b16 %v323
      %v934 = vunpack.c.l.b16 %v324
      %v935 = vunpack.c.l.b16 %v325
      %v936 = vunpack.c.l.b16 %v326
      %v937 = vunpack.c.l.b16 %v327
      %v938 = vunpack.c.l.b16 %v328
      %v939 = vunpack.c.l.b16 %v329
      %v940 = vunpack.c.l.b16 %v330
      %v941 = vunpack.c.l.b16 %v331
      %v942 = vunpack.c.l.b16 %v332
      %v943 = vunpack.c.l.b16 %v333
      %v944 = vunpack.c.l.b16 %v334
      %v945 = vunpack.c.l.b16 %v335
      %v946 = vunpack.c.l.b16 %v336
      %v947 = vunpack.c.l.b16 %v337
      %v948 = vunpack.c.l.b16 %v338
      %v949 = vunpack.c.l.b16 %v339
      %v950 = vunpack.c.l.b16 %v340
      %v951 = vunpack.c.l.b16 %v341
      %v952 = vunpack.c.l.b16 %v342
      %v953 = vunpack.c.l.b16 %v343
      %v954 = vunpack.c.l.b16 %v344
      %v955 = vunpack.c.l.b16 %v345
      %v956 = vpack.c.b16 %v909, %v908
      %v957 = vpack.c.b16 %v911, %v910
      %v958 = vpack.c.b16 %v913, %v912
      %v959 = vpack.c.b16 %v915, %v914
      %v960 = vpack.c.b16 %v917, %v916
      %v961 = vpack.c.b16 %v919, %v918
      %v962 = vpack.c.b16 %v921, %v920
      %v963 = vpack.c.b16 %v923, %v922
      %v964 = vpack.c.b16 %v925, %v924
      %v965 = vpack.c.b16 %v927, %v926
      %v966 = vpack.c.b16 %v929, %v928
      %v967 = vpack.c.b16 %v931, %v930
      %v968 = vpack.c.b16 %v933, %v932
      %v969 = vpack.c.b16 %v935, %v934
      %v970 = vpack.c.b16 %v937, %v936
      %v971 = vpack.c.b16 %v939, %v938
      %v972 = vpack.c.b16 %v941, %v940
      %v973 = vpack.c.b16 %v943, %v942
      %v974 = vpack.c.b16 %v945, %v944
      %v975 = vpack.c.b16 %v947, %v946
      %v976 = vpack.c.b16 %v949, %v948
      %v977 = vpack.c.b16 %v951, %v950
      %v978 = vpack.c.b16 %v953, %v952
      %v979 = vpack.c.b16 %v955, %v954
      %1004 = vmatprep.subr.bf16.mxu0 0
      %1005 = vmatpush1.bf16.msra.mxu0 %v956
      %1006 = vmatprep.subr.bf16.mxu0 0
      %1007 = vmatpush1.bf16.msra.mxu0 %v957
      %1008 = vmatprep.subr.bf16.mxu0 0
      %1009 = vmatpush1.bf16.msra.mxu0 %v958
      %1010 = vmatprep.subr.bf16.mxu0 0
      %1011 = vmatpush1.bf16.msra.mxu0 %v959
      %1012 = vmatprep.subr.bf16.mxu0 0
      %1013 = vmatpush1.bf16.msra.mxu0 %v960
      %1014 = vmatprep.subr.bf16.mxu0 0
      %1015 = vmatpush1.bf16.msra.mxu0 %v961
      %1016 = vmatprep.subr.bf16.mxu0 0
      %1017 = vmatpush1.bf16.msra.mxu0 %v962
      %1018 = vmatprep.subr.bf16.mxu0 0
      %1019 = vmatpush1.bf16.msra.mxu0 %v963
      %1020 = vmatprep.subr.bf16.mxu0 0
      %1021 = vmatpush1.bf16.msra.mxu0 %v964
      %1022 = vmatprep.subr.bf16.mxu0 0
      %1023 = vmatpush1.bf16.msra.mxu0 %v965
      %1024 = vmatprep.subr.bf16.mxu0 0
      %1025 = vmatpush1.bf16.msra.mxu0 %v966
      %1026 = vmatprep.subr.bf16.mxu0 0
      %1027 = vmatpush1.bf16.msra.mxu0 %v967
      %1028 = vmatprep.subr.bf16.mxu0 0
      %1029 = vmatpush1.bf16.msra.mxu0 %v968
      %1030 = vmatprep.subr.bf16.mxu0 0
      %1031 = vmatpush1.bf16.msra.mxu0 %v969
      %1032 = vmatprep.subr.bf16.mxu0 0
      %1033 = vmatpush1.bf16.msra.mxu0 %v970
      %1034 = vmatprep.subr.bf16.mxu0 0
      %1035 = vmatpush1.bf16.msra.mxu0 %v971
      %1036 = vmatprep.mubr.bf16.mxu0 %v669
      %1037 = vmatmul.mubr.bf16.gmra.mrb[0].mxu0 %v668
      %v1038 = vpop.f32.mrb[0].mxu0
      %v1039 = vadd.f32 %v351, %v1038
      %v1040 = vpop.f32.mrb[0].mxu0
      %v1041 = vpop.f32.mrb[0].mxu0
      %v1042 = vadd.f32 %v351, %v1041
      %v1043 = vpop.f32.mrb[0].mxu0
      %1044 = vmatprep.mubr.bf16.mxu0 %v672
      %1045 = vmatmul.mubr.bf16.gmra.mrb[0].mxu0 %v671
      %v1046 = vpop.f32.mrb[0].mxu0
      %v1047 = vadd.f32 %v351, %v1046
      %v1048 = vpop.f32.mrb[0].mxu0
      %v1049 = vpop.f32.mrb[0].mxu0
      %v1050 = vadd.f32 %v351, %v1049
      %v1051 = vpop.f32.mrb[0].mxu0
      %1052 = vmatprep.mubr.bf16.mxu0 %v675
      %1053 = vmatmul.mubr.bf16.gmra.mrb[0].mxu0 %v674
      %v1054 = vpop.f32.mrb[0].mxu0
      %v1055 = vadd.f32 %v351, %v1054
      %v1056 = vpop.f32.mrb[0].mxu0
      %v1057 = vpop.f32.mrb[0].mxu0
      %v1058 = vadd.f32 %v351, %v1057
      %v1059 = vpop.f32.mrb[0].mxu0
      %1060 = vmatprep.mubr.bf16.mxu0 %v678
      %1061 = vmatmul.mubr.bf16.gmra.mrb[0].mxu0 %v677
      %v1062 = vpop.f32.mrb[0].mxu0
      %v1063 = vadd.f32 %v351, %v1062
      %v1064 = vpop.f32.mrb[0].mxu0
      %v1065 = vpop.f32.mrb[0].mxu0
      %v1066 = vadd.f32 %v351, %v1065
      %v1067 = vpop.f32.mrb[0].mxu0
      %1068 = vmatprep.mubr.bf16.mxu0 %v681
      %1069 = vmatmul.mubr.bf16.gmra.mrb[0].mxu0 %v680
      %v1070 = vpop.f32.mrb[0].mxu0
      %v1071 = vadd.f32 %v351, %v1070
      %v1072 = vpop.f32.mrb[0].mxu0
      %v1073 = vpop.f32.mrb[0].mxu0
      %v1074 = vadd.f32 %v351, %v1073
      %v1075 = vpop.f32.mrb[0].mxu0
      %1076 = vmatprep.mubr.bf16.mxu0 %v684
      %1077 = vmatmul.mubr.bf16.gmra.mrb[0].mxu0 %v683
      %v1078 = vpop.f32.mrb[0].mxu0
      %v1079 = vadd.f32 %v351, %v1078
      %v1080 = vpop.f32.mrb[0].mxu0
      %v1081 = vpop.f32.mrb[0].mxu0
      %v1082 = vadd.f32 %v351, %v1081
      %v1083 = vpop.f32.mrb[0].mxu0
      %1084 = vmatprep.mubr.bf16.mxu0 %v687
      %1085 = vmatmul.mubr.bf16.gmra.mrb[0].mxu0 %v686
      %v1086 = vpop.f32.mrb[0].mxu0
      %v1087 = vadd.f32 %v351, %v1086
      %v1088 = vpop.f32.mrb[0].mxu0
      %v1089 = vpop.f32.mrb[0].mxu0
      %v1090 = vadd.f32 %v351, %v1089
      %v1091 = vpop.f32.mrb[0].mxu0
      %1092 = vmatprep.mubr.bf16.mxu0 %v690
      %1093 = vmatmul.mubr.bf16.gmra.mrb[0].mxu0 %v689
      %v1094 = vpop.f32.mrb[0].mxu0
      %v1095 = vadd.f32 %v351, %v1094
      %v1096 = vpop.f32.mrb[0].mxu0
      %v1097 = vpop.f32.mrb[0].mxu0
      %v1098 = vadd.f32 %v351, %v1097
      %v1099 = vpop.f32.mrb[0].mxu0
      %1100 = vmatprep.mubr.bf16.mxu0 %v693
      %1101 = vmatmul.mubr.bf16.gmra.mrb[0].mxu0 %v692
      %v1102 = vpop.f32.mrb[0].mxu0
      %v1103 = vadd.f32 %v351, %v1102
      %v1104 = vpop.f32.mrb[0].mxu0
      %v1105 = vpop.f32.mrb[0].mxu0
      %v1106 = vadd.f32 %v351, %v1105
      %v1107 = vpop.f32.mrb[0].mxu0
      %1108 = vmatprep.mubr.bf16.mxu0 %v696
      %1109 = vmatmul.mubr.bf16.gmra.mrb[0].mxu0 %v695
      %v1110 = vpop.f32.mrb[0].mxu0
      %v1111 = vadd.f32 %v351, %v1110
      %v1112 = vpop.f32.mrb[0].mxu0
      %v1113 = vpop.f32.mrb[0].mxu0
      %v1114 = vadd.f32 %v351, %v1113
      %v1115 = vpop.f32.mrb[0].mxu0
      %1116 = vmatprep.mubr.bf16.mxu0 %v699
      %1117 = vmatmul.mubr.bf16.gmra.mrb[0].mxu0 %v698
      %v1118 = vpop.f32.mrb[0].mxu0
      %v1119 = vadd.f32 %v351, %v1118
      %v1120 = vpop.f32.mrb[0].mxu0
      %v1121 = vpop.f32.mrb[0].mxu0
      %v1122 = vadd.f32 %v351, %v1121
      %v1123 = vpop.f32.mrb[0].mxu0
      %1124 = vmatprep.mubr.bf16.mxu0 %v702
      %1125 = vmatmul.mubr.bf16.gmra.mrb[0].mxu0 %v701
      %v1126 = vpop.f32.mrb[0].mxu0
      %v1127 = vadd.f32 %v351, %v1126
      %v1128 = vpop.f32.mrb[0].mxu0
      %v1129 = vpop.f32.mrb[0].mxu0
      %v1130 = vadd.f32 %v351, %v1129
      %v1131 = vpop.f32.mrb[0].mxu0
      %1132 = vmatprep.mubr.bf16.mxu0 %v705
      %1133 = vmatmul.mubr.bf16.gmra.mrb[0].mxu0 %v704
      %v1134 = vpop.f32.mrb[0].mxu0
      %v1135 = vadd.f32 %v351, %v1134
      %v1136 = vpop.f32.mrb[0].mxu0
      %v1137 = vpop.f32.mrb[0].mxu0
      %v1138 = vadd.f32 %v351, %v1137
      %v1139 = vpop.f32.mrb[0].mxu0
      %1140 = vmatprep.mubr.bf16.mxu0 %v708
      %1141 = vmatmul.mubr.bf16.gmra.mrb[0].mxu0 %v707
      %v1142 = vpop.f32.mrb[0].mxu0
      %v1143 = vadd.f32 %v351, %v1142
      %v1144 = vpop.f32.mrb[0].mxu0
      %v1145 = vpop.f32.mrb[0].mxu0
      %v1146 = vadd.f32 %v351, %v1145
      %v1147 = vpop.f32.mrb[0].mxu0
      %1148 = vmatprep.mubr.bf16.mxu0 %v711
      %1149 = vmatmul.mubr.bf16.gmra.mrb[0].mxu0 %v710
      %v1150 = vpop.f32.mrb[0].mxu0
      %v1151 = vadd.f32 %v351, %v1150
      %v1152 = vpop.f32.mrb[0].mxu0
      %v1153 = vpop.f32.mrb[0].mxu0
      %v1154 = vadd.f32 %v351, %v1153
      %v1155 = vpop.f32.mrb[0].mxu0
      %1156 = vmatprep.mubr.bf16.mxu0 %v714
      %1157 = vmatmul.mubr.bf16.gmra.mrb[0].mxu0 %v713
      %v1158 = vpop.f32.mrb[0].mxu0
      %v1159 = vadd.f32 %v351, %v1158
      %v1160 = vpop.f32.mrb[0].mxu0
      %v1161 = vpop.f32.mrb[0].mxu0
      %v1162 = vadd.f32 %v351, %v1161
      %v1163 = vpop.f32.mrb[0].mxu0
      %1164 = vmatprep.mubr.bf16.mxu0 %v717
      %1165 = vmatmul.mubr.bf16.gmra.mrb[0].mxu0 %v716
      %v1166 = vpop.f32.mrb[0].mxu0
      %v1167 = vadd.f32 %v351, %v1166
      %v1168 = vpop.f32.mrb[0].mxu0
      %v1169 = vpop.f32.mrb[0].mxu0
      %v1170 = vadd.f32 %v351, %v1169
      %v1171 = vpop.f32.mrb[0].mxu0
      %1172 = vmatprep.mubr.bf16.mxu0 %v720
      %1173 = vmatmul.mubr.bf16.gmra.mrb[0].mxu0 %v719
      %v1174 = vpop.f32.mrb[0].mxu0
      %v1175 = vadd.f32 %v351, %v1174
      %v1176 = vpop.f32.mrb[0].mxu0
      %v1177 = vpop.f32.mrb[0].mxu0
      %v1178 = vadd.f32 %v351, %v1177
      %v1179 = vpop.f32.mrb[0].mxu0
      %1180 = vmatprep.mubr.bf16.mxu0 %v723
      %1181 = vmatmul.mubr.bf16.gmra.mrb[0].mxu0 %v722
      %v1182 = vpop.f32.mrb[0].mxu0
      %v1183 = vadd.f32 %v351, %v1182
      %v1184 = vpop.f32.mrb[0].mxu0
      %v1185 = vpop.f32.mrb[0].mxu0
      %v1186 = vadd.f32 %v351, %v1185
      %v1187 = vpop.f32.mrb[0].mxu0
      %1188 = vmatprep.mubr.bf16.mxu0 %v726
      %1189 = vmatmul.mubr.bf16.gmra.mrb[0].mxu0 %v725
      %v1190 = vpop.f32.mrb[0].mxu0
      %v1191 = vadd.f32 %v351, %v1190
      %v1192 = vpop.f32.mrb[0].mxu0
      %v1193 = vpop.f32.mrb[0].mxu0
      %v1194 = vadd.f32 %v351, %v1193
      %v1195 = vpop.f32.mrb[0].mxu0
      %1196 = vmatprep.mubr.bf16.mxu0 %v729
      %1197 = vmatmul.mubr.bf16.gmra.mrb[0].mxu0 %v728
      %v1198 = vpop.f32.mrb[0].mxu0
      %v1199 = vadd.f32 %v351, %v1198
      %v1200 = vpop.f32.mrb[0].mxu0
      %v1201 = vpop.f32.mrb[0].mxu0
      %v1202 = vadd.f32 %v351, %v1201
      %v1203 = vpop.f32.mrb[0].mxu0
      %1204 = vmatprep.mubr.bf16.mxu0 %v732
      %1205 = vmatmul.mubr.bf16.gmra.mrb[0].mxu0 %v731
      %v1206 = vpop.f32.mrb[0].mxu0
      %v1207 = vadd.f32 %v351, %v1206
      %v1208 = vpop.f32.mrb[0].mxu0
      %v1209 = vpop.f32.mrb[0].mxu0
      %v1210 = vadd.f32 %v351, %v1209
      %v1211 = vpop.f32.mrb[0].mxu0
      %1212 = vmatprep.mubr.bf16.mxu0 %v735
      %1213 = vmatmul.mubr.bf16.gmra.mrb[0].mxu0 %v734
      %v1214 = vpop.f32.mrb[0].mxu0
      %v1215 = vadd.f32 %v351, %v1214
      %v1216 = vpop.f32.mrb[0].mxu0
      %v1217 = vpop.f32.mrb[0].mxu0
      %v1218 = vadd.f32 %v351, %v1217
      %v1219 = vpop.f32.mrb[0].mxu0
      %1220 = vmatprep.mubr.bf16.mxu0 %v738
      %1221 = vmatmul.mubr.bf16.gmra.mrb[0].mxu0 %v737
      %v1222 = vpop.f32.mrb[0].mxu0
      %v1223 = vadd.f32 %v351, %v1222
      %v1224 = vpop.f32.mrb[0].mxu0
      %v1225 = vpop.f32.mrb[0].mxu0
      %v1226 = vadd.f32 %v351, %v1225
      %v1227 = vpop.f32.mrb[0].mxu0
      %1228 = vmatprep.mubr.bf16.mxu0 %v741
      %1229 = vmatmul.mubr.bf16.gmra.mrb[0].mxu0 %v740
      %v1230 = vpop.f32.mrb[0].mxu0
      %v1231 = vadd.f32 %v351, %v1230
      %v1232 = vpop.f32.mrb[0].mxu0
      %v1233 = vpop.f32.mrb[0].mxu0
      %v1234 = vadd.f32 %v351, %v1233
      %v1235 = vpop.f32.mrb[0].mxu0
      %1236 = vmatprep.mubr.bf16.mxu0 %v744
      %1237 = vmatmul.mubr.bf16.gmra.mrb[0].mxu0 %v743
      %v1238 = vpop.f32.mrb[0].mxu0
      %v1239 = vadd.f32 %v351, %v1238
      %v1240 = vpop.f32.mrb[0].mxu0
      %v1241 = vpop.f32.mrb[0].mxu0
      %v1242 = vadd.f32 %v351, %v1241
      %v1243 = vpop.f32.mrb[0].mxu0
      %1244 = vmatprep.mubr.bf16.mxu0 %v747
      %1245 = vmatmul.mubr.bf16.gmra.mrb[0].mxu0 %v746
      %v1246 = vpop.f32.mrb[0].mxu0
      %v1247 = vadd.f32 %v351, %v1246
      %v1248 = vpop.f32.mrb[0].mxu0
      %v1249 = vpop.f32.mrb[0].mxu0
      %v1250 = vadd.f32 %v351, %v1249
      %v1251 = vpop.f32.mrb[0].mxu0
      %1252 = vmatprep.mubr.bf16.mxu0 %v750
      %1253 = vmatmul.mubr.bf16.gmra.mrb[0].mxu0 %v749
      %v1254 = vpop.f32.mrb[0].mxu0
      %v1255 = vadd.f32 %v351, %v1254
      %v1256 = vpop.f32.mrb[0].mxu0
      %v1257 = vpop.f32.mrb[0].mxu0
      %v1258 = vadd.f32 %v351, %v1257
      %v1259 = vpop.f32.mrb[0].mxu0
      %1260 = vmatprep.mubr.bf16.mxu0 %v753
      %1261 = vmatmul.mubr.bf16.gmra.mrb[0].mxu0 %v752
      %v1262 = vpop.f32.mrb[0].mxu0
      %v1263 = vadd.f32 %v351, %v1262
      %v1264 = vpop.f32.mrb[0].mxu0
      %v1265 = vpop.f32.mrb[0].mxu0
      %v1266 = vadd.f32 %v351, %v1265
      %v1267 = vpop.f32.mrb[0].mxu0
      %1268 = vmatprep.mubr.bf16.mxu0 %v756
      %1269 = vmatmul.mubr.bf16.gmra.mrb[0].mxu0 %v755
      %v1270 = vpop.f32.mrb[0].mxu0
      %v1271 = vadd.f32 %v351, %v1270
      %v1272 = vpop.f32.mrb[0].mxu0
      %v1273 = vpop.f32.mrb[0].mxu0
      %v1274 = vadd.f32 %v351, %v1273
      %v1275 = vpop.f32.mrb[0].mxu0
      %1276 = vmatprep.mubr.bf16.mxu0 %v759
      %1277 = vmatmul.mubr.bf16.gmra.mrb[0].mxu0 %v758
      %v1278 = vpop.f32.mrb[0].mxu0
      %v1279 = vadd.f32 %v351, %v1278
      %v1280 = vpop.f32.mrb[0].mxu0
      %v1281 = vpop.f32.mrb[0].mxu0
      %v1282 = vadd.f32 %v351, %v1281
      %v1283 = vpop.f32.mrb[0].mxu0
      %1284 = vmatprep.mubr.bf16.mxu0 %v762
      %1285 = vmatmul.mubr.bf16.gmra.mrb[0].mxu0 %v761
      %v1286 = vpop.f32.mrb[0].mxu0
      %v1287 = vadd.f32 %v351, %v1286
      %v1288 = vpop.f32.mrb[0].mxu0
      %v1289 = vpop.f32.mrb[0].mxu0
      %v1290 = vpop.f32.mrb[0].mxu0
      %1291 = vdwg.mxu0
      %1292 = vmatprep.subr.bf16.mxu0 0
      %1293 = vmatpush1.bf16.msra.mxu0 %v972
      %1294 = vmatprep.subr.bf16.mxu0 0
      %1295 = vmatpush1.bf16.msra.mxu0 %v973
      %1296 = vmatprep.subr.bf16.mxu0 0
      %1297 = vmatpush1.bf16.msra.mxu0 %v974
      %1298 = vmatprep.subr.bf16.mxu0 0
      %1299 = vmatpush1.bf16.msra.mxu0 %v975
      %1300 = vmatprep.subr.bf16.mxu0 0
      %1301 = vmatpush1.bf16.msra.mxu0 %v976
      %1302 = vmatprep.subr.bf16.mxu0 0
      %1303 = vmatpush1.bf16.msra.mxu0 %v977
      %1304 = vmatprep.subr.bf16.mxu0 0
      %1305 = vmatpush1.bf16.msra.mxu0 %v978
      %1306 = vmatprep.subr.bf16.mxu0 0
      %1307 = vmatpush1.bf16.msra.mxu0 %v979
      %1308 = vmatprep.subr.bf16.mxu0 0
      %1309 = vmatpush1.bf16.msra.mxu0 0
      %1310 = vmatprep.subr.bf16.mxu0 0
      %1311 = vmatpush1.bf16.msra.mxu0 0
      %1312 = vmatprep.subr.bf16.mxu0 0
      %1313 = vmatpush1.bf16.msra.mxu0 0
      %1314 = vmatprep.subr.bf16.mxu0 0
      %1315 = vmatpush1.bf16.msra.mxu0 0
      %1316 = vmatprep.subr.bf16.mxu0 0
      %1317 = vmatpush1.bf16.msra.mxu0 0
      %1318 = vmatprep.subr.bf16.mxu0 0
      %1319 = vmatpush1.bf16.msra.mxu0 0
      %1320 = vmatprep.subr.bf16.mxu0 0
      %1321 = vmatpush1.bf16.msra.mxu0 0
      %1322 = vmatprep.subr.bf16.mxu0 0
      %1323 = vmatpush1.bf16.msra.mxu0 0
      %1324 = vmatprep.mubr.bf16.mxu0 0
      %1325 = vmatmul.mubr.bf16.gmra.mrb[0].mxu0 %v670
      %v1326 = vpop.f32.mrb[0].mxu0
      %v1327 = vadd.f32 %v1039, %v1326
      %v1328 = vpop.f32.mrb[0].mxu0
      %v1329 = vpop.f32.mrb[0].mxu0
      %v1330 = vadd.f32 %v1042, %v1329
      %v1331 = vpop.f32.mrb[0].mxu0
      %1332 = vmatprep.mubr.bf16.mxu0 0
      %1333 = vmatmul.mubr.bf16.gmra.mrb[0].mxu0 %v673
      %v1334 = vpop.f32.mrb[0].mxu0
      %v1335 = vadd.f32 %v1047, %v1334
      %v1336 = vpop.f32.mrb[0].mxu0
      %v1337 = vpop.f32.mrb[0].mxu0
      %v1338 = vadd.f32 %v1050, %v1337
      %v1339 = vpop.f32.mrb[0].mxu0
      %1340 = vmatprep.mubr.bf16.mxu0 0
      %1341 = vmatmul.mubr.bf16.gmra.mrb[0].mxu0 %v676
      %v1342 = vpop.f32.mrb[0].mxu0
      %v1343 = vadd.f32 %v1055, %v1342
      %v1344 = vpop.f32.mrb[0].mxu0
      %v1345 = vpop.f32.mrb[0].mxu0
      %v1346 = vadd.f32 %v1058, %v1345
      %v1347 = vpop.f32.mrb[0].mxu0
      %1348 = vmatprep.mubr.bf16.mxu0 0
      %1349 = vmatmul.mubr.bf16.gmra.mrb[0].mxu0 %v679
      %v1350 = vpop.f32.mrb[0].mxu0
      %v1351 = vadd.f32 %v1063, %v1350
      %v1352 = vpop.f32.mrb[0].mxu0
      %v1353 = vpop.f32.mrb[0].mxu0
      %v1354 = vadd.f32 %v1066, %v1353
      %v1355 = vpop.f32.mrb[0].mxu0
      %1356 = vmatprep.mubr.bf16.mxu0 0
      %1357 = vmatmul.mubr.bf16.gmra.mrb[0].mxu0 %v682
      %v1358 = vpop.f32.mrb[0].mxu0
      %v1359 = vadd.f32 %v1071, %v1358
      %v1360 = vpop.f32.mrb[0].mxu0
      %v1361 = vpop.f32.mrb[0].mxu0
      %v1362 = vadd.f32 %v1074, %v1361
      %v1363 = vpop.f32.mrb[0].mxu0
      %1364 = vmatprep.mubr.bf16.mxu0 0
      %1365 = vmatmul.mubr.bf16.gmra.mrb[0].mxu0 %v685
      %v1366 = vpop.f32.mrb[0].mxu0
      %v1367 = vadd.f32 %v1079, %v1366
      %v1368 = vpop.f32.mrb[0].mxu0
      %v1369 = vpop.f32.mrb[0].mxu0
      %v1370 = vadd.f32 %v1082, %v1369
      %v1371 = vpop.f32.mrb[0].mxu0
      %1372 = vmatprep.mubr.bf16.mxu0 0
      %1373 = vmatmul.mubr.bf16.gmra.mrb[0].mxu0 %v688
      %v1374 = vpop.f32.mrb[0].mxu0
      %v1375 = vadd.f32 %v1087, %v1374
      %v1376 = vpop.f32.mrb[0].mxu0
      %v1377 = vpop.f32.mrb[0].mxu0
      %v1378 = vadd.f32 %v1090, %v1377
      %v1379 = vpop.f32.mrb[0].mxu0
      %1380 = vmatprep.mubr.bf16.mxu0 0
      %1381 = vmatmul.mubr.bf16.gmra.mrb[0].mxu0 %v691
      %v1382 = vpop.f32.mrb[0].mxu0
      %v1383 = vadd.f32 %v1095, %v1382
      %v1384 = vpop.f32.mrb[0].mxu0
      %v1385 = vpop.f32.mrb[0].mxu0
      %v1386 = vadd.f32 %v1098, %v1385
      %v1387 = vpop.f32.mrb[0].mxu0
      %1388 = vmatprep.mubr.bf16.mxu0 0
      %1389 = vmatmul.mubr.bf16.gmra.mrb[0].mxu0 %v694
      %v1390 = vpop.f32.mrb[0].mxu0
      %v1391 = vadd.f32 %v1103, %v1390
      %v1392 = vpop.f32.mrb[0].mxu0
      %v1393 = vpop.f32.mrb[0].mxu0
      %v1394 = vadd.f32 %v1106, %v1393
      %v1395 = vpop.f32.mrb[0].mxu0
      %1396 = vmatprep.mubr.bf16.mxu0 0
      %1397 = vmatmul.mubr.bf16.gmra.mrb[0].mxu0 %v697
      %v1398 = vpop.f32.mrb[0].mxu0
      %v1399 = vadd.f32 %v1111, %v1398
      %v1400 = vpop.f32.mrb[0].mxu0
      %v1401 = vpop.f32.mrb[0].mxu0
      %v1402 = vadd.f32 %v1114, %v1401
      %v1403 = vpop.f32.mrb[0].mxu0
      %1404 = vmatprep.mubr.bf16.mxu0 0
      %1405 = vmatmul.mubr.bf16.gmra.mrb[0].mxu0 %v700
      %v1406 = vpop.f32.mrb[0].mxu0
      %v1407 = vadd.f32 %v1119, %v1406
      %v1408 = vpop.f32.mrb[0].mxu0
      %v1409 = vpop.f32.mrb[0].mxu0
      %v1410 = vadd.f32 %v1122, %v1409
      %v1411 = vpop.f32.mrb[0].mxu0
      %1412 = vmatprep.mubr.bf16.mxu0 0
      %1413 = vmatmul.mubr.bf16.gmra.mrb[0].mxu0 %v703
      %v1414 = vpop.f32.mrb[0].mxu0
      %v1415 = vadd.f32 %v1127, %v1414
      %v1416 = vpop.f32.mrb[0].mxu0
      %v1417 = vpop.f32.mrb[0].mxu0
      %v1418 = vadd.f32 %v1130, %v1417
      %v1419 = vpop.f32.mrb[0].mxu0
      %1420 = vmatprep.mubr.bf16.mxu0 0
      %1421 = vmatmul.mubr.bf16.gmra.mrb[0].mxu0 %v706
      %v1422 = vpop.f32.mrb[0].mxu0
      %v1423 = vadd.f32 %v1135, %v1422
      %v1424 = vpop.f32.mrb[0].mxu0
      %v1425 = vpop.f32.mrb[0].mxu0
      %v1426 = vadd.f32 %v1138, %v1425
      %v1427 = vpop.f32.mrb[0].mxu0
      %1428 = vmatprep.mubr.bf16.mxu0 0
      %1429 = vmatmul.mubr.bf16.gmra.mrb[0].mxu0 %v709
      %v1430 = vpop.f32.mrb[0].mxu0
      %v1431 = vadd.f32 %v1143, %v1430
      %v1432 = vpop.f32.mrb[0].mxu0
      %v1433 = vpop.f32.mrb[0].mxu0
      %v1434 = vadd.f32 %v1146, %v1433
      %v1435 = vpop.f32.mrb[0].mxu0
      %1436 = vmatprep.mubr.bf16.mxu0 0
      %1437 = vmatmul.mubr.bf16.gmra.mrb[0].mxu0 %v712
      %v1438 = vpop.f32.mrb[0].mxu0
      %v1439 = vadd.f32 %v1151, %v1438
      %v1440 = vpop.f32.mrb[0].mxu0
      %v1441 = vpop.f32.mrb[0].mxu0
      %v1442 = vadd.f32 %v1154, %v1441
      %v1443 = vpop.f32.mrb[0].mxu0
      %1444 = vmatprep.mubr.bf16.mxu0 0
      %1445 = vmatmul.mubr.bf16.gmra.mrb[0].mxu0 %v715
      %v1446 = vpop.f32.mrb[0].mxu0
      %v1447 = vadd.f32 %v1159, %v1446
      %v1448 = vpop.f32.mrb[0].mxu0
      %v1449 = vpop.f32.mrb[0].mxu0
      %v1450 = vadd.f32 %v1162, %v1449
      %v1451 = vpop.f32.mrb[0].mxu0
      %1452 = vmatprep.mubr.bf16.mxu0 0
      %1453 = vmatmul.mubr.bf16.gmra.mrb[0].mxu0 %v718
      %v1454 = vpop.f32.mrb[0].mxu0
      %v1455 = vadd.f32 %v1167, %v1454
      %v1456 = vpop.f32.mrb[0].mxu0
      %v1457 = vpop.f32.mrb[0].mxu0
      %v1458 = vadd.f32 %v1170, %v1457
      %v1459 = vpop.f32.mrb[0].mxu0
      %1460 = vmatprep.mubr.bf16.mxu0 0
      %1461 = vmatmul.mubr.bf16.gmra.mrb[0].mxu0 %v721
      %v1462 = vpop.f32.mrb[0].mxu0
      %v1463 = vadd.f32 %v1175, %v1462
      %v1464 = vpop.f32.mrb[0].mxu0
      %v1465 = vpop.f32.mrb[0].mxu0
      %v1466 = vadd.f32 %v1178, %v1465
      %v1467 = vpop.f32.mrb[0].mxu0
      %1468 = vmatprep.mubr.bf16.mxu0 0
      %1469 = vmatmul.mubr.bf16.gmra.mrb[0].mxu0 %v724
      %v1470 = vpop.f32.mrb[0].mxu0
      %v1471 = vadd.f32 %v1183, %v1470
      %v1472 = vpop.f32.mrb[0].mxu0
      %v1473 = vpop.f32.mrb[0].mxu0
      %v1474 = vadd.f32 %v1186, %v1473
      %v1475 = vpop.f32.mrb[0].mxu0
      %1476 = vmatprep.mubr.bf16.mxu0 0
      %1477 = vmatmul.mubr.bf16.gmra.mrb[0].mxu0 %v727
      %v1478 = vpop.f32.mrb[0].mxu0
      %v1479 = vadd.f32 %v1191, %v1478
      %v1480 = vpop.f32.mrb[0].mxu0
      %v1481 = vpop.f32.mrb[0].mxu0
      %v1482 = vadd.f32 %v1194, %v1481
      %v1483 = vpop.f32.mrb[0].mxu0
      %1484 = vmatprep.mubr.bf16.mxu0 0
      %1485 = vmatmul.mubr.bf16.gmra.mrb[0].mxu0 %v730
      %v1486 = vpop.f32.mrb[0].mxu0
      %v1487 = vadd.f32 %v1199, %v1486
      %v1488 = vpop.f32.mrb[0].mxu0
      %v1489 = vpop.f32.mrb[0].mxu0
      %v1490 = vadd.f32 %v1202, %v1489
      %v1491 = vpop.f32.mrb[0].mxu0
      %1492 = vmatprep.mubr.bf16.mxu0 0
      %1493 = vmatmul.mubr.bf16.gmra.mrb[0].mxu0 %v733
      %v1494 = vpop.f32.mrb[0].mxu0
      %v1495 = vadd.f32 %v1207, %v1494
      %v1496 = vpop.f32.mrb[0].mxu0
      %v1497 = vpop.f32.mrb[0].mxu0
      %v1498 = vadd.f32 %v1210, %v1497
      %v1499 = vpop.f32.mrb[0].mxu0
      %1500 = vmatprep.mubr.bf16.mxu0 0
      %1501 = vmatmul.mubr.bf16.gmra.mrb[0].mxu0 %v736
      %v1502 = vpop.f32.mrb[0].mxu0
      %v1503 = vadd.f32 %v1215, %v1502
      %v1504 = vpop.f32.mrb[0].mxu0
      %v1505 = vpop.f32.mrb[0].mxu0
      %v1506 = vadd.f32 %v1218, %v1505
      %v1507 = vpop.f32.mrb[0].mxu0
      %1508 = vmatprep.mubr.bf16.mxu0 0
      %1509 = vmatmul.mubr.bf16.gmra.mrb[0].mxu0 %v739
      %v1510 = vpop.f32.mrb[0].mxu0
      %v1511 = vadd.f32 %v1223, %v1510
      %v1512 = vpop.f32.mrb[0].mxu0
      %v1513 = vpop.f32.mrb[0].mxu0
      %v1514 = vadd.f32 %v1226, %v1513
      %v1515 = vpop.f32.mrb[0].mxu0
      %1516 = vmatprep.mubr.bf16.mxu0 0
      %1517 = vmatmul.mubr.bf16.gmra.mrb[0].mxu0 %v742
      %v1518 = vpop.f32.mrb[0].mxu0
      %v1519 = vadd.f32 %v1231, %v1518
      %v1520 = vpop.f32.mrb[0].mxu0
      %v1521 = vpop.f32.mrb[0].mxu0
      %v1522 = vadd.f32 %v1234, %v1521
      %v1523 = vpop.f32.mrb[0].mxu0
      %1524 = vmatprep.mubr.bf16.mxu0 0
      %1525 = vmatmul.mubr.bf16.gmra.mrb[0].mxu0 %v745
      %v1526 = vpop.f32.mrb[0].mxu0
      %v1527 = vadd.f32 %v1239, %v1526
      %v1528 = vpop.f32.mrb[0].mxu0
      %v1529 = vpop.f32.mrb[0].mxu0
      %v1530 = vadd.f32 %v1242, %v1529
      %v1531 = vpop.f32.mrb[0].mxu0
      %1532 = vmatprep.mubr.bf16.mxu0 0
      %1533 = vmatmul.mubr.bf16.gmra.mrb[0].mxu0 %v748
      %v1534 = vpop.f32.mrb[0].mxu0
      %v1535 = vadd.f32 %v1247, %v1534
      %v1536 = vpop.f32.mrb[0].mxu0
      %v1537 = vpop.f32.mrb[0].mxu0
      %v1538 = vadd.f32 %v1250, %v1537
      %v1539 = vpop.f32.mrb[0].mxu0
      %1540 = vmatprep.mubr.bf16.mxu0 0
      %1541 = vmatmul.mubr.bf16.gmra.mrb[0].mxu0 %v751
      %v1542 = vpop.f32.mrb[0].mxu0
      %v1543 = vadd.f32 %v1255, %v1542
      %v1544 = vpop.f32.mrb[0].mxu0
      %v1545 = vpop.f32.mrb[0].mxu0
      %v1546 = vadd.f32 %v1258, %v1545
      %v1547 = vpop.f32.mrb[0].mxu0
      %1548 = vmatprep.mubr.bf16.mxu0 0
      %1549 = vmatmul.mubr.bf16.gmra.mrb[0].mxu0 %v754
      %v1550 = vpop.f32.mrb[0].mxu0
      %v1551 = vadd.f32 %v1263, %v1550
      %v1552 = vpop.f32.mrb[0].mxu0
      %v1553 = vpop.f32.mrb[0].mxu0
      %v1554 = vadd.f32 %v1266, %v1553
      %v1555 = vpop.f32.mrb[0].mxu0
      %1556 = vmatprep.mubr.bf16.mxu0 0
      %1557 = vmatmul.mubr.bf16.gmra.mrb[0].mxu0 %v757
      %v1558 = vpop.f32.mrb[0].mxu0
      %v1559 = vadd.f32 %v1271, %v1558
      %v1560 = vpop.f32.mrb[0].mxu0
      %v1561 = vpop.f32.mrb[0].mxu0
      %v1562 = vadd.f32 %v1274, %v1561
      %v1563 = vpop.f32.mrb[0].mxu0
      %1564 = vmatprep.mubr.bf16.mxu0 0
      %1565 = vmatmul.mubr.bf16.gmra.mrb[0].mxu0 %v760
      %v1566 = vpop.f32.mrb[0].mxu0
      %v1567 = vadd.f32 %v1279, %v1566
      %v1568 = vpop.f32.mrb[0].mxu0
      %v1569 = vpop.f32.mrb[0].mxu0
      %v1570 = vadd.f32 %v1282, %v1569
      %v1571 = vpop.f32.mrb[0].mxu0
      %1572 = vmatprep.mubr.bf16.mxu0 0
      %1573 = vmatmul.mubr.bf16.gmra.mrb[0].mxu0 %v763
      %v1574 = vpop.f32.mrb[0].mxu0
      %v1575 = vadd.f32 %v1287, %v1574
      %v1576 = vpop.f32.mrb[0].mxu0
      %v1577 = vpop.f32.mrb[0].mxu0
      %v1578 = vpop.f32.mrb[0].mxu0
      %1579 = vdwg.mxu0
      %v1580 = vmax.f32 %v1327, 0.0
      %v1581 = vmax.f32 %v1330, 0.0
      %v1582 = vmax.f32 %v1335, 0.0
      %v1583 = vmax.f32 %v1338, 0.0
      %v1584 = vmax.f32 %v1343, 0.0
      %v1585 = vmax.f32 %v1346, 0.0
      %v1586 = vmax.f32 %v1351, 0.0
      %v1587 = vmax.f32 %v1354, 0.0
      %v1588 = vmax.f32 %v1359, 0.0
      %v1589 = vmax.f32 %v1362, 0.0
      %v1590 = vmax.f32 %v1367, 0.0
      %v1591 = vmax.f32 %v1370, 0.0
      %v1592 = vmax.f32 %v1375, 0.0
      %v1593 = vmax.f32 %v1378, 0.0
      %v1594 = vmax.f32 %v1383, 0.0
      %v1595 = vmax.f32 %v1386, 0.0
      %v1596 = vmax.f32 %v1391, 0.0
      %v1597 = vmax.f32 %v1394, 0.0
      %v1598 = vmax.f32 %v1399, 0.0
      %v1599 = vmax.f32 %v1402, 0.0
      %v1600 = vmax.f32 %v1407, 0.0
      %v1601 = vmax.f32 %v1410, 0.0
      %v1602 = vmax.f32 %v1415, 0.0
      %v1603 = vmax.f32 %v1418, 0.0
      %v1604 = vmax.f32 %v1423, 0.0
      %v1605 = vmax.f32 %v1426, 0.0
      %v1606 = vmax.f32 %v1431, 0.0
      %v1607 = vmax.f32 %v1434, 0.0
      %v1608 = vmax.f32 %v1439, 0.0
      %v1609 = vmax.f32 %v1442, 0.0
      %v1610 = vmax.f32 %v1447, 0.0
      %v1611 = vmax.f32 %v1450, 0.0
      %v1612 = vmax.f32 %v1455, 0.0
      %v1613 = vmax.f32 %v1458, 0.0
      %v1614 = vmax.f32 %v1463, 0.0
      %v1615 = vmax.f32 %v1466, 0.0
      %v1616 = vmax.f32 %v1471, 0.0
      %v1617 = vmax.f32 %v1474, 0.0
      %v1618 = vmax.f32 %v1479, 0.0
      %v1619 = vmax.f32 %v1482, 0.0
      %v1620 = vmax.f32 %v1487, 0.0
      %v1621 = vmax.f32 %v1490, 0.0
      %v1622 = vmax.f32 %v1495, 0.0
      %v1623 = vmax.f32 %v1498, 0.0
      %v1624 = vmax.f32 %v1503, 0.0
      %v1625 = vmax.f32 %v1506, 0.0
      %v1626 = vmax.f32 %v1511, 0.0
      %v1627 = vmax.f32 %v1514, 0.0
      %v1628 = vmax.f32 %v1519, 0.0
      %v1629 = vmax.f32 %v1522, 0.0
      %v1630 = vmax.f32 %v1527, 0.0
      %v1631 = vmax.f32 %v1530, 0.0
      %v1632 = vmax.f32 %v1535, 0.0
      %v1633 = vmax.f32 %v1538, 0.0
      %v1634 = vmax.f32 %v1543, 0.0
      %v1635 = vmax.f32 %v1546, 0.0
      %v1636 = vmax.f32 %v1551, 0.0
      %v1637 = vmax.f32 %v1554, 0.0
      %v1638 = vmax.f32 %v1559, 0.0
      %v1639 = vmax.f32 %v1562, 0.0
      %v1640 = vmax.f32 %v1567, 0.0
      %v1641 = vmax.f32 %v1570, 0.0
      %v1642 = vmax.f32 %v1575, 0.0
      %v1643 = vmax.f32 %v1580, %v1587
      %v1644 = vmax.f32 %v1581, %v1588
      %v1645 = vmax.f32 %v1582, %v1589
      %v1646 = vmax.f32 %v1583, %v1590
      %v1647 = vmax.f32 %v1584, %v1591
      %v1648 = vmax.f32 %v1585, %v1592
      %v1649 = vmax.f32 %v1586, %v1593
      %v1650 = vmax.f32 %v1643, %v1594
      %v1651 = vmax.f32 %v1644, %v1595
      %v1652 = vmax.f32 %v1645, %v1596
      %v1653 = vmax.f32 %v1646, %v1597
      %v1654 = vmax.f32 %v1647, %v1598
      %v1655 = vmax.f32 %v1648, %v1599
      %v1656 = vmax.f32 %v1649, %v1600
      %v1657 = vmax.f32 %v1650, %v1601
      %v1658 = vmax.f32 %v1651, %v1602
      %v1659 = vmax.f32 %v1652, %v1603
      %v1660 = vmax.f32 %v1653, %v1604
      %v1661 = vmax.f32 %v1654, %v1605
      %v1662 = vmax.f32 %v1655, %v1606
      %v1663 = vmax.f32 %v1656, %v1607
      %v1664 = vmax.f32 %v1657, %v1608
      %v1665 = vmax.f32 %v1658, %v1609
      %v1666 = vmax.f32 %v1659, %v1610
      %v1667 = vmax.f32 %v1660, %v1611
      %v1668 = vmax.f32 %v1661, %v1612
      %v1669 = vmax.f32 %v1662, %v1613
      %v1670 = vmax.f32 %v1663, %v1614
      %v1671 = vmax.f32 %v1664, %v1615
      %v1672 = vmax.f32 %v1665, %v1616
      %v1673 = vmax.f32 %v1666, %v1617
      %v1674 = vmax.f32 %v1667, %v1618
      %v1675 = vmax.f32 %v1668, %v1619
      %v1676 = vmax.f32 %v1669, %v1620
      %v1677 = vmax.f32 %v1670, %v1621
      %v1678 = vmax.f32 %v1671, %v1622
      %v1679 = vmax.f32 %v1672, %v1623
      %v1680 = vmax.f32 %v1673, %v1624
      %v1681 = vmax.f32 %v1674, %v1625
      %v1682 = vmax.f32 %v1675, %v1626
      %v1683 = vmax.f32 %v1676, %v1627
      %v1684 = vmax.f32 %v1677, %v1628
      %v1685 = vmax.f32 %v1678, %v1629
      %v1686 = vmax.f32 %v1679, %v1630
      %v1687 = vmax.f32 %v1680, %v1631
      %v1688 = vmax.f32 %v1681, %v1632
      %v1689 = vmax.f32 %v1682, %v1633
      %v1690 = vmax.f32 %v1683, %v1634
      %v1691 = vmax.f32 %v1684, %v1635
      %v1692 = vmax.f32 %v1685, %v1636
      %v1693 = vmax.f32 %v1686, %v1637
      %v1694 = vmax.f32 %v1687, %v1638
      %v1695 = vmax.f32 %v1688, %v1639
      %v1696 = vmax.f32 %v1689, %v1640
      %v1697 = vmax.f32 %v1690, %v1641
      %v1698 = vmax.f32 %v1691, %v1642
      %1699 = vst [vmem:[%s170] sm:$0xff] %v1692
      %1700 = vst [vmem:[%s170 + $0x8] sm:$0xff] %v1693
      %1701 = vst [vmem:[%s170 + $0x10] sm:$0xff] %v1694
      %1702 = vst [vmem:[%s170 + $0x18] sm:$0xff] %v1695
      %1703 = vst [vmem:[%s170 + $0x20] sm:$0xff] %v1696
      %1704 = vst [vmem:[%s170 + $0x28] sm:$0xff] %v1697
      %1705 = vst [vmem:[%s170 + $0x30] sm:$0xff] %v1698
      %p1706 = scmp.lt.s32.totalorder %s14, 1
      %s1707 = scalar_select %p1706, %s14, 1
      %s1708 = smul.addr %s1707, 7
      %s1709 = smul.addr %s1708, 8
      %s1710 = scalar_lea.vmem %s3, %s1709
      // Predicated region
      $region33: #{headnet_forward.2} parent=31 // pred_check
        %p1711 = pneg %p100
      $region34: #{headnet_forward.2} parent=31 // pred_check_branch
        %1713 = sbr.rel (%p1711) target = $region36
      $region35: #{headnet_forward.2} parent=31 // pred_region
        _
      $region36: #{headnet_forward.2} parent=31 // pred_fallthru
        _
    $region32: #{headnet_forward.2} parent=5 // pred_fallthru
      _
    %p1714 = scmp.le.s32.totalorder 2, %s9
    // Predicated region
    $region37: #{headnet_forward.2} parent=5 // pred_check
      %p1715 = pneg %p1714
    $region38: #{headnet_forward.2} parent=5 // pred_check_branch
      %1717 = sbr.rel (%p1715) target = $region40
    $region39: #{headnet_forward.2} parent=5 // pred_region
      %s1718 = ssub.s32 %s9, 2
      // Predicated region
      $region41: #{headnet_forward.2} parent=39 // pred_check
        %p1719 = pneg %p106
      $region42: #{headnet_forward.2} parent=39 // pred_check_branch
        %1721 = sbr.rel (%p1719) target = $region44
      $region43: #{headnet_forward.2} parent=39 // pred_region
        %p1722 = scmp.lt.s32.totalorder %s15, 1
        %s1723 = scalar_select %p1722, %s15, 1
        %s1724 = smul.addr %s1723, 7
        %s1725 = smul.addr %s1724, 8
        %s1726 = scalar_lea.vmem %s3, %s1725
      $region44: #{headnet_forward.2} parent=39 // pred_fallthru
        _
    $region40: #{headnet_forward.2} parent=5 // pred_fallthru
      _
  $region6: #{headnet_forward.2} parent=0 // loop_footer
    %s13 = sadd.s32 1, %s9
  $region7: #{headnet_forward.2} parent=0 // loop_footer_branch
    %8 = sbr.rel target = $region3
  $region8: #{headnet_forward.2} parent=0 // loop_exit
    _

// kernel: headnet_forward.3
$region0: #{headnet_forward.3}
  #allocation0 [shape = 'u32[]', space=smem, size = 0x4, offset = 0x4, fixed_abs, tag = 'smem constant byte address 0x4 - core index']
  #allocation1 [shape = 'u32[144,128]{1,0:T(1,128)}', space=vmem, size = 0x12000, scoped, tag = 'internal scratch']
  %s0 = inlined_call_operand.vmem [shape: bf16[2,56,1664], index: 0, kind: input, shape index: {}]
  %s1 = inlined_call_operand.vmem [shape: bf16[1664,256], index: 1, kind: input, shape index: {}]
  %s2 = inlined_call_operand.vmem [shape: f32[1,256], index: 2, kind: input, shape index: {}]
  %s3 = inlined_call_operand.vmem [shape: f32[2,56,256], index: 3, kind: output, shape index: {}]
  %s4 = sld [smem:[#allocation0]]
  $region45: #{headnet_forward.3} parent=0
    _
  %s6 = ssub.s32 1, %s4
  %s7 = scalar_select 0, %s6, %s4
  loop: start=0, step=1, limit=4
  $region2: #{headnet_forward.3} parent=0 // loop_pre_header
    _
  $region3: #{headnet_forward.3} parent=0 // loop_header
    %s9 = sphi 0, %s13
    %p10 = scmp.ge.s32.totalorder %s9, 4
    %s19 = sphi 0, %s21
    %s22 = sphi 0, %s19
    %s23 = sphi 0, %s22
    %s39 = sphi 0, %s23
    %s43 = sphi 0, %s43
    %s45 = sphi 0, %s43
    %s46 = sphi 0, %s45
    %s60 = sphi 0, %s46
    %s64 = sphi 0, %s64
    %s66 = sphi 0, %s64
    %s67 = sphi 0, %s66
    %s81 = sphi 0, %s67
    %s87 = sphi 0, %s89
    %s90 = sphi 0, %s87
    %s91 = sphi 0, %s90
    %s107 = sphi 0, %s91
  $region4: #{headnet_forward.3} parent=0 // loop_header_branch
    %12 = sbr.rel (%p10) target = $region8
  $region5: #{headnet_forward.3} parent=0 // loop_body
    %s14 = ssub.s32 %s9, 1
    %s15 = ssub.s32 %s9, 2
    %s16 = sadd.s32 %s9, 1
    %s17 = ssub.s32 %s9, %s16
    %p18 = scmp.eq.s32.totalorder %s17, 0
    %s20 = sadd.s32 %s19, 1
    %s21 = scalar_select %p18, %s19, %s20
    %p24 = pneg %p18
    %p25 = scmp.eq.s32.totalorder %s9, 1
    %p26 = por %p24, %p25
    %p27 = scmp.ne.s32.totalorder %s19, %s22
    %p28 = scmp.eq.s32.totalorder %s9, 0
    %p29 = por %p27, %p28
    %p30 = scmp.ne.s32.totalorder %s19, %s22
    %p31 = scmp.eq.s32.totalorder %s14, 1
    %p32 = por %p30, %p31
    %p33 = scmp.ne.s32.totalorder %s22, %s23
    %p34 = scmp.eq.s32.totalorder %s14, 0
    %p35 = por %p33, %p34
    %p36 = scmp.ne.s32.totalorder %s22, %s23
    %p37 = scmp.eq.s32.totalorder %s15, 1
    %p38 = por %p36, %p37
    %p40 = scmp.ne.s32.totalorder %s23, %s39
    %p41 = scmp.eq.s32.totalorder %s15, 0
    %p42 = por %p40, %p41
    %s44 = sadd.s32 %s43, 1
    %p47 = scmp.eq.s32.totalorder %s9, 1
    %p48 = scmp.ne.s32.totalorder %s43, %s45
    %p49 = scmp.eq.s32.totalorder %s9, 0
    %p50 = por %p48, %p49
    %p51 = scmp.ne.s32.totalorder %s43, %s45
    %p52 = scmp.eq.s32.totalorder %s14, 1
    %p53 = por %p51, %p52
    %p54 = scmp.ne.s32.totalorder %s45, %s46
    %p55 = scmp.eq.s32.totalorder %s14, 0
    %p56 = por %p54, %p55
    %p57 = scmp.ne.s32.totalorder %s45, %s46
    %p58 = scmp.eq.s32.totalorder %s15, 1
    %p59 = por %p57, %p58
    %p61 = scmp.ne.s32.totalorder %s46, %s60
    %p62 = scmp.eq.s32.totalorder %s15, 0
    %p63 = por %p61, %p62
    %s65 = sadd.s32 %s64, 1
    %p68 = scmp.eq.s32.totalorder %s9, 1
    %p69 = scmp.ne.s32.totalorder %s64, %s66
    %p70 = scmp.eq.s32.totalorder %s9, 0
    %p71 = por %p69, %p70
    %p72 = scmp.ne.s32.totalorder %s64, %s66
    %p73 = scmp.eq.s32.totalorder %s14, 1
    %p74 = por %p72, %p73
    %p75 = scmp.ne.s32.totalorder %s66, %s67
    %p76 = scmp.eq.s32.totalorder %s14, 0
    %p77 = por %p75, %p76
    %p78 = scmp.ne.s32.totalorder %s66, %s67
    %p79 = scmp.eq.s32.totalorder %s15, 1
    %p80 = por %p78, %p79
    %p82 = scmp.ne.s32.totalorder %s67, %s81
    %p83 = scmp.eq.s32.totalorder %s15, 0
    %p84 = por %p82, %p83
    %s85 = ssub.s32 %s9, %s16
    %p86 = scmp.eq.s32.totalorder %s85, 0
    %s88 = sadd.s32 %s87, 1
    %s89 = scalar_select %p86, %s87, %s88
    %p92 = pneg %p86
    %p93 = scmp.eq.s32.totalorder %s9, 1
    %p94 = por %p92, %p93
    %p95 = scmp.ne.s32.totalorder %s87, %s90
    %p96 = scmp.eq.s32.totalorder %s9, 0
    %p97 = por %p95, %p96
    %p98 = scmp.ne.s32.totalorder %s87, %s90
    %p99 = scmp.eq.s32.totalorder %s14, 1
    %p100 = por %p98, %p99
    %p101 = scmp.ne.s32.totalorder %s90, %s91
    %p102 = scmp.eq.s32.totalorder %s14, 0
    %p103 = por %p101, %p102
    %p104 = scmp.ne.s32.totalorder %s90, %s91
    %p105 = scmp.eq.s32.totalorder %s15, 1
    %p106 = por %p104, %p105
    %p108 = scmp.ne.s32.totalorder %s91, %s107
    %p109 = scmp.eq.s32.totalorder %s15, 0
    %p110 = por %p108, %p109
    %p111 = scmp.le.s32.totalorder 1, %s9
    %p112 = scmp.lt.s32.totalorder %s9, 3
    %p113 = pnand %p111, %p112
    %p114 = pneg %p113
    // Predicated region
    $region9: #{headnet_forward.3} parent=5 // pred_check
      _
    $region10: #{headnet_forward.3} parent=5 // pred_check_branch
      %116 = sbr.rel (%p113) target = $region12
    $region11: #{headnet_forward.3} parent=5 // pred_region
      %s117 = ssub.s32 %s9, 1
      // Predicated region
      $region13: #{headnet_forward.3} parent=11 // pred_check
        %p118 = pneg %p56
      $region14: #{headnet_forward.3} parent=11 // pred_check_branch
        %120 = sbr.rel (%p118) target = $region16
      $region15: #{headnet_forward.3} parent=11 // pred_region
        _
      $region16: #{headnet_forward.3} parent=11 // pred_fallthru
        _
      // Predicated region
      $region17: #{headnet_forward.3} parent=11 // pred_check
        %p121 = pneg %p77
      $region18: #{headnet_forward.3} parent=11 // pred_check_branch
        %123 = sbr.rel (%p121) target = $region20
      $region19: #{headnet_forward.3} parent=11 // pred_region
        _
      $region20: #{headnet_forward.3} parent=11 // pred_fallthru
        _
    $region12: #{headnet_forward.3} parent=5 // pred_fallthru
      _
    %p124 = scmp.lt.s32.totalorder %s9, 2
    // Predicated region
    $region21: #{headnet_forward.3} parent=5 // pred_check
      %p125 = pneg %p124
    $region22: #{headnet_forward.3} parent=5 // pred_check_branch
      %127 = sbr.rel (%p125) target = $region24
    $region23: #{headnet_forward.3} parent=5 // pred_region
      // Predicated region
      $region25: #{headnet_forward.3} parent=23 // pred_check
        %p128 = pneg %p29
      $region26: #{headnet_forward.3} parent=23 // pred_check_branch
        %130 = sbr.rel (%p128) target = $region28
      $region27: #{headnet_forward.3} parent=23 // pred_region
        %p131 = scmp.lt.s32.totalorder %s9, 1
        %s132 = scalar_select %p131, %s9, 1
        %s133 = smul.addr %s132, 91
        %s134 = smul.addr %s133, 4
        %s135 = scalar_lea.vmem %s0, %s134
      $region28: #{headnet_forward.3} parent=23 // pred_fallthru
        _
    $region24: #{headnet_forward.3} parent=5 // pred_fallthru
      _
    %p136 = scmp.le.s32.totalorder 1, %s9
    %p137 = scmp.lt.s32.totalorder %s9, 3
    %p138 = pnand %p136, %p137
    %p139 = pneg %p138
    // Predicated region
    $region29: #{headnet_forward.3} parent=5 // pred_check
      _
    $region30: #{headnet_forward.3} parent=5 // pred_check_branch
      %141 = sbr.rel (%p138) target = $region32
    $region31: #{headnet_forward.3} parent=5 // pred_region
      %s142 = ssub.s32 %s9, 1
      %p143 = scmp.lt.s32.totalorder %s14, 1
      %s144 = scalar_select %p143, %s14, 1
      %s145 = smul.addr %s144, 91
      %s146 = smul.addr %s145, 4
      %s147 = scalar_lea.vmem %s0, %s146
      %p148 = pneg %p35
      %p149 = pneg %p32
      %p150 = pneg %p56
      %p151 = pneg %p53
      %p152 = pneg %p77
      %p153 = pneg %p74
      %p154 = pneg %p103
      %p155 = pneg %p100
      %p156 = scmp.lt.s32.totalorder %s14, 1
      %s157 = scalar_select %p156, %s14, 1
      %s158 = smul.addr %s157, 14
      %s159 = smul.addr %s158, 8
      %s160 = scalar_lea.vmem %s3, %s159
      %p161 = scmp.lt.s32.totalorder %s14, 1
      %s162 = scalar_select %p161, %s14, 1
      %s163 = smul.addr %s162, 91
      %s164 = smul.addr %s163, 4
      %s165 = scalar_lea.vmem %s0, %s164
      %p166 = scmp.lt.s32.totalorder %s14, 1
      %s167 = scalar_select %p166, %s14, 1
      %s168 = smul.addr %s167, 14
      %s169 = smul.addr %s168, 8
      %s170 = scalar_lea.vmem %s3, %s169
      %v172 = vld [vmem:[%s165] sm:$0xff]
      %v173 = vld [vmem:[%s165 + $0x8] sm:$0xff]
      %v174 = vld [vmem:[%s165 + $0x10] sm:$0xff]
      %v175 = vld [vmem:[%s165 + $0x18] sm:$0xff]
      %v176 = vld [vmem:[%s165 + $0x20] sm:$0xff]
      %v177 = vld [vmem:[%s165 + $0x28] sm:$0xff]
      %v178 = vld [vmem:[%s165 + $0x30] sm:$0xf]
      %v179 = vld [vmem:[%s165 + $0x34] sm:$0xff]
      %v180 = vld [vmem:[%s165 + $0x3c] sm:$0xff]
      %v181 = vld [vmem:[%s165 + $0x44] sm:$0xff]
      %v182 = vld [vmem:[%s165 + $0x4c] sm:$0xff]
      %v183 = vld [vmem:[%s165 + $0x54] sm:$0xff]
      %v184 = vld [vmem:[%s165 + $0x5c] sm:$0xff]
      %v185 = vld [vmem:[%s165 + $0x64] sm:$0xf]
      %v186 = vld [vmem:[%s165 + $0x68] sm:$0xff]
      %v187 = vld [vmem:[%s165 + $0x70] sm:$0xff]
      %v188 = vld [vmem:[%s165 + $0x78] sm:$0xff]
      %v189 = vld [vmem:[%s165 + $0x80] sm:$0xff]
      %v190 = vld [vmem:[%s165 + $0x88] sm:$0xff]
      %v191 = vld [vmem:[%s165 + $0x90] sm:$0xff]
      %v192 = vld [vmem:[%s165 + $0x98] sm:$0xf]
      %v193 = vld [vmem:[%s165 + $0x9c] sm:$0xff]
      %v194 = vld [vmem:[%s165 + $0xa4] sm:$0xff]
      %v195 = vld [vmem:[%s165 + $0xac] sm:$0xff]
      %v196 = vld [vmem:[%s165 + $0xb4] sm:$0xff]
      %v197 = vld [vmem:[%s165 + $0xbc] sm:$0xff]
      %v198 = vld [vmem:[%s165 + $0xc4] sm:$0xff]
      %v199 = vld [vmem:[%s165 + $0xcc] sm:$0xf]
      %v200 = vld [vmem:[%s165 + $0xd0] sm:$0xff]
      %v201 = vld [vmem:[%s165 + $0xd8] sm:$0xff]
      %v202 = vld [vmem:[%s165 + $0xe0] sm:$0xff]
      %v203 = vld [vmem:[%s165 + $0xe8] sm:$0xff]
      %v204 = vld [vmem:[%s165 + $0xf0] sm:$0xff]
      %v205 = vld [vmem:[%s165 + $0xf8] sm:$0xff]
      %v206 = vld [vmem:[%s165 + $0x100] sm:$0xf]
      %v207 = vld [vmem:[%s165 + $0x104] sm:$0xff]
      %v208 = vld [vmem:[%s165 + $0x10c] sm:$0xff]
      %v209 = vld [vmem:[%s165 + $0x114] sm:$0xff]
      %v210 = vld [vmem:[%s165 + $0x11c] sm:$0xff]
      %v211 = vld [vmem:[%s165 + $0x124] sm:$0xff]
      %v212 = vld [vmem:[%s165 + $0x12c] sm:$0xff]
      %v213 = vld [vmem:[%s165 + $0x134] sm:$0xf]
      %v214 = vld [vmem:[%s165 + $0x138] sm:$0xff]
      %v215 = vld [vmem:[%s165 + $0x140] sm:$0xff]
      %v216 = vld [vmem:[%s165 + $0x148] sm:$0xff]
      %v217 = vld [vmem:[%s165 + $0x150] sm:$0xff]
      %v218 = vld [vmem:[%s165 + $0x158] sm:$0xff]
      %v219 = vld [vmem:[%s165 + $0x160] sm:$0xff]
      %v220 = vld [vmem:[%s165 + $0x168] sm:$0xf]
      %v221 = vld [vmem:[%s1] sm:$0xff]
      %v222 = vld [vmem:[%s1 + $0x8] sm:$0xff]
      %v223 = vld [vmem:[%s1 + $0x10] sm:$0xff]
      %v224 = vld [vmem:[%s1 + $0x18] sm:$0xff]
      %v225 = vld [vmem:[%s1 + $0x20] sm:$0xff]
      %v226 = vld [vmem:[%s1 + $0x28] sm:$0xff]
      %v227 = vld [vmem:[%s1 + $0x30] sm:$0xff]
      %v228 = vld [vmem:[%s1 + $0x38] sm:$0xff]
      %v229 = vld [vmem:[%s1 + $0x40] sm:$0xff]
      %v230 = vld [vmem:[%s1 + $0x48] sm:$0xff]
      %v231 = vld [vmem:[%s1 + $0x50] sm:$0xff]
      %v232 = vld [vmem:[%s1 + $0x58] sm:$0xff]
      %v233 = vld [vmem:[%s1 + $0x60] sm:$0xff]
      %v234 = vld [vmem:[%s1 + $0x68] sm:$0xff]
      %v235 = vld [vmem:[%s1 + $0x70] sm:$0xff]
      %v236 = vld [vmem:[%s1 + $0x78] sm:$0xff]
      %v237 = vld [vmem:[%s1 + $0x80] sm:$0xff]
      %v238 = vld [vmem:[%s1 + $0x88] sm:$0xff]
      %v239 = vld [vmem:[%s1 + $0x90] sm:$0xff]
      %v240 = vld [vmem:[%s1 + $0x98] sm:$0xff]
      %v241 = vld [vmem:[%s1 + $0xa0] sm:$0xff]
      %v242 = vld [vmem:[%s1 + $0xa8] sm:$0xff]
      %v243 = vld [vmem:[%s1 + $0xb0] sm:$0xff]
      %v244 = vld [vmem:[%s1 + $0xb8] sm:$0xff]
      %v245 = vld [vmem:[%s1 + $0xc0] sm:$0xff]
      %v246 = vld [vmem:[%s1 + $0xc8] sm:$0xff]
      %v247 = vld [vmem:[%s1 + $0xd0] sm:$0xff]
      %v248 = vld [vmem:[%s1 + $0xd8] sm:$0xff]
      %v249 = vld [vmem:[%s1 + $0xe0] sm:$0xff]
      %v250 = vld [vmem:[%s1 + $0xe8] sm:$0xff]
      %v251 = vld [vmem:[%s1 + $0xf0] sm:$0xff]
      %v252 = vld [vmem:[%s1 + $0xf8] sm:$0xff]
      %v253 = vld [vmem:[%s1 + $0x100] sm:$0xff]
      %v254 = vld [vmem:[%s1 + $0x108] sm:$0xff]
      %v255 = vld [vmem:[%s1 + $0x110] sm:$0xff]
      %v256 = vld [vmem:[%s1 + $0x118] sm:$0xff]
      %v257 = vld [vmem:[%s1 + $0x120] sm:$0xff]
      %v258 = vld [vmem:[%s1 + $0x128] sm:$0xff]
      %v259 = vld [vmem:[%s1 + $0x130] sm:$0xff]
      %v260 = vld [vmem:[%s1 + $0x138] sm:$0xff]
      %v261 = vld [vmem:[%s1 + $0x140] sm:$0xff]
      %v262 = vld [vmem:[%s1 + $0x148] sm:$0xff]
      %v263 = vld [vmem:[%s1 + $0x150] sm:$0xff]
      %v264 = vld [vmem:[%s1 + $0x158] sm:$0xff]
      %v265 = vld [vmem:[%s1 + $0x160] sm:$0xff]
      %v266 = vld [vmem:[%s1 + $0x168] sm:$0xff]
      %v267 = vld [vmem:[%s1 + $0x170] sm:$0xff]
      %v268 = vld [vmem:[%s1 + $0x178] sm:$0xff]
      %v269 = vld [vmem:[%s1 + $0x180] sm:$0xff]
      %v270 = vld [vmem:[%s1 + $0x188] sm:$0xff]
      %v271 = vld [vmem:[%s1 + $0x190] sm:$0xff]
      %v272 = vld [vmem:[%s1 + $0x198] sm:$0xff]
      %v273 = vld [vmem:[%s1 + $0x1a0] sm:$0xff]
      %v274 = vld [vmem:[%s1 + $0x1a8] sm:$0xff]
      %v275 = vld [vmem:[%s1 + $0x1b0] sm:$0xff]
      %v276 = vld [vmem:[%s1 + $0x1b8] sm:$0xff]
      %v277 = vld [vmem:[%s1 + $0x1c0] sm:$0xff]
      %v278 = vld [vmem:[%s1 + $0x1c8] sm:$0xff]
      %v279 = vld [vmem:[%s1 + $0x1d0] sm:$0xff]
      %v280 = vld [vmem:[%s1 + $0x1d8] sm:$0xff]
      %v281 = vld [vmem:[%s1 + $0x1e0] sm:$0xff]
      %v282 = vld [vmem:[%s1 + $0x1e8] sm:$0xff]
      %v283 = vld [vmem:[%s1 + $0x1f0] sm:$0xff]
      %v284 = vld [vmem:[%s1 + $0x1f8] sm:$0xff]
      %v285 = vld [vmem:[%s1 + $0x200] sm:$0xff]
      %v286 = vld [vmem:[%s1 + $0x208] sm:$0xff]
      %v287 = vld [vmem:[%s1 + $0x210] sm:$0xff]
      %v288 = vld [vmem:[%s1 + $0x218] sm:$0xff]
      %v289 = vld [vmem:[%s1 + $0x220] sm:$0xff]
      %v290 = vld [vmem:[%s1 + $0x228] sm:$0xff]
      %v291 = vld [vmem:[%s1 + $0x230] sm:$0xff]
      %v292 = vld [vmem:[%s1 + $0x238] sm:$0xff]
      %v293 = vld [vmem:[%s1 + $0x240] sm:$0xff]
      %v294 = vld [vmem:[%s1 + $0x248] sm:$0xff]
      %v295 = vld [vmem:[%s1 + $0x250] sm:$0xff]
      %v296 = vld [vmem:[%s1 + $0x258] sm:$0xff]
      %v297 = vld [vmem:[%s1 + $0x260] sm:$0xff]
      %v298 = vld [vmem:[%s1 + $0x268] sm:$0xff]
      %v299 = vld [vmem:[%s1 + $0x270] sm:$0xff]
      %v300 = vld [vmem:[%s1 + $0x278] sm:$0xff]
      %v301 = vld [vmem:[%s1 + $0x280] sm:$0xff]
      %v302 = vld [vmem:[%s1 + $0x288] sm:$0xff]
      %v303 = vld [vmem:[%s1 + $0x290] sm:$0xff]
      %v304 = vld [vmem:[%s1 + $0x298] sm:$0xff]
      %v305 = vld [vmem:[%s1 + $0x2a0] sm:$0xff]
      %v306 = vld [vmem:[%s1 + $0x2a8] sm:$0xff]
      %v307 = vld [vmem:[%s1 + $0x2b0] sm:$0xff]
      %v308 = vld [vmem:[%s1 + $0x2b8] sm:$0xff]
      %v309 = vld [vmem:[%s1 + $0x2c0] sm:$0xff]
      %v310 = vld [vmem:[%s1 + $0x2c8] sm:$0xff]
      %v311 = vld [vmem:[%s1 + $0x2d0] sm:$0xff]
      %v312 = vld [vmem:[%s1 + $0x2d8] sm:$0xff]
      %v313 = vld [vmem:[%s1 + $0x2e0] sm:$0xff]
      %v314 = vld [vmem:[%s1 + $0x2e8] sm:$0xff]
      %v315 = vld [vmem:[%s1 + $0x2f0] sm:$0xff]
      %v316 = vld [vmem:[%s1 + $0x2f8] sm:$0xff]
      %v317 = vld [vmem:[%s1 + $0x300] sm:$0xff]
      %v318 = vld [vmem:[%s1 + $0x308] sm:$0xff]
      %v319 = vld [vmem:[%s1 + $0x310] sm:$0xff]
      %v320 = vld [vmem:[%s1 + $0x318] sm:$0xff]
      %v321 = vld [vmem:[%s1 + $0x320] sm:$0xff]
      %v322 = vld [vmem:[%s1 + $0x328] sm:$0xff]
      %v323 = vld [vmem:[%s1 + $0x330] sm:$0xff]
      %v324 = vld [vmem:[%s1 + $0x338] sm:$0xff]
      %v325 = vld [vmem:[%s1 + $0x340] sm:$0xff]
      %v326 = vld [vmem:[%s1 + $0x348] sm:$0xff]
      %v327 = vld [vmem:[%s1 + $0x350] sm:$0xff]
      %v328 = vld [vmem:[%s1 + $0x358] sm:$0xff]
      %v329 = vld [vmem:[%s1 + $0x360] sm:$0xff]
      %v330 = vld [vmem:[%s1 + $0x368] sm:$0xff]
      %v331 = vld [vmem:[%s1 + $0x370] sm:$0xff]
      %v332 = vld [vmem:[%s1 + $0x378] sm:$0xff]
      %v333 = vld [vmem:[%s1 + $0x380] sm:$0xff]
      %v334 = vld [vmem:[%s1 + $0x388] sm:$0xff]
      %v335 = vld [vmem:[%s1 + $0x390] sm:$0xff]
      %v336 = vld [vmem:[%s1 + $0x398] sm:$0xff]
      %v337 = vld [vmem:[%s1 + $0x3a0] sm:$0xff]
      %v338 = vld [vmem:[%s1 + $0x3a8] sm:$0xff]
      %v339 = vld [vmem:[%s1 + $0x3b0] sm:$0xff]
      %v340 = vld [vmem:[%s1 + $0x3b8] sm:$0xff]
      %v341 = vld [vmem:[%s1 + $0x3c0] sm:$0xff]
      %v342 = vld [vmem:[%s1 + $0x3c8] sm:$0xff]
      %v343 = vld [vmem:[%s1 + $0x3d0] sm:$0xff]
      %v344 = vld [vmem:[%s1 + $0x3d8] sm:$0xff]
      %v345 = vld [vmem:[%s1 + $0x3e0] sm:$0xff]
      %v346 = vld [vmem:[%s1 + $0x3e8] sm:$0xff]
      %v347 = vld [vmem:[%s1 + $0x3f0] sm:$0xff]
      %v348 = vld [vmem:[%s1 + $0x3f8] sm:$0xff]
      %v349 = vld [vmem:[%s1 + $0x400] sm:$0xff]
      %v350 = vld [vmem:[%s1 + $0x408] sm:$0xff]
      %v351 = vld [vmem:[%s1 + $0x410] sm:$0xff]
      %v352 = vld [vmem:[%s1 + $0x418] sm:$0xff]
      %v353 = vld [vmem:[%s1 + $0x420] sm:$0xff]
      %v354 = vld [vmem:[%s1 + $0x428] sm:$0xff]
      %v355 = vld [vmem:[%s1 + $0x430] sm:$0xff]
      %v356 = vld [vmem:[%s1 + $0x438] sm:$0xff]
      %v357 = vld [vmem:[%s1 + $0x440] sm:$0xff]
      %v358 = vld [vmem:[%s1 + $0x448] sm:$0xff]
      %v359 = vld [vmem:[%s1 + $0x450] sm:$0xff]
      %v360 = vld [vmem:[%s1 + $0x458] sm:$0xff]
      %v361 = vld [vmem:[%s1 + $0x460] sm:$0xff]
      %v362 = vld [vmem:[%s1 + $0x468] sm:$0xff]
      %v363 = vld [vmem:[%s1 + $0x470] sm:$0xff]
      %v364 = vld [vmem:[%s1 + $0x478] sm:$0xff]
      %v365 = vld [vmem:[%s1 + $0x480] sm:$0xff]
      %v366 = vld [vmem:[%s1 + $0x488] sm:$0xff]
      %v367 = vld [vmem:[%s1 + $0x490] sm:$0xff]
      %v368 = vld [vmem:[%s1 + $0x498] sm:$0xff]
      %v369 = vld [vmem:[%s1 + $0x4a0] sm:$0xff]
      %v370 = vld [vmem:[%s1 + $0x4a8] sm:$0xff]
      %v371 = vld [vmem:[%s1 + $0x4b0] sm:$0xff]
      %v372 = vld [vmem:[%s1 + $0x4b8] sm:$0xff]
      %v373 = vld [vmem:[%s1 + $0x4c0] sm:$0xff]
      %v374 = vld [vmem:[%s1 + $0x4c8] sm:$0xff]
      %v375 = vld [vmem:[%s1 + $0x4d0] sm:$0xff]
      %v376 = vld [vmem:[%s1 + $0x4d8] sm:$0xff]
      %v377 = vld [vmem:[%s1 + $0x4e0] sm:$0xff]
      %v378 = vld [vmem:[%s1 + $0x4e8] sm:$0xff]
      %v379 = vld [vmem:[%s1 + $0x4f0] sm:$0xff]
      %v380 = vld [vmem:[%s1 + $0x4f8] sm:$0xff]
      %v381 = vld [vmem:[%s1 + $0x500] sm:$0xff]
      %v382 = vld [vmem:[%s1 + $0x508] sm:$0xff]
      %v383 = vld [vmem:[%s1 + $0x510] sm:$0xff]
      %v384 = vld [vmem:[%s1 + $0x518] sm:$0xff]
      %v385 = vld [vmem:[%s1 + $0x520] sm:$0xff]
      %v386 = vld [vmem:[%s1 + $0x528] sm:$0xff]
      %v387 = vld [vmem:[%s1 + $0x530] sm:$0xff]
      %v388 = vld [vmem:[%s1 + $0x538] sm:$0xff]
      %v389 = vld [vmem:[%s1 + $0x540] sm:$0xff]
      %v390 = vld [vmem:[%s1 + $0x548] sm:$0xff]
      %v391 = vld [vmem:[%s1 + $0x550] sm:$0xff]
      %v392 = vld [vmem:[%s1 + $0x558] sm:$0xff]
      %v393 = vld [vmem:[%s1 + $0x560] sm:$0xff]
      %v394 = vld [vmem:[%s1 + $0x568] sm:$0xff]
      %v395 = vld [vmem:[%s1 + $0x570] sm:$0xff]
      %v396 = vld [vmem:[%s1 + $0x578] sm:$0xff]
      %v397 = vld [vmem:[%s1 + $0x580] sm:$0xff]
      %v398 = vld [vmem:[%s1 + $0x588] sm:$0xff]
      %v399 = vld [vmem:[%s1 + $0x590] sm:$0xff]
      %v400 = vld [vmem:[%s1 + $0x598] sm:$0xff]
      %v401 = vld [vmem:[%s1 + $0x5a0] sm:$0xff]
      %v402 = vld [vmem:[%s1 + $0x5a8] sm:$0xff]
      %v403 = vld [vmem:[%s1 + $0x5b0] sm:$0xff]
      %v404 = vld [vmem:[%s1 + $0x5b8] sm:$0xff]
      %v405 = vld [vmem:[%s1 + $0x5c0] sm:$0xff]
      %v406 = vld [vmem:[%s1 + $0x5c8] sm:$0xff]
      %v407 = vld [vmem:[%s1 + $0x5d0] sm:$0xff]
      %v408 = vld [vmem:[%s1 + $0x5d8] sm:$0xff]
      %v409 = vld [vmem:[%s1 + $0x5e0] sm:$0xff]
      %v410 = vld [vmem:[%s1 + $0x5e8] sm:$0xff]
      %v411 = vld [vmem:[%s1 + $0x5f0] sm:$0xff]
      %v412 = vld [vmem:[%s1 + $0x5f8] sm:$0xff]
      %v413 = vld [vmem:[%s1 + $0x600] sm:$0xff]
      %v414 = vld [vmem:[%s1 + $0x608] sm:$0xff]
      %v415 = vld [vmem:[%s1 + $0x610] sm:$0xff]
      %v416 = vld [vmem:[%s1 + $0x618] sm:$0xff]
      %v417 = vld [vmem:[%s1 + $0x620] sm:$0xff]
      %v418 = vld [vmem:[%s1 + $0x628] sm:$0xff]
      %v419 = vld [vmem:[%s1 + $0x630] sm:$0xff]
      %v420 = vld [vmem:[%s1 + $0x638] sm:$0xff]
      %v421 = vld [vmem:[%s1 + $0x640] sm:$0xff]
      %v422 = vld [vmem:[%s1 + $0x648] sm:$0xff]
      %v423 = vld [vmem:[%s1 + $0x650] sm:$0xff]
      %v424 = vld [vmem:[%s1 + $0x658] sm:$0xff]
      %v425 = vld [vmem:[%s1 + $0x660] sm:$0xff]
      %v426 = vld [vmem:[%s1 + $0x668] sm:$0xff]
      %v427 = vld [vmem:[%s1 + $0x670] sm:$0xff]
      %v428 = vld [vmem:[%s1 + $0x678] sm:$0xff]
      %v429 = vld [vmem:[%s2] sm:$0x3]
      %v431 = vlaneseq
      %v432 = vshrl.u32 %v431, 7
      %v433 = vsub.s32 0, %v432
      %v434 = vrot.slane %v429, %v433
      %v435 = vlaneseq
      %v436 = vshrl.u32 %v435, 7
      %v437 = vsub.s32 1, %v436
      %v438 = vrot.slane %v429, %v437
      %v490 = vunpack.c.l.b16 %v172
      %v491 = vunpack.c.h.b16 %v172
      %v492 = vunpack.c.l.b16 %v173
      %v493 = vunpack.c.h.b16 %v173
      %v494 = vunpack.c.l.b16 %v174
      %v495 = vunpack.c.h.b16 %v174
      %v496 = vunpack.c.l.b16 %v175
      %v497 = vunpack.c.h.b16 %v175
      %v498 = vunpack.c.l.b16 %v176
      %v499 = vunpack.c.h.b16 %v176
      %v500 = vunpack.c.l.b16 %v177
      %v501 = vunpack.c.h.b16 %v177
      %v502 = vunpack.c.l.b16 %v178
      %v503 = vunpack.c.l.b16 %v179
      %v504 = vunpack.c.h.b16 %v179
      %v505 = vunpack.c.l.b16 %v180
      %v506 = vunpack.c.h.b16 %v180
      %v507 = vunpack.c.l.b16 %v181
      %v508 = vunpack.c.h.b16 %v181
      %v509 = vunpack.c.l.b16 %v182
      %v510 = vunpack.c.h.b16 %v182
      %v511 = vunpack.c.l.b16 %v183
      %v512 = vunpack.c.h.b16 %v183
      %v513 = vunpack.c.l.b16 %v184
      %v514 = vunpack.c.h.b16 %v184
      %v515 = vunpack.c.l.b16 %v185
      %v516 = vunpack.c.l.b16 %v186
      %v517 = vunpack.c.h.b16 %v186
      %v518 = vunpack.c.l.b16 %v187
      %v519 = vunpack.c.h.b16 %v187
      %v520 = vunpack.c.l.b16 %v188
      %v521 = vunpack.c.h.b16 %v188
      %v522 = vunpack.c.l.b16 %v189
      %v523 = vunpack.c.h.b16 %v189
      %v524 = vunpack.c.l.b16 %v190
      %v525 = vunpack.c.h.b16 %v190
      %v526 = vunpack.c.l.b16 %v191
      %v527 = vunpack.c.h.b16 %v191
      %v528 = vunpack.c.l.b16 %v192
      %v529 = vunpack.c.l.b16 %v193
      %v530 = vunpack.c.h.b16 %v193
      %v531 = vunpack.c.l.b16 %v194
      %v532 = vunpack.c.h.b16 %v194
      %v533 = vunpack.c.l.b16 %v195
      %v534 = vunpack.c.h.b16 %v195
      %v535 = vunpack.c.l.b16 %v196
      %v536 = vunpack.c.h.b16 %v196
      %v537 = vunpack.c.l.b16 %v197
      %v538 = vunpack.c.h.b16 %v197
      %v539 = vunpack.c.l.b16 %v198
      %v540 = vunpack.c.h.b16 %v198
      %v541 = vunpack.c.l.b16 %v199
      %v542 = vunpack.c.l.b16 %v200
      %v543 = vunpack.c.h.b16 %v200
      %v544 = vunpack.c.l.b16 %v201
      %v545 = vunpack.c.h.b16 %v201
      %v546 = vunpack.c.l.b16 %v202
      %v547 = vunpack.c.h.b16 %v202
      %v548 = vunpack.c.l.b16 %v203
      %v549 = vunpack.c.h.b16 %v203
      %v550 = vunpack.c.l.b16 %v204
      %v551 = vunpack.c.h.b16 %v204
      %v552 = vunpack.c.l.b16 %v205
      %v553 = vunpack.c.h.b16 %v205
      %v554 = vunpack.c.l.b16 %v206
      %v555 = vunpack.c.l.b16 %v207
      %v556 = vunpack.c.h.b16 %v207
      %v557 = vunpack.c.l.b16 %v208
      %v558 = vunpack.c.h.b16 %v208
      %v559 = vunpack.c.l.b16 %v209
      %v560 = vunpack.c.h.b16 %v209
      %v561 = vunpack.c.l.b16 %v210
      %v562 = vunpack.c.h.b16 %v210
      %v563 = vunpack.c.l.b16 %v211
      %v564 = vunpack.c.h.b16 %v211
      %v565 = vunpack.c.l.b16 %v212
      %v566 = vunpack.c.h.b16 %v212
      %v567 = vunpack.c.l.b16 %v213
      %v568 = vunpack.c.l.b16 %v214
      %v569 = vunpack.c.h.b16 %v214
      %v570 = vunpack.c.l.b16 %v215
      %v571 = vunpack.c.h.b16 %v215
      %v572 = vunpack.c.l.b16 %v216
      %v573 = vunpack.c.h.b16 %v216
      %v574 = vunpack.c.l.b16 %v217
      %v575 = vunpack.c.h.b16 %v217
      %v576 = vunpack.c.l.b16 %v218
      %v577 = vunpack.c.h.b16 %v218
      %v578 = vunpack.c.l.b16 %v219
      %v579 = vunpack.c.h.b16 %v219
      %v580 = vunpack.c.l.b16 %v220
      %v581 = vpack.c.b16 %v503, %v490
      %v582 = vpack.c.b16 %v504, %v491
      %v583 = vpack.c.b16 %v505, %v492
      %v584 = vpack.c.b16 %v506, %v493
      %v585 = vpack.c.b16 %v507, %v494
      %v586 = vpack.c.b16 %v508, %v495
      %v587 = vpack.c.b16 %v509, %v496
      %v588 = vpack.c.b16 %v510, %v497
      %v589 = vpack.c.b16 %v511, %v498
      %v590 = vpack.c.b16 %v512, %v499
      %v591 = vpack.c.b16 %v513, %v500
      %v592 = vpack.c.b16 %v514, %v501
      %v593 = vpack.c.b16 %v515, %v502
      %v594 = vpack.c.b16 %v529, %v516
      %v595 = vpack.c.b16 %v530, %v517
      %v596 = vpack.c.b16 %v531, %v518
      %v597 = vpack.c.b16 %v532, %v519
      %v598 = vpack.c.b16 %v533, %v520
      %v599 = vpack.c.b16 %v534, %v521
      %v600 = vpack.c.b16 %v535, %v522
      %v601 = vpack.c.b16 %v536, %v523
      %v602 = vpack.c.b16 %v537, %v524
      %v603 = vpack.c.b16 %v538, %v525
      %v604 = vpack.c.b16 %v539, %v526
      %v605 = vpack.c.b16 %v540, %v527
      %v606 = vpack.c.b16 %v541, %v528
      %v607 = vpack.c.b16 %v555, %v542
      %v608 = vpack.c.b16 %v556, %v543
      %v609 = vpack.c.b16 %v557, %v544
      %v610 = vpack.c.b16 %v558, %v545
      %v611 = vpack.c.b16 %v559, %v546
      %v612 = vpack.c.b16 %v560, %v547
      %v613 = vpack.c.b16 %v561, %v548
      %v614 = vpack.c.b16 %v562, %v549
      %v615 = vpack.c.b16 %v563, %v550
      %v616 = vpack.c.b16 %v564, %v551
      %v617 = vpack.c.b16 %v565, %v552
      %v618 = vpack.c.b16 %v566, %v553
      %v619 = vpack.c.b16 %v567, %v554
      %v620 = vpack.c.b16 %v568, %v568
      %v621 = vpack.c.b16 %v569, %v569
      %v622 = vpack.c.b16 %v570, %v570
      %v623 = vpack.c.b16 %v571, %v571
      %v624 = vpack.c.b16 %v572, %v572
      %v625 = vpack.c.b16 %v573, %v573
      %v626 = vpack.c.b16 %v574, %v574
      %v627 = vpack.c.b16 %v575, %v575
      %v628 = vpack.c.b16 %v576, %v576
      %v629 = vpack.c.b16 %v577, %v577
      %v630 = vpack.c.b16 %v578, %v578
      %v631 = vpack.c.b16 %v579, %v579
      %v632 = vpack.c.b16 %v580, %v580
      %v893 = vunpack.c.l.b16 %v221
      %v894 = vunpack.c.h.b16 %v221
      %v895 = vunpack.c.l.b16 %v222
      %v896 = vunpack.c.h.b16 %v222
      %v897 = vunpack.c.l.b16 %v223
      %v898 = vunpack.c.h.b16 %v223
      %v899 = vunpack.c.l.b16 %v224
      %v900 = vunpack.c.h.b16 %v224
      %v901 = vunpack.c.l.b16 %v225
      %v902 = vunpack.c.h.b16 %v225
      %v903 = vunpack.c.l.b16 %v226
      %v904 = vunpack.c.h.b16 %v226
      %v905 = vunpack.c.l.b16 %v227
      %v906 = vunpack.c.h.b16 %v227
      %v907 = vunpack.c.l.b16 %v228
      %v908 = vunpack.c.h.b16 %v228
      %v909 = vunpack.c.l.b16 %v229
      %v910 = vunpack.c.h.b16 %v229
      %v911 = vunpack.c.l.b16 %v230
      %v912 = vunpack.c.h.b16 %v230
      %v913 = vunpack.c.l.b16 %v231
      %v914 = vunpack.c.h.b16 %v231
      %v915 = vunpack.c.l.b16 %v232
      %v916 = vunpack.c.h.b16 %v232
      %v917 = vunpack.c.l.b16 %v233
      %v918 = vunpack.c.h.b16 %v233
      %v919 = vunpack.c.l.b16 %v234
      %v920 = vunpack.c.h.b16 %v234
      %v921 = vunpack.c.l.b16 %v235
      %v922 = vunpack.c.h.b16 %v235
      %v923 = vunpack.c.l.b16 %v236
      %v924 = vunpack.c.h.b16 %v236
      %v925 = vunpack.c.l.b16 %v237
      %v926 = vunpack.c.h.b16 %v237
      %v927 = vunpack.c.l.b16 %v238
      %v928 = vunpack.c.h.b16 %v238
      %v929 = vunpack.c.l.b16 %v239
      %v930 = vunpack.c.h.b16 %v239
      %v931 = vunpack.c.l.b16 %v240
      %v932 = vunpack.c.h.b16 %v240
      %v933 = vunpack.c.l.b16 %v241
      %v934 = vunpack.c.h.b16 %v241
      %v935 = vunpack.c.l.b16 %v242
      %v936 = vunpack.c.h.b16 %v242
      %v937 = vunpack.c.l.b16 %v243
      %v938 = vunpack.c.h.b16 %v243
      %v939 = vunpack.c.l.b16 %v244
      %v940 = vunpack.c.h.b16 %v244
      %v941 = vunpack.c.l.b16 %v245
      %v942 = vunpack.c.h.b16 %v245
      %v943 = vunpack.c.l.b16 %v246
      %v944 = vunpack.c.h.b16 %v246
      %v945 = vunpack.c.l.b16 %v247
      %v946 = vunpack.c.h.b16 %v247
      %v947 = vunpack.c.l.b16 %v248
      %v948 = vunpack.c.h.b16 %v248
      %v949 = vunpack.c.l.b16 %v249
      %v950 = vunpack.c.h.b16 %v249
      %v951 = vunpack.c.l.b16 %v250
      %v952 = vunpack.c.h.b16 %v250
      %v953 = vunpack.c.l.b16 %v251
      %v954 = vunpack.c.h.b16 %v251
      %v955 = vunpack.c.l.b16 %v252
      %v956 = vunpack.c.h.b16 %v252
      %v957 = vunpack.c.l.b16 %v253
      %v958 = vunpack.c.h.b16 %v253
      %v959 = vunpack.c.l.b16 %v254
      %v960 = vunpack.c.h.b16 %v254
      %v961 = vunpack.c.l.b16 %v255
      %v962 = vunpack.c.h.b16 %v255
      %v963 = vunpack.c.l.b16 %v256
      %v964 = vunpack.c.h.b16 %v256
      %v965 = vunpack.c.l.b16 %v257
      %v966 = vunpack.c.h.b16 %v257
      %v967 = vunpack.c.l.b16 %v258
      %v968 = vunpack.c.h.b16 %v258
      %v969 = vunpack.c.l.b16 %v259
      %v970 = vunpack.c.h.b16 %v259
      %v971 = vunpack.c.l.b16 %v260
      %v972 = vunpack.c.h.b16 %v260
      %v973 = vunpack.c.l.b16 %v261
      %v974 = vunpack.c.h.b16 %v261
      %v975 = vunpack.c.l.b16 %v262
      %v976 = vunpack.c.h.b16 %v262
      %v977 = vunpack.c.l.b16 %v263
      %v978 = vunpack.c.h.b16 %v263
      %v979 = vunpack.c.l.b16 %v264
      %v980 = vunpack.c.h.b16 %v264
      %v981 = vunpack.c.l.b16 %v265
      %v982 = vunpack.c.h.b16 %v265
      %v983 = vunpack.c.l.b16 %v266
      %v984 = vunpack.c.h.b16 %v266
      %v985 = vunpack.c.l.b16 %v267
      %v986 = vunpack.c.h.b16 %v267
      %v987 = vunpack.c.l.b16 %v268
      %v988 = vunpack.c.h.b16 %v268
      %v989 = vunpack.c.l.b16 %v269
      %v990 = vunpack.c.h.b16 %v269
      %v991 = vunpack.c.l.b16 %v270
      %v992 = vunpack.c.h.b16 %v270
      %v993 = vunpack.c.l.b16 %v271
      %v994 = vunpack.c.h.b16 %v271
      %v995 = vunpack.c.l.b16 %v272
      %v996 = vunpack.c.h.b16 %v272
      %v997 = vunpack.c.l.b16 %v273
      %v998 = vunpack.c.h.b16 %v273
      %v999 = vunpack.c.l.b16 %v274
      %v1000 = vunpack.c.h.b16 %v274
      %v1001 = vunpack.c.l.b16 %v275
      %v1002 = vunpack.c.h.b16 %v275
      %v1003 = vunpack.c.l.b16 %v276
      %v1004 = vunpack.c.h.b16 %v276
      %v1005 = vunpack.c.l.b16 %v277
      %v1006 = vunpack.c.h.b16 %v277
      %v1007 = vunpack.c.l.b16 %v278
      %v1008 = vunpack.c.h.b16 %v278
      %v1009 = vunpack.c.l.b16 %v279
      %v1010 = vunpack.c.h.b16 %v279
      %v1011 = vunpack.c.l.b16 %v280
      %v1012 = vunpack.c.h.b16 %v280
      %v1013 = vunpack.c.l.b16 %v281
      %v1014 = vunpack.c.h.b16 %v281
      %v1015 = vunpack.c.l.b16 %v282
      %v1016 = vunpack.c.h.b16 %v282
      %v1017 = vunpack.c.l.b16 %v283
      %v1018 = vunpack.c.h.b16 %v283
      %v1019 = vunpack.c.l.b16 %v284
      %v1020 = vunpack.c.h.b16 %v284
      %v1021 = vunpack.c.l.b16 %v285
      %v1022 = vunpack.c.h.b16 %v285
      %v1023 = vunpack.c.l.b16 %v286
      %v1024 = vunpack.c.h.b16 %v286
      %v1025 = vunpack.c.l.b16 %v287
      %v1026 = vunpack.c.h.b16 %v287
      %v1027 = vunpack.c.l.b16 %v288
      %v1028 = vunpack.c.h.b16 %v288
      %v1029 = vunpack.c.l.b16 %v289
      %v1030 = vunpack.c.h.b16 %v289
      %v1031 = vunpack.c.l.b16 %v290
      %v1032 = vunpack.c.h.b16 %v290
      %v1033 = vunpack.c.l.b16 %v291
      %v1034 = vunpack.c.h.b16 %v291
      %v1035 = vunpack.c.l.b16 %v292
      %v1036 = vunpack.c.h.b16 %v292
      %v1037 = vunpack.c.l.b16 %v293
      %v1038 = vunpack.c.h.b16 %v293
      %v1039 = vunpack.c.l.b16 %v294
      %v1040 = vunpack.c.h.b16 %v294
      %v1041 = vunpack.c.l.b16 %v295
      %v1042 = vunpack.c.h.b16 %v295
      %v1043 = vunpack.c.l.b16 %v296
      %v1044 = vunpack.c.h.b16 %v296
      %v1045 = vunpack.c.l.b16 %v297
      %v1046 = vunpack.c.h.b16 %v297
      %v1047 = vunpack.c.l.b16 %v298
      %v1048 = vunpack.c.h.b16 %v298
      %v1049 = vunpack.c.l.b16 %v299
      %v1050 = vunpack.c.h.b16 %v299
      %v1051 = vunpack.c.l.b16 %v300
      %v1052 = vunpack.c.h.b16 %v300
      %v1053 = vunpack.c.l.b16 %v301
      %v1054 = vunpack.c.h.b16 %v301
      %v1055 = vunpack.c.l.b16 %v302
      %v1056 = vunpack.c.h.b16 %v302
      %v1057 = vunpack.c.l.b16 %v303
      %v1058 = vunpack.c.h.b16 %v303
      %v1059 = vunpack.c.l.b16 %v304
      %v1060 = vunpack.c.h.b16 %v304
      %v1061 = vunpack.c.l.b16 %v305
      %v1062 = vunpack.c.h.b16 %v305
      %v1063 = vunpack.c.l.b16 %v306
      %v1064 = vunpack.c.h.b16 %v306
      %v1065 = vunpack.c.l.b16 %v307
      %v1066 = vunpack.c.h.b16 %v307
      %v1067 = vunpack.c.l.b16 %v308
      %v1068 = vunpack.c.h.b16 %v308
      %v1069 = vunpack.c.l.b16 %v309
      %v1070 = vunpack.c.h.b16 %v309
      %v1071 = vunpack.c.l.b16 %v310
      %v1072 = vunpack.c.h.b16 %v310
      %v1073 = vunpack.c.l.b16 %v311
      %v1074 = vunpack.c.h.b16 %v311
      %v1075 = vunpack.c.l.b16 %v312
      %v1076 = vunpack.c.h.b16 %v312
      %v1077 = vunpack.c.l.b16 %v313
      %v1078 = vunpack.c.h.b16 %v313
      %v1079 = vunpack.c.l.b16 %v314
      %v1080 = vunpack.c.h.b16 %v314
      %v1081 = vunpack.c.l.b16 %v315
      %v1082 = vunpack.c.h.b16 %v315
      %v1083 = vunpack.c.l.b16 %v316
      %v1084 = vunpack.c.h.b16 %v316
      %v1085 = vunpack.c.l.b16 %v317
      %v1086 = vunpack.c.h.b16 %v317
      %v1087 = vunpack.c.l.b16 %v318
      %v1088 = vunpack.c.h.b16 %v318
      %v1089 = vunpack.c.l.b16 %v319
      %v1090 = vunpack.c.h.b16 %v319
      %v1091 = vunpack.c.l.b16 %v320
      %v1092 = vunpack.c.h.b16 %v320
      %v1093 = vunpack.c.l.b16 %v321
      %v1094 = vunpack.c.h.b16 %v321
      %v1095 = vunpack.c.l.b16 %v322
      %v1096 = vunpack.c.h.b16 %v322
      %v1097 = vunpack.c.l.b16 %v323
      %v1098 = vunpack.c.h.b16 %v323
      %v1099 = vunpack.c.l.b16 %v324
      %v1100 = vunpack.c.h.b16 %v324
      %v1101 = vunpack.c.l.b16 %v325
      %v1102 = vunpack.c.h.b16 %v325
      %v1103 = vunpack.c.l.b16 %v326
      %v1104 = vunpack.c.h.b16 %v326
      %v1105 = vunpack.c.l.b16 %v327
      %v1106 = vunpack.c.h.b16 %v327
      %v1107 = vunpack.c.l.b16 %v328
      %v1108 = vunpack.c.h.b16 %v328
      %v1109 = vunpack.c.l.b16 %v329
      %v1110 = vunpack.c.h.b16 %v329
      %v1111 = vunpack.c.l.b16 %v330
      %v1112 = vunpack.c.h.b16 %v330
      %v1113 = vunpack.c.l.b16 %v331
      %v1114 = vunpack.c.h.b16 %v331
      %v1115 = vunpack.c.l.b16 %v332
      %v1116 = vunpack.c.h.b16 %v332
      %v1117 = vunpack.c.l.b16 %v333
      %v1118 = vunpack.c.h.b16 %v333
      %v1119 = vunpack.c.l.b16 %v334
      %v1120 = vunpack.c.h.b16 %v334
      %v1121 = vunpack.c.l.b16 %v335
      %v1122 = vunpack.c.h.b16 %v335
      %v1123 = vunpack.c.l.b16 %v336
      %v1124 = vunpack.c.h.b16 %v336
      %v1125 = vunpack.c.l.b16 %v337
      %v1126 = vunpack.c.h.b16 %v337
      %v1127 = vunpack.c.l.b16 %v338
      %v1128 = vunpack.c.h.b16 %v338
      %v1129 = vunpack.c.l.b16 %v339
      %v1130 = vunpack.c.h.b16 %v339
      %v1131 = vunpack.c.l.b16 %v340
      %v1132 = vunpack.c.h.b16 %v340
      %v1133 = vunpack.c.l.b16 %v341
      %v1134 = vunpack.c.h.b16 %v341
      %v1135 = vunpack.c.l.b16 %v342
      %v1136 = vunpack.c.h.b16 %v342
      %v1137 = vunpack.c.l.b16 %v343
      %v1138 = vunpack.c.h.b16 %v343
      %v1139 = vunpack.c.l.b16 %v344
      %v1140 = vunpack.c.h.b16 %v344
      %v1141 = vunpack.c.l.b16 %v345
      %v1142 = vunpack.c.h.b16 %v345
      %v1143 = vunpack.c.l.b16 %v346
      %v1144 = vunpack.c.h.b16 %v346
      %v1145 = vunpack.c.l.b16 %v347
      %v1146 = vunpack.c.h.b16 %v347
      %v1147 = vunpack.c.l.b16 %v348
      %v1148 = vunpack.c.h.b16 %v348
      %v1149 = vunpack.c.l.b16 %v349
      %v1150 = vunpack.c.h.b16 %v349
      %v1151 = vunpack.c.l.b16 %v350
      %v1152 = vunpack.c.h.b16 %v350
      %v1153 = vunpack.c.l.b16 %v351
      %v1154 = vunpack.c.h.b16 %v351
      %v1155 = vunpack.c.l.b16 %v352
      %v1156 = vunpack.c.h.b16 %v352
      %v1157 = vunpack.c.l.b16 %v353
      %v1158 = vunpack.c.h.b16 %v353
      %v1159 = vunpack.c.l.b16 %v354
      %v1160 = vunpack.c.h.b16 %v354
      %v1161 = vunpack.c.l.b16 %v355
      %v1162 = vunpack.c.h.b16 %v355
      %v1163 = vunpack.c.l.b16 %v356
      %v1164 = vunpack.c.h.b16 %v356
      %v1165 = vunpack.c.l.b16 %v357
      %v1166 = vunpack.c.h.b16 %v357
      %v1167 = vunpack.c.l.b16 %v358
      %v1168 = vunpack.c.h.b16 %v358
      %v1169 = vunpack.c.l.b16 %v359
      %v1170 = vunpack.c.h.b16 %v359
      %v1171 = vunpack.c.l.b16 %v360
      %v1172 = vunpack.c.h.b16 %v360
      %v1173 = vunpack.c.l.b16 %v361
      %v1174 = vunpack.c.h.b16 %v361
      %v1175 = vunpack.c.l.b16 %v362
      %v1176 = vunpack.c.h.b16 %v362
      %v1177 = vunpack.c.l.b16 %v363
      %v1178 = vunpack.c.h.b16 %v363
      %v1179 = vunpack.c.l.b16 %v364
      %v1180 = vunpack.c.h.b16 %v364
      %v1181 = vunpack.c.l.b16 %v365
      %v1182 = vunpack.c.h.b16 %v365
      %v1183 = vunpack.c.l.b16 %v366
      %v1184 = vunpack.c.h.b16 %v366
      %v1185 = vunpack.c.l.b16 %v367
      %v1186 = vunpack.c.h.b16 %v367
      %v1187 = vunpack.c.l.b16 %v368
      %v1188 = vunpack.c.h.b16 %v368
      %v1189 = vunpack.c.l.b16 %v369
      %v1190 = vunpack.c.h.b16 %v369
      %v1191 = vunpack.c.l.b16 %v370
      %v1192 = vunpack.c.h.b16 %v370
      %v1193 = vunpack.c.l.b16 %v371
      %v1194 = vunpack.c.h.b16 %v371
      %v1195 = vunpack.c.l.b16 %v372
      %v1196 = vunpack.c.h.b16 %v372
      %v1197 = vunpack.c.l.b16 %v373
      %v1198 = vunpack.c.h.b16 %v373
      %v1199 = vunpack.c.l.b16 %v374
      %v1200 = vunpack.c.h.b16 %v374
      %v1201 = vunpack.c.l.b16 %v375
      %v1202 = vunpack.c.h.b16 %v375
      %v1203 = vunpack.c.l.b16 %v376
      %v1204 = vunpack.c.h.b16 %v376
      %v1205 = vunpack.c.l.b16 %v377
      %v1206 = vunpack.c.h.b16 %v377
      %v1207 = vunpack.c.l.b16 %v378
      %v1208 = vunpack.c.h.b16 %v378
      %v1209 = vunpack.c.l.b16 %v379
      %v1210 = vunpack.c.h.b16 %v379
      %v1211 = vunpack.c.l.b16 %v380
      %v1212 = vunpack.c.h.b16 %v380
      %v1213 = vunpack.c.l.b16 %v381
      %v1214 = vunpack.c.h.b16 %v381
      %v1215 = vunpack.c.l.b16 %v382
      %v1216 = vunpack.c.h.b16 %v382
      %v1217 = vunpack.c.l.b16 %v383
      %v1218 = vunpack.c.h.b16 %v383
      %v1219 = vunpack.c.l.b16 %v384
      %v1220 = vunpack.c.h.b16 %v384
      %v1221 = vunpack.c.l.b16 %v385
      %v1222 = vunpack.c.h.b16 %v385
      %v1223 = vunpack.c.l.b16 %v386
      %v1224 = vunpack.c.h.b16 %v386
      %v1225 = vunpack.c.l.b16 %v387
      %v1226 = vunpack.c.h.b16 %v387
      %v1227 = vunpack.c.l.b16 %v388
      %v1228 = vunpack.c.h.b16 %v388
      %v1229 = vunpack.c.l.b16 %v389
      %v1230 = vunpack.c.h.b16 %v389
      %v1231 = vunpack.c.l.b16 %v390
      %v1232 = vunpack.c.h.b16 %v390
      %v1233 = vunpack.c.l.b16 %v391
      %v1234 = vunpack.c.h.b16 %v391
      %v1235 = vunpack.c.l.b16 %v392
      %v1236 = vunpack.c.h.b16 %v392
      %v1237 = vunpack.c.l.b16 %v393
      %v1238 = vunpack.c.h.b16 %v393
      %v1239 = vunpack.c.l.b16 %v394
      %v1240 = vunpack.c.h.b16 %v394
      %v1241 = vunpack.c.l.b16 %v395
      %v1242 = vunpack.c.h.b16 %v395
      %v1243 = vunpack.c.l.b16 %v396
      %v1244 = vunpack.c.h.b16 %v396
      %v1245 = vunpack.c.l.b16 %v397
      %v1246 = vunpack.c.h.b16 %v397
      %v1247 = vunpack.c.l.b16 %v398
      %v1248 = vunpack.c.h.b16 %v398
      %v1249 = vunpack.c.l.b16 %v399
      %v1250 = vunpack.c.h.b16 %v399
      %v1251 = vunpack.c.l.b16 %v400
      %v1252 = vunpack.c.h.b16 %v400
      %v1253 = vunpack.c.l.b16 %v401
      %v1254 = vunpack.c.h.b16 %v401
      %v1255 = vunpack.c.l.b16 %v402
      %v1256 = vunpack.c.h.b16 %v402
      %v1257 = vunpack.c.l.b16 %v403
      %v1258 = vunpack.c.h.b16 %v403
      %v1259 = vunpack.c.l.b16 %v404
      %v1260 = vunpack.c.h.b16 %v404
      %v1261 = vunpack.c.l.b16 %v405
      %v1262 = vunpack.c.h.b16 %v405
      %v1263 = vunpack.c.l.b16 %v406
      %v1264 = vunpack.c.h.b16 %v406
      %v1265 = vunpack.c.l.b16 %v407
      %v1266 = vunpack.c.h.b16 %v407
      %v1267 = vunpack.c.l.b16 %v408
      %v1268 = vunpack.c.h.b16 %v408
      %v1269 = vunpack.c.l.b16 %v409
      %v1270 = vunpack.c.h.b16 %v409
      %v1271 = vunpack.c.l.b16 %v410
      %v1272 = vunpack.c.h.b16 %v410
      %v1273 = vunpack.c.l.b16 %v411
      %v1274 = vunpack.c.h.b16 %v411
      %v1275 = vunpack.c.l.b16 %v412
      %v1276 = vunpack.c.h.b16 %v412
      %v1277 = vunpack.c.l.b16 %v413
      %v1278 = vunpack.c.h.b16 %v413
      %v1279 = vunpack.c.l.b16 %v414
      %v1280 = vunpack.c.h.b16 %v414
      %v1281 = vunpack.c.l.b16 %v415
      %v1282 = vunpack.c.h.b16 %v415
      %v1283 = vunpack.c.l.b16 %v416
      %v1284 = vunpack.c.h.b16 %v416
      %v1285 = vunpack.c.l.b16 %v417
      %v1286 = vunpack.c.h.b16 %v417
      %v1287 = vunpack.c.l.b16 %v418
      %v1288 = vunpack.c.h.b16 %v418
      %v1289 = vunpack.c.l.b16 %v419
      %v1290 = vunpack.c.h.b16 %v419
      %v1291 = vunpack.c.l.b16 %v420
      %v1292 = vunpack.c.h.b16 %v420
      %v1293 = vunpack.c.l.b16 %v421
      %v1294 = vunpack.c.h.b16 %v421
      %v1295 = vunpack.c.l.b16 %v422
      %v1296 = vunpack.c.h.b16 %v422
      %v1297 = vunpack.c.l.b16 %v423
      %v1298 = vunpack.c.h.b16 %v423
      %v1299 = vunpack.c.l.b16 %v424
      %v1300 = vunpack.c.h.b16 %v424
      %v1301 = vunpack.c.l.b16 %v425
      %v1302 = vunpack.c.h.b16 %v425
      %v1303 = vunpack.c.l.b16 %v426
      %v1304 = vunpack.c.h.b16 %v426
      %v1305 = vunpack.c.l.b16 %v427
      %v1306 = vunpack.c.h.b16 %v427
      %v1307 = vunpack.c.l.b16 %v428
      %v1308 = vunpack.c.h.b16 %v428
      %v1309 = vpack.c.b16 %v895, %v893
      %v1310 = vpack.c.b16 %v896, %v894
      %v1311 = vpack.c.b16 %v899, %v897
      %v1312 = vpack.c.b16 %v900, %v898
      %v1313 = vpack.c.b16 %v903, %v901
      %v1314 = vpack.c.b16 %v904, %v902
      %v1315 = vpack.c.b16 %v907, %v905
      %v1316 = vpack.c.b16 %v908, %v906
      %v1317 = vpack.c.b16 %v911, %v909
      %v1318 = vpack.c.b16 %v912, %v910
      %v1319 = vpack.c.b16 %v915, %v913
      %v1320 = vpack.c.b16 %v916, %v914
      %v1321 = vpack.c.b16 %v919, %v917
      %v1322 = vpack.c.b16 %v920, %v918
      %v1323 = vpack.c.b16 %v923, %v921
      %v1324 = vpack.c.b16 %v924, %v922
      %v1325 = vpack.c.b16 %v927, %v925
      %v1326 = vpack.c.b16 %v928, %v926
      %v1327 = vpack.c.b16 %v931, %v929
      %v1328 = vpack.c.b16 %v932, %v930
      %v1329 = vpack.c.b16 %v935, %v933
      %v1330 = vpack.c.b16 %v936, %v934
      %v1331 = vpack.c.b16 %v939, %v937
      %v1332 = vpack.c.b16 %v940, %v938
      %v1333 = vpack.c.b16 %v943, %v941
      %v1334 = vpack.c.b16 %v944, %v942
      %v1335 = vpack.c.b16 %v947, %v945
      %v1336 = vpack.c.b16 %v948, %v946
      %v1337 = vpack.c.b16 %v951, %v949
      %v1338 = vpack.c.b16 %v952, %v950
      %v1339 = vpack.c.b16 %v955, %v953
      %v1340 = vpack.c.b16 %v956, %v954
      %v1341 = vpack.c.b16 %v959, %v957
      %v1342 = vpack.c.b16 %v960, %v958
      %v1343 = vpack.c.b16 %v963, %v961
      %v1344 = vpack.c.b16 %v964, %v962
      %v1345 = vpack.c.b16 %v967, %v965
      %v1346 = vpack.c.b16 %v968, %v966
      %v1347 = vpack.c.b16 %v971, %v969
      %v1348 = vpack.c.b16 %v972, %v970
      %v1349 = vpack.c.b16 %v975, %v973
      %v1350 = vpack.c.b16 %v976, %v974
      %v1351 = vpack.c.b16 %v979, %v977
      %v1352 = vpack.c.b16 %v980, %v978
      %v1353 = vpack.c.b16 %v983, %v981
      %v1354 = vpack.c.b16 %v984, %v982
      %v1355 = vpack.c.b16 %v987, %v985
      %v1356 = vpack.c.b16 %v988, %v986
      %v1357 = vpack.c.b16 %v991, %v989
      %v1358 = vpack.c.b16 %v992, %v990
      %v1359 = vpack.c.b16 %v995, %v993
      %v1360 = vpack.c.b16 %v996, %v994
      %v1361 = vpack.c.b16 %v999, %v997
      %v1362 = vpack.c.b16 %v1000, %v998
      %v1363 = vpack.c.b16 %v1003, %v1001
      %v1364 = vpack.c.b16 %v1004, %v1002
      %v1365 = vpack.c.b16 %v1007, %v1005
      %v1366 = vpack.c.b16 %v1008, %v1006
      %v1367 = vpack.c.b16 %v1011, %v1009
      %v1368 = vpack.c.b16 %v1012, %v1010
      %v1369 = vpack.c.b16 %v1015, %v1013
      %v1370 = vpack.c.b16 %v1016, %v1014
      %v1371 = vpack.c.b16 %v1019, %v1017
      %v1372 = vpack.c.b16 %v1020, %v1018
      %v1373 = vpack.c.b16 %v1023, %v1021
      %v1374 = vpack.c.b16 %v1024, %v1022
      %v1375 = vpack.c.b16 %v1027, %v1025
      %v1376 = vpack.c.b16 %v1028, %v1026
      %v1377 = vpack.c.b16 %v1031, %v1029
      %v1378 = vpack.c.b16 %v1032, %v1030
      %v1379 = vpack.c.b16 %v1035, %v1033
      %v1380 = vpack.c.b16 %v1036, %v1034
      %v1381 = vpack.c.b16 %v1039, %v1037
      %v1382 = vpack.c.b16 %v1040, %v1038
      %v1383 = vpack.c.b16 %v1043, %v1041
      %v1384 = vpack.c.b16 %v1044, %v1042
      %v1385 = vpack.c.b16 %v1047, %v1045
      %v1386 = vpack.c.b16 %v1048, %v1046
      %v1387 = vpack.c.b16 %v1051, %v1049
      %v1388 = vpack.c.b16 %v1052, %v1050
      %v1389 = vpack.c.b16 %v1055, %v1053
      %v1390 = vpack.c.b16 %v1056, %v1054
      %v1391 = vpack.c.b16 %v1059, %v1057
      %v1392 = vpack.c.b16 %v1060, %v1058
      %v1393 = vpack.c.b16 %v1063, %v1061
      %v1394 = vpack.c.b16 %v1064, %v1062
      %v1395 = vpack.c.b16 %v1067, %v1065
      %v1396 = vpack.c.b16 %v1068, %v1066
      %v1397 = vpack.c.b16 %v1071, %v1069
      %v1398 = vpack.c.b16 %v1072, %v1070
      %v1399 = vpack.c.b16 %v1075, %v1073
      %v1400 = vpack.c.b16 %v1076, %v1074
      %v1401 = vpack.c.b16 %v1079, %v1077
      %v1402 = vpack.c.b16 %v1080, %v1078
      %v1403 = vpack.c.b16 %v1083, %v1081
      %v1404 = vpack.c.b16 %v1084, %v1082
      %v1405 = vpack.c.b16 %v1087, %v1085
      %v1406 = vpack.c.b16 %v1088, %v1086
      %v1407 = vpack.c.b16 %v1091, %v1089
      %v1408 = vpack.c.b16 %v1092, %v1090
      %v1409 = vpack.c.b16 %v1095, %v1093
      %v1410 = vpack.c.b16 %v1096, %v1094
      %v1411 = vpack.c.b16 %v1099, %v1097
      %v1412 = vpack.c.b16 %v1100, %v1098
      %v1413 = vpack.c.b16 %v1103, %v1101
      %v1414 = vpack.c.b16 %v1104, %v1102
      %v1415 = vpack.c.b16 %v1107, %v1105
      %v1416 = vpack.c.b16 %v1108, %v1106
      %v1417 = vpack.c.b16 %v1111, %v1109
      %v1418 = vpack.c.b16 %v1112, %v1110
      %v1419 = vpack.c.b16 %v1115, %v1113
      %v1420 = vpack.c.b16 %v1116, %v1114
      %v1421 = vpack.c.b16 %v1119, %v1117
      %v1422 = vpack.c.b16 %v1120, %v1118
      %v1423 = vpack.c.b16 %v1123, %v1121
      %v1424 = vpack.c.b16 %v1124, %v1122
      %v1425 = vpack.c.b16 %v1127, %v1125
      %v1426 = vpack.c.b16 %v1128, %v1126
      %v1427 = vpack.c.b16 %v1131, %v1129
      %v1428 = vpack.c.b16 %v1132, %v1130
      %v1429 = vpack.c.b16 %v1135, %v1133
      %v1430 = vpack.c.b16 %v1136, %v1134
      %v1431 = vpack.c.b16 %v1139, %v1137
      %v1432 = vpack.c.b16 %v1140, %v1138
      %v1433 = vpack.c.b16 %v1143, %v1141
      %v1434 = vpack.c.b16 %v1144, %v1142
      %v1435 = vpack.c.b16 %v1147, %v1145
      %v1436 = vpack.c.b16 %v1148, %v1146
      %v1437 = vpack.c.b16 %v1151, %v1149
      %v1438 = vpack.c.b16 %v1152, %v1150
      %v1439 = vpack.c.b16 %v1155, %v1153
      %v1440 = vpack.c.b16 %v1156, %v1154
      %v1441 = vpack.c.b16 %v1159, %v1157
      %v1442 = vpack.c.b16 %v1160, %v1158
      %v1443 = vpack.c.b16 %v1163, %v1161
      %v1444 = vpack.c.b16 %v1164, %v1162
      %v1445 = vpack.c.b16 %v1167, %v1165
      %v1446 = vpack.c.b16 %v1168, %v1166
      %v1447 = vpack.c.b16 %v1171, %v1169
      %v1448 = vpack.c.b16 %v1172, %v1170
      %v1449 = vpack.c.b16 %v1175, %v1173
      %v1450 = vpack.c.b16 %v1176, %v1174
      %v1451 = vpack.c.b16 %v1179, %v1177
      %v1452 = vpack.c.b16 %v1180, %v1178
      %v1453 = vpack.c.b16 %v1183, %v1181
      %v1454 = vpack.c.b16 %v1184, %v1182
      %v1455 = vpack.c.b16 %v1187, %v1185
      %v1456 = vpack.c.b16 %v1188, %v1186
      %v1457 = vpack.c.b16 %v1191, %v1189
      %v1458 = vpack.c.b16 %v1192, %v1190
      %v1459 = vpack.c.b16 %v1195, %v1193
      %v1460 = vpack.c.b16 %v1196, %v1194
      %v1461 = vpack.c.b16 %v1199, %v1197
      %v1462 = vpack.c.b16 %v1200, %v1198
      %v1463 = vpack.c.b16 %v1203, %v1201
      %v1464 = vpack.c.b16 %v1204, %v1202
      %v1465 = vpack.c.b16 %v1207, %v1205
      %v1466 = vpack.c.b16 %v1208, %v1206
      %v1467 = vpack.c.b16 %v1211, %v1209
      %v1468 = vpack.c.b16 %v1212, %v1210
      %v1469 = vpack.c.b16 %v1215, %v1213
      %v1470 = vpack.c.b16 %v1216, %v1214
      %v1471 = vpack.c.b16 %v1219, %v1217
      %v1472 = vpack.c.b16 %v1220, %v1218
      %v1473 = vpack.c.b16 %v1223, %v1221
      %v1474 = vpack.c.b16 %v1224, %v1222
      %v1475 = vpack.c.b16 %v1227, %v1225
      %v1476 = vpack.c.b16 %v1228, %v1226
      %v1477 = vpack.c.b16 %v1231, %v1229
      %v1478 = vpack.c.b16 %v1232, %v1230
      %v1479 = vpack.c.b16 %v1235, %v1233
      %v1480 = vpack.c.b16 %v1236, %v1234
      %v1481 = vpack.c.b16 %v1239, %v1237
      %v1482 = vpack.c.b16 %v1240, %v1238
      %v1483 = vpack.c.b16 %v1243, %v1241
      %v1484 = vpack.c.b16 %v1244, %v1242
      %v1485 = vpack.c.b16 %v1247, %v1245
      %v1486 = vpack.c.b16 %v1248, %v1246
      %v1487 = vpack.c.b16 %v1251, %v1249
      %v1488 = vpack.c.b16 %v1252, %v1250
      %v1489 = vpack.c.b16 %v1255, %v1253
      %v1490 = vpack.c.b16 %v1256, %v1254
      %v1491 = vpack.c.b16 %v1259, %v1257
      %v1492 = vpack.c.b16 %v1260, %v1258
      %v1493 = vpack.c.b16 %v1263, %v1261
      %v1494 = vpack.c.b16 %v1264, %v1262
      %v1495 = vpack.c.b16 %v1267, %v1265
      %v1496 = vpack.c.b16 %v1268, %v1266
      %v1497 = vpack.c.b16 %v1271, %v1269
      %v1498 = vpack.c.b16 %v1272, %v1270
      %v1499 = vpack.c.b16 %v1275, %v1273
      %v1500 = vpack.c.b16 %v1276, %v1274
      %v1501 = vpack.c.b16 %v1279, %v1277
      %v1502 = vpack.c.b16 %v1280, %v1278
      %v1503 = vpack.c.b16 %v1283, %v1281
      %v1504 = vpack.c.b16 %v1284, %v1282
      %v1505 = vpack.c.b16 %v1287, %v1285
      %v1506 = vpack.c.b16 %v1288, %v1286
      %v1507 = vpack.c.b16 %v1291, %v1289
      %v1508 = vpack.c.b16 %v1292, %v1290
      %v1509 = vpack.c.b16 %v1295, %v1293
      %v1510 = vpack.c.b16 %v1296, %v1294
      %v1511 = vpack.c.b16 %v1299, %v1297
      %v1512 = vpack.c.b16 %v1300, %v1298
      %v1513 = vpack.c.b16 %v1303, %v1301
      %v1514 = vpack.c.b16 %v1304, %v1302
      %v1515 = vpack.c.b16 %v1307, %v1305
      %v1516 = vpack.c.b16 %v1308, %v1306
      %1725 = vmatprep.subr.bf16.mxu0 %v1310
      %1726 = vmatpush1.bf16.msra.mxu0 %v1309
      %1727 = vmatprep.subr.bf16.mxu0 %v1312
      %1728 = vmatpush1.bf16.msra.mxu0 %v1311
      %1729 = vmatprep.subr.bf16.mxu0 %v1314
      %1730 = vmatpush1.bf16.msra.mxu0 %v1313
      %1731 = vmatprep.subr.bf16.mxu0 %v1316
      %1732 = vmatpush1.bf16.msra.mxu0 %v1315
      %1733 = vmatprep.subr.bf16.mxu0 %v1318
      %1734 = vmatpush1.bf16.msra.mxu0 %v1317
      %1735 = vmatprep.subr.bf16.mxu0 %v1320
      %1736 = vmatpush1.bf16.msra.mxu0 %v1319
      %1737 = vmatprep.subr.bf16.mxu0 %v1322
      %1738 = vmatpush1.bf16.msra.mxu0 %v1321
      %1739 = vmatprep.subr.bf16.mxu0 %v1324
      %1740 = vmatpush1.bf16.msra.mxu0 %v1323
      %1741 = vmatprep.subr.bf16.mxu0 %v1326
      %1742 = vmatpush1.bf16.msra.mxu0 %v1325
      %1743 = vmatprep.subr.bf16.mxu0 %v1328
      %1744 = vmatpush1.bf16.msra.mxu0 %v1327
      %1745 = vmatprep.subr.bf16.mxu0 %v1330
      %1746 = vmatpush1.bf16.msra.mxu0 %v1329
      %1747 = vmatprep.subr.bf16.mxu0 %v1332
      %1748 = vmatpush1.bf16.msra.mxu0 %v1331
      %1749 = vmatprep.subr.bf16.mxu0 %v1334
      %1750 = vmatpush1.bf16.msra.mxu0 %v1333
      %1751 = vmatprep.subr.bf16.mxu0 %v1336
      %1752 = vmatpush1.bf16.msra.mxu0 %v1335
      %1753 = vmatprep.subr.bf16.mxu0 %v1338
      %1754 = vmatpush1.bf16.msra.mxu0 %v1337
      %1755 = vmatprep.subr.bf16.mxu0 %v1340
      %1756 = vmatpush1.bf16.msra.mxu0 %v1339
      %1757 = vmatprep.mubr.bf16.mxu0 %v582
      %1758 = vmatmul.mubr.bf16.gmra.mrb[0].mxu0 %v581
      %v1759 = vpop.f32.mrb[0].mxu0
      %v1760 = vadd.f32 %v434, %v1759
      %v1761 = vpop.f32.mrb[0].mxu0
      %v1762 = vadd.f32 %v438, %v1761
      %v1763 = vpop.f32.mrb[0].mxu0
      %v1764 = vadd.f32 %v434, %v1763
      %v1765 = vpop.f32.mrb[0].mxu0
      %v1766 = vadd.f32 %v438, %v1765
      %1767 = vmatprep.mubr.bf16.mxu0 %v595
      %1768 = vmatmul.mubr.bf16.gmra.mrb[0].mxu0 %v594
      %v1769 = vpop.f32.mrb[0].mxu0
      %v1770 = vadd.f32 %v434, %v1769
      %v1771 = vpop.f32.mrb[0].mxu0
      %v1772 = vadd.f32 %v438, %v1771
      %v1773 = vpop.f32.mrb[0].mxu0
      %v1774 = vadd.f32 %v434, %v1773
      %v1775 = vpop.f32.mrb[0].mxu0
      %v1776 = vadd.f32 %v438, %v1775
      %1777 = vmatprep.mubr.bf16.mxu0 %v608
      %1778 = vmatmul.mubr.bf16.gmra.mrb[0].mxu0 %v607
      %v1779 = vpop.f32.mrb[0].mxu0
      %v1780 = vadd.f32 %v434, %v1779
      %v1781 = vpop.f32.mrb[0].mxu0
      %v1782 = vadd.f32 %v438, %v1781
      %v1783 = vpop.f32.mrb[0].mxu0
      %v1784 = vadd.f32 %v434, %v1783
      %v1785 = vpop.f32.mrb[0].mxu0
      %v1786 = vadd.f32 %v438, %v1785
      %1787 = vmatprep.mubr.bf16.mxu0 %v621
      %1788 = vmatmul.mubr.bf16.gmra.mrb[0].mxu0 %v620
      %v1789 = vpop.f32.mrb[0].mxu0
      %v1790 = vadd.f32 %v434, %v1789
      %v1791 = vpop.f32.mrb[0].mxu0
      %v1792 = vadd.f32 %v438, %v1791
      %v1793 = vpop.f32.mrb[0].mxu0
      %v1794 = vpop.f32.mrb[0].mxu0
      %1795 = vdwg.mxu0
      %1796 = vmatprep.subr.bf16.mxu0 %v1342
      %1797 = vmatpush1.bf16.msra.mxu0 %v1341
      %1798 = vmatprep.subr.bf16.mxu0 %v1344
      %1799 = vmatpush1.bf16.msra.mxu0 %v1343
      %1800 = vmatprep.subr.bf16.mxu0 %v1346
      %1801 = vmatpush1.bf16.msra.mxu0 %v1345
      %1802 = vmatprep.subr.bf16.mxu0 %v1348
      %1803 = vmatpush1.bf16.msra.mxu0 %v1347
      %1804 = vmatprep.subr.bf16.mxu0 %v1350
      %1805 = vmatpush1.bf16.msra.mxu0 %v1349
      %1806 = vmatprep.subr.bf16.mxu0 %v1352
      %1807 = vmatpush1.bf16.msra.mxu0 %v1351
      %1808 = vmatprep.subr.bf16.mxu0 %v1354
      %1809 = vmatpush1.bf16.msra.mxu0 %v1353
      %1810 = vmatprep.subr.bf16.mxu0 %v1356
      %1811 = vmatpush1.bf16.msra.mxu0 %v1355
      %1812 = vmatprep.subr.bf16.mxu0 %v1358
      %1813 = vmatpush1.bf16.msra.mxu0 %v1357
      %1814 = vmatprep.subr.bf16.mxu0 %v1360
      %1815 = vmatpush1.bf16.msra.mxu0 %v1359
      %1816 = vmatprep.subr.bf16.mxu0 %v1362
      %1817 = vmatpush1.bf16.msra.mxu0 %v1361
      %1818 = vmatprep.subr.bf16.mxu0 %v1364
      %1819 = vmatpush1.bf16.msra.mxu0 %v1363
      %1820 = vmatprep.subr.bf16.mxu0 %v1366
      %1821 = vmatpush1.bf16.msra.mxu0 %v1365
      %1822 = vmatprep.subr.bf16.mxu0 %v1368
      %1823 = vmatpush1.bf16.msra.mxu0 %v1367
      %1824 = vmatprep.subr.bf16.mxu0 %v1370
      %1825 = vmatpush1.bf16.msra.mxu0 %v1369
      %1826 = vmatprep.subr.bf16.mxu0 %v1372
      %1827 = vmatpush1.bf16.msra.mxu0 %v1371
      %1828 = vmatprep.mubr.bf16.mxu0 %v584
      %1829 = vmatmul.mubr.bf16.gmra.mrb[0].mxu0 %v583
      %v1830 = vpop.f32.mrb[0].mxu0
      %v1831 = vadd.f32 %v1760, %v1830
      %v1832 = vpop.f32.mrb[0].mxu0
      %v1833 = vadd.f32 %v1762, %v1832
      %v1834 = vpop.f32.mrb[0].mxu0
      %v1835 = vadd.f32 %v1764, %v1834
      %v1836 = vpop.f32.mrb[0].mxu0
      %v1837 = vadd.f32 %v1766, %v1836
      %1838 = vmatprep.mubr.bf16.mxu0 %v597
      %1839 = vmatmul.mubr.bf16.gmra.mrb[0].mxu0 %v596
      %v1840 = vpop.f32.mrb[0].mxu0
      %v1841 = vadd.f32 %v1770, %v1840
      %v1842 = vpop.f32.mrb[0].mxu0
      %v1843 = vadd.f32 %v1772, %v1842
      %v1844 = vpop.f32.mrb[0].mxu0
      %v1845 = vadd.f32 %v1774, %v1844
      %v1846 = vpop.f32.mrb[0].mxu0
      %v1847 = vadd.f32 %v1776, %v1846
      %1848 = vmatprep.mubr.bf16.mxu0 %v610
      %1849 = vmatmul.mubr.bf16.gmra.mrb[0].mxu0 %v609
      %v1850 = vpop.f32.mrb[0].mxu0
      %v1851 = vadd.f32 %v1780, %v1850
      %v1852 = vpop.f32.mrb[0].mxu0
      %v1853 = vadd.f32 %v1782, %v1852
      %v1854 = vpop.f32.mrb[0].mxu0
      %v1855 = vadd.f32 %v1784, %v1854
      %v1856 = vpop.f32.mrb[0].mxu0
      %v1857 = vadd.f32 %v1786, %v1856
      %1858 = vmatprep.mubr.bf16.mxu0 %v623
      %1859 = vmatmul.mubr.bf16.gmra.mrb[0].mxu0 %v622
      %v1860 = vpop.f32.mrb[0].mxu0
      %v1861 = vadd.f32 %v1790, %v1860
      %v1862 = vpop.f32.mrb[0].mxu0
      %v1863 = vadd.f32 %v1792, %v1862
      %v1864 = vpop.f32.mrb[0].mxu0
      %v1865 = vpop.f32.mrb[0].mxu0
      %1866 = vdwg.mxu0
      %1867 = vmatprep.subr.bf16.mxu0 %v1374
      %1868 = vmatpush1.bf16.msra.mxu0 %v1373
      %1869 = vmatprep.subr.bf16.mxu0 %v1376
      %1870 = vmatpush1.bf16.msra.mxu0 %v1375
      %1871 = vmatprep.subr.bf16.mxu0 %v1378
      %1872 = vmatpush1.bf16.msra.mxu0 %v1377
      %1873 = vmatprep.subr.bf16.mxu0 %v1380
      %1874 = vmatpush1.bf16.msra.mxu0 %v1379
      %1875 = vmatprep.subr.bf16.mxu0 %v1382
      %1876 = vmatpush1.bf16.msra.mxu0 %v1381
      %1877 = vmatprep.subr.bf16.mxu0 %v1384
      %1878 = vmatpush1.bf16.msra.mxu0 %v1383
      %1879 = vmatprep.subr.bf16.mxu0 %v1386
      %1880 = vmatpush1.bf16.msra.mxu0 %v1385
      %1881 = vmatprep.subr.bf16.mxu0 %v1388
      %1882 = vmatpush1.bf16.msra.mxu0 %v1387
      %1883 = vmatprep.subr.bf16.mxu0 %v1390
      %1884 = vmatpush1.bf16.msra.mxu0 %v1389
      %1885 = vmatprep.subr.bf16.mxu0 %v1392
      %1886 = vmatpush1.bf16.msra.mxu0 %v1391
      %1887 = vmatprep.subr.bf16.mxu0 %v1394
      %1888 = vmatpush1.bf16.msra.mxu0 %v1393
      %1889 = vmatprep.subr.bf16.mxu0 %v1396
      %1890 = vmatpush1.bf16.msra.mxu0 %v1395
      %1891 = vmatprep.subr.bf16.mxu0 %v1398
      %1892 = vmatpush1.bf16.msra.mxu0 %v1397
      %1893 = vmatprep.subr.bf16.mxu0 %v1400
      %1894 = vmatpush1.bf16.msra.mxu0 %v1399
      %1895 = vmatprep.subr.bf16.mxu0 %v1402
      %1896 = vmatpush1.bf16.msra.mxu0 %v1401
      %1897 = vmatprep.subr.bf16.mxu0 %v1404
      %1898 = vmatpush1.bf16.msra.mxu0 %v1403
      %1899 = vmatprep.mubr.bf16.mxu0 %v586
      %1900 = vmatmul.mubr.bf16.gmra.mrb[0].mxu0 %v585
      %v1901 = vpop.f32.mrb[0].mxu0
      %v1902 = vadd.f32 %v1831, %v1901
      %v1903 = vpop.f32.mrb[0].mxu0
      %v1904 = vadd.f32 %v1833, %v1903
      %v1905 = vpop.f32.mrb[0].mxu0
      %v1906 = vadd.f32 %v1835, %v1905
      %v1907 = vpop.f32.mrb[0].mxu0
      %v1908 = vadd.f32 %v1837, %v1907
      %1909 = vmatprep.mubr.bf16.mxu0 %v599
      %1910 = vmatmul.mubr.bf16.gmra.mrb[0].mxu0 %v598
      %v1911 = vpop.f32.mrb[0].mxu0
      %v1912 = vadd.f32 %v1841, %v1911
      %v1913 = vpop.f32.mrb[0].mxu0
      %v1914 = vadd.f32 %v1843, %v1913
      %v1915 = vpop.f32.mrb[0].mxu0
      %v1916 = vadd.f32 %v1845, %v1915
      %v1917 = vpop.f32.mrb[0].mxu0
      %v1918 = vadd.f32 %v1847, %v1917
      %1919 = vmatprep.mubr.bf16.mxu0 %v612
      %1920 = vmatmul.mubr.bf16.gmra.mrb[0].mxu0 %v611
      %v1921 = vpop.f32.mrb[0].mxu0
      %v1922 = vadd.f32 %v1851, %v1921
      %v1923 = vpop.f32.mrb[0].mxu0
      %v1924 = vadd.f32 %v1853, %v1923
      %v1925 = vpop.f32.mrb[0].mxu0
      %v1926 = vadd.f32 %v1855, %v1925
      %v1927 = vpop.f32.mrb[0].mxu0
      %v1928 = vadd.f32 %v1857, %v1927
      %1929 = vmatprep.mubr.bf16.mxu0 %v625
      %1930 = vmatmul.mubr.bf16.gmra.mrb[0].mxu0 %v624
      %v1931 = vpop.f32.mrb[0].mxu0
      %v1932 = vadd.f32 %v1861, %v1931
      %v1933 = vpop.f32.mrb[0].mxu0
      %v1934 = vadd.f32 %v1863, %v1933
      %v1935 = vpop.f32.mrb[0].mxu0
      %v1936 = vpop.f32.mrb[0].mxu0
      %1937 = vdwg.mxu0
      %1938 = vmatprep.subr.bf16.mxu0 %v1406
      %1939 = vmatpush1.bf16.msra.mxu0 %v1405
      %1940 = vmatprep.subr.bf16.mxu0 %v1408
      %1941 = vmatpush1.bf16.msra.mxu0 %v1407
      %1942 = vmatprep.subr.bf16.mxu0 %v1410
      %1943 = vmatpush1.bf16.msra.mxu0 %v1409
      %1944 = vmatprep.subr.bf16.mxu0 %v1412
      %1945 = vmatpush1.bf16.msra.mxu0 %v1411
      %1946 = vmatprep.subr.bf16.mxu0 %v1414
      %1947 = vmatpush1.bf16.msra.mxu0 %v1413
      %1948 = vmatprep.subr.bf16.mxu0 %v1416
      %1949 = vmatpush1.bf16.msra.mxu0 %v1415
      %1950 = vmatprep.subr.bf16.mxu0 %v1418
      %1951 = vmatpush1.bf16.msra.mxu0 %v1417
      %1952 = vmatprep.subr.bf16.mxu0 %v1420
      %1953 = vmatpush1.bf16.msra.mxu0 %v1419
      %1954 = vmatprep.subr.bf16.mxu0 %v1422
      %1955 = vmatpush1.bf16.msra.mxu0 %v1421
      %1956 = vmatprep.subr.bf16.mxu0 %v1424
      %1957 = vmatpush1.bf16.msra.mxu0 %v1423
      %1958 = vmatprep.subr.bf16.mxu0 %v1426
      %1959 = vmatpush1.bf16.msra.mxu0 %v1425
      %1960 = vmatprep.subr.bf16.mxu0 %v1428
      %1961 = vmatpush1.bf16.msra.mxu0 %v1427
      %1962 = vmatprep.subr.bf16.mxu0 %v1430
      %1963 = vmatpush1.bf16.msra.mxu0 %v1429
      %1964 = vmatprep.subr.bf16.mxu0 %v1432
      %1965 = vmatpush1.bf16.msra.mxu0 %v1431
      %1966 = vmatprep.subr.bf16.mxu0 %v1434
      %1967 = vmatpush1.bf16.msra.mxu0 %v1433
      %1968 = vmatprep.subr.bf16.mxu0 %v1436
      %1969 = vmatpush1.bf16.msra.mxu0 %v1435
      %1970 = vmatprep.mubr.bf16.mxu0 %v588
      %1971 = vmatmul.mubr.bf16.gmra.mrb[0].mxu0 %v587
      %v1972 = vpop.f32.mrb[0].mxu0
      %v1973 = vadd.f32 %v1902, %v1972
      %v1974 = vpop.f32.mrb[0].mxu0
      %v1975 = vadd.f32 %v1904, %v1974
      %v1976 = vpop.f32.mrb[0].mxu0
      %v1977 = vadd.f32 %v1906, %v1976
      %v1978 = vpop.f32.mrb[0].mxu0
      %v1979 = vadd.f32 %v1908, %v1978
      %1980 = vmatprep.mubr.bf16.mxu0 %v601
      %1981 = vmatmul.mubr.bf16.gmra.mrb[0].mxu0 %v600
      %v1982 = vpop.f32.mrb[0].mxu0
      %v1983 = vadd.f32 %v1912, %v1982
      %v1984 = vpop.f32.mrb[0].mxu0
      %v1985 = vadd.f32 %v1914, %v1984
      %v1986 = vpop.f32.mrb[0].mxu0
      %v1987 = vadd.f32 %v1916, %v1986
      %v1988 = vpop.f32.mrb[0].mxu0
      %v1989 = vadd.f32 %v1918, %v1988
      %1990 = vmatprep.mubr.bf16.mxu0 %v614
      %1991 = vmatmul.mubr.bf16.gmra.mrb[0].mxu0 %v613
      %v1992 = vpop.f32.mrb[0].mxu0
      %v1993 = vadd.f32 %v1922, %v1992
      %v1994 = vpop.f32.mrb[0].mxu0
      %v1995 = vadd.f32 %v1924, %v1994
      %v1996 = vpop.f32.mrb[0].mxu0
      %v1997 = vadd.f32 %v1926, %v1996
      %v1998 = vpop.f32.mrb[0].mxu0
      %v1999 = vadd.f32 %v1928, %v1998
      %2000 = vmatprep.mubr.bf16.mxu0 %v627
      %2001 = vmatmul.mubr.bf16.gmra.mrb[0].mxu0 %v626
      %v2002 = vpop.f32.mrb[0].mxu0
      %v2003 = vadd.f32 %v1932, %v2002
      %v2004 = vpop.f32.mrb[0].mxu0
      %v2005 = vadd.f32 %v1934, %v2004
      %v2006 = vpop.f32.mrb[0].mxu0
      %v2007 = vpop.f32.mrb[0].mxu0
      %2008 = vdwg.mxu0
      %2009 = vmatprep.subr.bf16.mxu0 %v1438
      %2010 = vmatpush1.bf16.msra.mxu0 %v1437
      %2011 = vmatprep.subr.bf16.mxu0 %v1440
      %2012 = vmatpush1.bf16.msra.mxu0 %v1439
      %2013 = vmatprep.subr.bf16.mxu0 %v1442
      %2014 = vmatpush1.bf16.msra.mxu0 %v1441
      %2015 = vmatprep.subr.bf16.mxu0 %v1444
      %2016 = vmatpush1.bf16.msra.mxu0 %v1443
      %2017 = vmatprep.subr.bf16.mxu0 %v1446
      %2018 = vmatpush1.bf16.msra.mxu0 %v1445
      %2019 = vmatprep.subr.bf16.mxu0 %v1448
      %2020 = vmatpush1.bf16.msra.mxu0 %v1447
      %2021 = vmatprep.subr.bf16.mxu0 %v1450
      %2022 = vmatpush1.bf16.msra.mxu0 %v1449
      %2023 = vmatprep.subr.bf16.mxu0 %v1452
      %2024 = vmatpush1.bf16.msra.mxu0 %v1451
      %2025 = vmatprep.subr.bf16.mxu0 %v1454
      %2026 = vmatpush1.bf16.msra.mxu0 %v1453
      %2027 = vmatprep.subr.bf16.mxu0 %v1456
      %2028 = vmatpush1.bf16.msra.mxu0 %v1455
      %2029 = vmatprep.subr.bf16.mxu0 %v1458
      %2030 = vmatpush1.bf16.msra.mxu0 %v1457
      %2031 = vmatprep.subr.bf16.mxu0 %v1460
      %2032 = vmatpush1.bf16.msra.mxu0 %v1459
      %2033 = vmatprep.subr.bf16.mxu0 %v1462
      %2034 = vmatpush1.bf16.msra.mxu0 %v1461
      %2035 = vmatprep.subr.bf16.mxu0 %v1464
      %2036 = vmatpush1.bf16.msra.mxu0 %v1463
      %2037 = vmatprep.subr.bf16.mxu0 %v1466
      %2038 = vmatpush1.bf16.msra.mxu0 %v1465
      %2039 = vmatprep.subr.bf16.mxu0 %v1468
      %2040 = vmatpush1.bf16.msra.mxu0 %v1467
      %2041 = vmatprep.mubr.bf16.mxu0 %v590
      %2042 = vmatmul.mubr.bf16.gmra.mrb[0].mxu0 %v589
      %v2043 = vpop.f32.mrb[0].mxu0
      %v2044 = vadd.f32 %v1973, %v2043
      %v2045 = vpop.f32.mrb[0].mxu0
      %v2046 = vadd.f32 %v1975, %v2045
      %v2047 = vpop.f32.mrb[0].mxu0
      %v2048 = vadd.f32 %v1977, %v2047
      %v2049 = vpop.f32.mrb[0].mxu0
      %v2050 = vadd.f32 %v1979, %v2049
      %2051 = vmatprep.mubr.bf16.mxu0 %v603
      %2052 = vmatmul.mubr.bf16.gmra.mrb[0].mxu0 %v602
      %v2053 = vpop.f32.mrb[0].mxu0
      %v2054 = vadd.f32 %v1983, %v2053
      %v2055 = vpop.f32.mrb[0].mxu0
      %v2056 = vadd.f32 %v1985, %v2055
      %v2057 = vpop.f32.mrb[0].mxu0
      %v2058 = vadd.f32 %v1987, %v2057
      %v2059 = vpop.f32.mrb[0].mxu0
      %v2060 = vadd.f32 %v1989, %v2059
      %2061 = vmatprep.mubr.bf16.mxu0 %v616
      %2062 = vmatmul.mubr.bf16.gmra.mrb[0].mxu0 %v615
      %v2063 = vpop.f32.mrb[0].mxu0
      %v2064 = vadd.f32 %v1993, %v2063
      %v2065 = vpop.f32.mrb[0].mxu0
      %v2066 = vadd.f32 %v1995, %v2065
      %v2067 = vpop.f32.mrb[0].mxu0
      %v2068 = vadd.f32 %v1997, %v2067
      %v2069 = vpop.f32.mrb[0].mxu0
      %v2070 = vadd.f32 %v1999, %v2069
      %2071 = vmatprep.mubr.bf16.mxu0 %v629
      %2072 = vmatmul.mubr.bf16.gmra.mrb[0].mxu0 %v628
      %v2073 = vpop.f32.mrb[0].mxu0
      %v2074 = vadd.f32 %v2003, %v2073
      %v2075 = vpop.f32.mrb[0].mxu0
      %v2076 = vadd.f32 %v2005, %v2075
      %v2077 = vpop.f32.mrb[0].mxu0
      %v2078 = vpop.f32.mrb[0].mxu0
      %2079 = vdwg.mxu0
      %2080 = vmatprep.subr.bf16.mxu0 %v1470
      %2081 = vmatpush1.bf16.msra.mxu0 %v1469
      %2082 = vmatprep.subr.bf16.mxu0 %v1472
      %2083 = vmatpush1.bf16.msra.mxu0 %v1471
      %2084 = vmatprep.subr.bf16.mxu0 %v1474
      %2085 = vmatpush1.bf16.msra.mxu0 %v1473
      %2086 = vmatprep.subr.bf16.mxu0 %v1476
      %2087 = vmatpush1.bf16.msra.mxu0 %v1475
      %2088 = vmatprep.subr.bf16.mxu0 %v1478
      %2089 = vmatpush1.bf16.msra.mxu0 %v1477
      %2090 = vmatprep.subr.bf16.mxu0 %v1480
      %2091 = vmatpush1.bf16.msra.mxu0 %v1479
      %2092 = vmatprep.subr.bf16.mxu0 %v1482
      %2093 = vmatpush1.bf16.msra.mxu0 %v1481
      %2094 = vmatprep.subr.bf16.mxu0 %v1484
      %2095 = vmatpush1.bf16.msra.mxu0 %v1483
      %2096 = vmatprep.subr.bf16.mxu0 %v1486
      %2097 = vmatpush1.bf16.msra.mxu0 %v1485
      %2098 = vmatprep.subr.bf16.mxu0 %v1488
      %2099 = vmatpush1.bf16.msra.mxu0 %v1487
      %2100 = vmatprep.subr.bf16.mxu0 %v1490
      %2101 = vmatpush1.bf16.msra.mxu0 %v1489
      %2102 = vmatprep.subr.bf16.mxu0 %v1492
      %2103 = vmatpush1.bf16.msra.mxu0 %v1491
      %2104 = vmatprep.subr.bf16.mxu0 %v1494
      %2105 = vmatpush1.bf16.msra.mxu0 %v1493
      %2106 = vmatprep.subr.bf16.mxu0 %v1496
      %2107 = vmatpush1.bf16.msra.mxu0 %v1495
      %2108 = vmatprep.subr.bf16.mxu0 %v1498
      %2109 = vmatpush1.bf16.msra.mxu0 %v1497
      %2110 = vmatprep.subr.bf16.mxu0 %v1500
      %2111 = vmatpush1.bf16.msra.mxu0 %v1499
      %2112 = vmatprep.mubr.bf16.mxu0 %v592
      %2113 = vmatmul.mubr.bf16.gmra.mrb[0].mxu0 %v591
      %v2114 = vpop.f32.mrb[0].mxu0
      %v2115 = vadd.f32 %v2044, %v2114
      %v2116 = vpop.f32.mrb[0].mxu0
      %v2117 = vadd.f32 %v2046, %v2116
      %v2118 = vpop.f32.mrb[0].mxu0
      %v2119 = vadd.f32 %v2048, %v2118
      %v2120 = vpop.f32.mrb[0].mxu0
      %v2121 = vadd.f32 %v2050, %v2120
      %2122 = vmatprep.mubr.bf16.mxu0 %v605
      %2123 = vmatmul.mubr.bf16.gmra.mrb[0].mxu0 %v604
      %v2124 = vpop.f32.mrb[0].mxu0
      %v2125 = vadd.f32 %v2054, %v2124
      %v2126 = vpop.f32.mrb[0].mxu0
      %v2127 = vadd.f32 %v2056, %v2126
      %v2128 = vpop.f32.mrb[0].mxu0
      %v2129 = vadd.f32 %v2058, %v2128
      %v2130 = vpop.f32.mrb[0].mxu0
      %v2131 = vadd.f32 %v2060, %v2130
      %2132 = vmatprep.mubr.bf16.mxu0 %v618
      %2133 = vmatmul.mubr.bf16.gmra.mrb[0].mxu0 %v617
      %v2134 = vpop.f32.mrb[0].mxu0
      %v2135 = vadd.f32 %v2064, %v2134
      %v2136 = vpop.f32.mrb[0].mxu0
      %v2137 = vadd.f32 %v2066, %v2136
      %v2138 = vpop.f32.mrb[0].mxu0
      %v2139 = vadd.f32 %v2068, %v2138
      %v2140 = vpop.f32.mrb[0].mxu0
      %v2141 = vadd.f32 %v2070, %v2140
      %2142 = vmatprep.mubr.bf16.mxu0 %v631
      %2143 = vmatmul.mubr.bf16.gmra.mrb[0].mxu0 %v630
      %v2144 = vpop.f32.mrb[0].mxu0
      %v2145 = vadd.f32 %v2074, %v2144
      %v2146 = vpop.f32.mrb[0].mxu0
      %v2147 = vadd.f32 %v2076, %v2146
      %v2148 = vpop.f32.mrb[0].mxu0
      %v2149 = vpop.f32.mrb[0].mxu0
      %2150 = vdwg.mxu0
      %2151 = vmatprep.subr.bf16.mxu0 %v1502
      %2152 = vmatpush1.bf16.msra.mxu0 %v1501
      %2153 = vmatprep.subr.bf16.mxu0 %v1504
      %2154 = vmatpush1.bf16.msra.mxu0 %v1503
      %2155 = vmatprep.subr.bf16.mxu0 %v1506
      %2156 = vmatpush1.bf16.msra.mxu0 %v1505
      %2157 = vmatprep.subr.bf16.mxu0 %v1508
      %2158 = vmatpush1.bf16.msra.mxu0 %v1507
      %2159 = vmatprep.subr.bf16.mxu0 %v1510
      %2160 = vmatpush1.bf16.msra.mxu0 %v1509
      %2161 = vmatprep.subr.bf16.mxu0 %v1512
      %2162 = vmatpush1.bf16.msra.mxu0 %v1511
      %2163 = vmatprep.subr.bf16.mxu0 %v1514
      %2164 = vmatpush1.bf16.msra.mxu0 %v1513
      %2165 = vmatprep.subr.bf16.mxu0 %v1516
      %2166 = vmatpush1.bf16.msra.mxu0 %v1515
      %2167 = vmatprep.subr.bf16.mxu0 0
      %2168 = vmatpush1.bf16.msra.mxu0 0
      %2169 = vmatprep.subr.bf16.mxu0 0
      %2170 = vmatpush1.bf16.msra.mxu0 0
      %2171 = vmatprep.subr.bf16.mxu0 0
      %2172 = vmatpush1.bf16.msra.mxu0 0
      %2173 = vmatprep.subr.bf16.mxu0 0
      %2174 = vmatpush1.bf16.msra.mxu0 0
      %2175 = vmatprep.subr.bf16.mxu0 0
      %2176 = vmatpush1.bf16.msra.mxu0 0
      %2177 = vmatprep.subr.bf16.mxu0 0
      %2178 = vmatpush1.bf16.msra.mxu0 0
      %2179 = vmatprep.subr.bf16.mxu0 0
      %2180 = vmatpush1.bf16.msra.mxu0 0
      %2181 = vmatprep.subr.bf16.mxu0 0
      %2182 = vmatpush1.bf16.msra.mxu0 0
      %2183 = vmatprep.mubr.bf16.mxu0 0
      %2184 = vmatmul.mubr.bf16.gmra.mrb[0].mxu0 %v593
      %v2185 = vpop.f32.mrb[0].mxu0
      %v2186 = vadd.f32 %v2115, %v2185
      %v2187 = vpop.f32.mrb[0].mxu0
      %v2188 = vadd.f32 %v2117, %v2187
      %v2189 = vpop.f32.mrb[0].mxu0
      %v2190 = vadd.f32 %v2119, %v2189
      %v2191 = vpop.f32.mrb[0].mxu0
      %v2192 = vadd.f32 %v2121, %v2191
      %2193 = vmatprep.mubr.bf16.mxu0 0
      %2194 = vmatmul.mubr.bf16.gmra.mrb[0].mxu0 %v606
      %v2195 = vpop.f32.mrb[0].mxu0
      %v2196 = vadd.f32 %v2125, %v2195
      %v2197 = vpop.f32.mrb[0].mxu0
      %v2198 = vadd.f32 %v2127, %v2197
      %v2199 = vpop.f32.mrb[0].mxu0
      %v2200 = vadd.f32 %v2129, %v2199
      %v2201 = vpop.f32.mrb[0].mxu0
      %v2202 = vadd.f32 %v2131, %v2201
      %2203 = vmatprep.mubr.bf16.mxu0 0
      %2204 = vmatmul.mubr.bf16.gmra.mrb[0].mxu0 %v619
      %v2205 = vpop.f32.mrb[0].mxu0
      %v2206 = vadd.f32 %v2135, %v2205
      %v2207 = vpop.f32.mrb[0].mxu0
      %v2208 = vadd.f32 %v2137, %v2207
      %v2209 = vpop.f32.mrb[0].mxu0
      %v2210 = vadd.f32 %v2139, %v2209
      %v2211 = vpop.f32.mrb[0].mxu0
      %v2212 = vadd.f32 %v2141, %v2211
      %2213 = vmatprep.mubr.bf16.mxu0 0
      %2214 = vmatmul.mubr.bf16.gmra.mrb[0].mxu0 %v632
      %v2215 = vpop.f32.mrb[0].mxu0
      %v2216 = vadd.f32 %v2145, %v2215
      %v2217 = vpop.f32.mrb[0].mxu0
      %v2218 = vadd.f32 %v2147, %v2217
      %v2219 = vpop.f32.mrb[0].mxu0
      %v2220 = vpop.f32.mrb[0].mxu0
      %2221 = vdwg.mxu0
      %v2222 = vmax.f32 %v2186, 0.0
      %v2223 = vmax.f32 %v2188, 0.0
      %v2224 = vmax.f32 %v2190, 0.0
      %v2225 = vmax.f32 %v2192, 0.0
      %v2226 = vmax.f32 %v2196, 0.0
      %v2227 = vmax.f32 %v2198, 0.0
      %v2228 = vmax.f32 %v2200, 0.0
      %v2229 = vmax.f32 %v2202, 0.0
      %v2230 = vmax.f32 %v2206, 0.0
      %v2231 = vmax.f32 %v2208, 0.0
      %v2232 = vmax.f32 %v2210, 0.0
      %v2233 = vmax.f32 %v2212, 0.0
      %v2234 = vmax.f32 %v2216, 0.0
      %v2235 = vmax.f32 %v2218, 0.0
      %2236 = vst [vmem:[%s170] sm:$0xff] %v2222
      %2237 = vst [vmem:[%s170 + $0x8] sm:$0xff] %v2223
      %2238 = vst [vmem:[%s170 + $0x10] sm:$0xff] %v2224
      %2239 = vst [vmem:[%s170 + $0x18] sm:$0xff] %v2225
      %2240 = vst [vmem:[%s170 + $0x20] sm:$0xff] %v2226
      %2241 = vst [vmem:[%s170 + $0x28] sm:$0xff] %v2227
      %2242 = vst [vmem:[%s170 + $0x30] sm:$0xff] %v2228
      %2243 = vst [vmem:[%s170 + $0x38] sm:$0xff] %v2229
      %2244 = vst [vmem:[%s170 + $0x40] sm:$0xff] %v2230
      %2245 = vst [vmem:[%s170 + $0x48] sm:$0xff] %v2231
      %2246 = vst [vmem:[%s170 + $0x50] sm:$0xff] %v2232
      %2247 = vst [vmem:[%s170 + $0x58] sm:$0xff] %v2233
      %2248 = vst [vmem:[%s170 + $0x60] sm:$0xff] %v2234
      %2249 = vst [vmem:[%s170 + $0x68] sm:$0xff] %v2235
      %p2250 = scmp.lt.s32.totalorder %s14, 1
      %s2251 = scalar_select %p2250, %s14, 1
      %s2252 = smul.addr %s2251, 14
      %s2253 = smul.addr %s2252, 8
      %s2254 = scalar_lea.vmem %s3, %s2253
      // Predicated region
      $region33: #{headnet_forward.3} parent=31 // pred_check
        %p2255 = pneg %p100
      $region34: #{headnet_forward.3} parent=31 // pred_check_branch
        %2257 = sbr.rel (%p2255) target = $region36
      $region35: #{headnet_forward.3} parent=31 // pred_region
        _
      $region36: #{headnet_forward.3} parent=31 // pred_fallthru
        _
    $region32: #{headnet_forward.3} parent=5 // pred_fallthru
      _
    %p2258 = scmp.le.s32.totalorder 2, %s9
    // Predicated region
    $region37: #{headnet_forward.3} parent=5 // pred_check
      %p2259 = pneg %p2258
    $region38: #{headnet_forward.3} parent=5 // pred_check_branch
      %2261 = sbr.rel (%p2259) target = $region40
    $region39: #{headnet_forward.3} parent=5 // pred_region
      %s2262 = ssub.s32 %s9, 2
      // Predicated region
      $region41: #{headnet_forward.3} parent=39 // pred_check
        %p2263 = pneg %p106
      $region42: #{headnet_forward.3} parent=39 // pred_check_branch
        %2265 = sbr.rel (%p2263) target = $region44
      $region43: #{headnet_forward.3} parent=39 // pred_region
        %p2266 = scmp.lt.s32.totalorder %s15, 1
        %s2267 = scalar_select %p2266, %s15, 1
        %s2268 = smul.addr %s2267, 14
        %s2269 = smul.addr %s2268, 8
        %s2270 = scalar_lea.vmem %s3, %s2269
      $region44: #{headnet_forward.3} parent=39 // pred_fallthru
        _
    $region40: #{headnet_forward.3} parent=5 // pred_fallthru
      _
  $region6: #{headnet_forward.3} parent=0 // loop_footer
    %s13 = sadd.s32 1, %s9
  $region7: #{headnet_forward.3} parent=0 // loop_footer_branch
    %8 = sbr.rel target = $region3
  $region8: #{headnet_forward.3} parent=0 // loop_exit
    _

</llo_original>
